<compile_context>
chip_gen: v7x
topology: tpu7x:2x2x1
jax: 0.10.0
libtpu: 0.0.40
codegen_flags: <defaults>
</compile_context>

<pallas_src>
import functools
import math

import jax
import jax.numpy as jnp
from jax import lax
from jax.experimental import pallas as pl
from jax.experimental.pallas import tpu as pltpu

GROUPS = 32
EPS = 1e-6
LANE = 128


# ------------------------------- in-kernel helpers ------------------------------- #

def _gn_swish(x2, m_red, m_bcast, gamma, beta, eps, n):
    """GroupNorm + swish on an (R, C) f32 tile; returns bf16 (it feeds the MXU next).

    m_red:   (C, G) one-hot channel->group matrix (zero rows for padded channels)
    m_bcast: (G, C) transpose
    n:       static element count per (image, group) = R * real_channels_per_group
    Uses one fused (2,C)@(C,G) reduce matmul and one fused (2,G)@(G,C) broadcast matmul.
    """
    s = jnp.sum(x2, axis=0, keepdims=True)                                   # (1, C)
    ss = jnp.sum(x2 * x2, axis=0, keepdims=True)                             # (1, C)
    red = jnp.dot(jnp.concatenate([s, ss], axis=0), m_red,
                  preferred_element_type=jnp.float32) * (1.0 / n)            # (2, G)
    mean_g = red[0:1]                                                        # (1, G)
    var_g = jnp.maximum(red[1:2] - mean_g * mean_g, 0.0)                     # clamp cancellation
    inv_g = lax.rsqrt(var_g + eps)
    stats = jnp.dot(jnp.concatenate([mean_g, inv_g], axis=0), m_bcast,
                    preferred_element_type=jnp.float32)                      # (2, C)
    y = (x2 - stats[0:1]) * (stats[1:2] * gamma) + beta
    return (y * jax.nn.sigmoid(y)).astype(jnp.bfloat16)                      # swish -> bf16


def _conv3x3(hb, w9, bias, folded):
    """3x3 / stride 1 / pad 1 conv of one bf16 image with f32 accumulation.

    hb:   (H, W, Cin) bf16 activation
    w9:   (9, Cin, Cout) bf16 weight, tap index t = ky*3 + kx
    bias: (1, Cout) f32
    folded=True  -> one K=9*Cin matmul (small Cin),
    folded=False -> nine accumulating K=Cin matmuls (large Cin; no 9x im2col slab).
    Shifted taps come from one row-padded copy + two column-shifted copies (all bf16; W stays
    sublane-aligned, no (H+2, W+2) padded copy).
    """
    H, W, cin = hb.shape
    cout = w9.shape[-1]

    zrow = jnp.zeros((1, W, cin), jnp.bfloat16)
    hp = jnp.concatenate([zrow, hb, zrow], axis=0)                  # (H+2, W, Cin), row pad only
    zcol = jnp.zeros((H + 2, 1, cin), jnp.bfloat16)
    xm1 = jnp.concatenate([zcol, hp[:, :W - 1, :]], axis=1)         # column x-1 (zero at x=0)
    xp1 = jnp.concatenate([hp[:, 1:, :], zcol], axis=1)             # column x+1 (zero at x=W-1)
    cols = (xm1, hp, xp1)                                           # indexed by kx

    if folded:
        patches = jnp.concatenate(
            [cols[kx][ky:ky + H] for ky in range(3) for kx in range(3)], axis=-1
        ).reshape(H * W, 9 * cin)                                   # bf16, K = 9*Cin
        acc = jnp.dot(patches, w9.reshape(9 * cin, cout),
                      preferred_element_type=jnp.float32)
    else:
        acc = None
        for ky in range(3):
            for kx in range(3):
                tap = cols[kx][ky:ky + H].reshape(H * W, cin)       # bf16, K = Cin
                p = jnp.dot(tap, w9[ky * 3 + kx], preferred_element_type=jnp.float32)
                acc = p if acc is None else acc + p
    return acc + bias                                               # (H*W, Cout) f32


# ----------------------------------- fused kernel ---------------------------------- #

def fused_resblock_kernel(*refs, eps, has_proj, n1, n2, fold1, fold2):
    if has_proj:
        (x_ref, m1r, m1b, g1, b1, w1, c1b,
         m2r, m2b, g2, b2, w2, c2b, ws, bs, o_ref) = refs
    else:
        (x_ref, m1r, m1b, g1, b1, w1, c1b,
         m2r, m2b, g2, b2, w2, c2b, o_ref) = refs

    _, H, W, cin = x_ref.shape
    cout = o_ref.shape[-1]

    x2 = x_ref[0].astype(jnp.float32).reshape(H * W, cin)

    h = _gn_swish(x2, m1r[...], m1b[...], g1[...], b1[...], eps, n1)         # (H*W, Cin) bf16
    h = _conv3x3(h.reshape(H, W, cin), w1[...], c1b[...], fold1)             # (H*W, Cout) f32
    h = _gn_swish(h, m2r[...], m2b[...], g2[...], b2[...], eps, n2)          # bf16
    h = _conv3x3(h.reshape(H, W, cout), w2[...], c2b[...], fold2)            # f32

    if has_proj:
        skip = jnp.dot(x2.astype(jnp.bfloat16), ws[...],
                       preferred_element_type=jnp.float32) + bs[...]
    else:
        skip = x2                                                            # identity skip

    o_ref[0] = (h + skip).reshape(H, W, cout).astype(o_ref.dtype)


# ------------------------------------- wrapper -------------------------------------- #

def _round_up_lanes(c):
    return max(LANE, ((c + LANE - 1) // LANE) * LANE)


def _pad_axis(a, axis, target):
    pad = target - a.shape[axis]
    if pad == 0:
        return a
    widths = [(0, 0)] * a.ndim
    widths[axis] = (0, pad)
    return jnp.pad(a, widths)


def _group_matrices(c_real, c_pad, groups, dtype=jnp.float32):
    """One-hot channel->group membership (C_pad, G) and transpose (G, C_pad).
    Padded channels belong to no group (zero rows), so they never touch the statistics."""
    cg = c_real // groups
    ch = jnp.arange(c_pad, dtype=jnp.int32)
    gid = jnp.where(ch < c_real, ch // cg, -1)
    m = (gid[:, None] == jnp.arange(groups, dtype=jnp.int32)[None, :]).astype(dtype)
    return m, m.T


def resblock_forward(x, params, *, groups=GROUPS, eps=EPS):
    N, H, W, cin = x.shape
    cout = params["w1"].shape[-1]
    has_proj = "ws" in params          # static: PyTorch uses nn.Identity when cin == cout

    cin_p, cout_p = _round_up_lanes(cin), _round_up_lanes(cout)
    fold1, fold2 = (cin_p <= 128), (cout_p <= 128)
    n1 = float(H * W * (cin // groups))
    n2 = float(H * W * (cout // groups))

    xp = _pad_axis(x, 3, cin_p)
    m1r, m1b = _group_matrices(cin, cin_p, groups)
    m2r, m2b = _group_matrices(cout, cout_p, groups)

    # 3x3 weights as (9, Cin, Cout) bf16 (tap = ky*3 + kx); padded channels carry zero weights.
    w1 = _pad_axis(_pad_axis(params["w1"], 2, cin_p), 3, cout_p)
    w1 = w1.reshape(9, cin_p, cout_p).astype(jnp.bfloat16)
    w2 = _pad_axis(_pad_axis(params["w2"], 2, cout_p), 3, cout_p)
    w2 = w2.reshape(9, cout_p, cout_p).astype(jnp.bfloat16)

    g1 = _pad_axis(params["g1"], 0, cin_p).reshape(1, cin_p)
    b1 = _pad_axis(params["b1"], 0, cin_p).reshape(1, cin_p)
    c1b = _pad_axis(params["c1b"], 0, cout_p).reshape(1, cout_p)
    g2 = _pad_axis(params["g2"], 0, cout_p).reshape(1, cout_p)
    b2 = _pad_axis(params["b2"], 0, cout_p).reshape(1, cout_p)
    c2b = _pad_axis(params["c2b"], 0, cout_p).reshape(1, cout_p)

    args = [xp, m1r, m1b, g1, b1, w1, c1b, m2r, m2b, g2, b2, w2, c2b]

    def whole(shape):
        return pl.BlockSpec(shape, lambda n: (0,) * len(shape))

    in_specs = [pl.BlockSpec((1, H, W, cin_p), lambda n: (n, 0, 0, 0)),
                whole((cin_p, groups)), whole((groups, cin_p)),
                whole((1, cin_p)), whole((1, cin_p)),
                whole((9, cin_p, cout_p)), whole((1, cout_p)),
                whole((cout_p, groups)), whole((groups, cout_p)),
                whole((1, cout_p)), whole((1, cout_p)),
                whole((9, cout_p, cout_p)), whole((1, cout_p))]

    if has_proj:
        ws = _pad_axis(_pad_axis(params["ws"], 0, cin_p), 1, cout_p).astype(jnp.bfloat16)
        bs = _pad_axis(params["bs"], 0, cout_p).reshape(1, cout_p)
        args += [ws, bs]
        in_specs += [whole((cin_p, cout_p)), whole((1, cout_p))]

    # Rough scoped-VMEM budget: double-buffered activation blocks + weights + kernel temporaries
    # (raised above v5e's 16 MiB default, capped below v7x's 64 MiB physical).
    act = H * W * (cin_p + cout_p) * 4
    wts = (9 * cin_p * cout_p + 9 * cout_p * cout_p + cin_p * cout_p) * 2
    tmp = 6 * H * W * max(cin_p, cout_p) * 4
    if fold1:
        tmp += 9 * H * W * cin_p * 2
    if fold2:
        tmp += 9 * H * W * cout_p * 2
    vmem_limit = int(min(max(2 * (act + wts) + tmp, 32 * 1024 * 1024), 64 * 1024 * 1024))

    kern = functools.partial(fused_resblock_kernel, eps=eps, has_proj=has_proj,
                             n1=n1, n2=n2, fold1=fold1, fold2=fold2)
    out = pl.pallas_call(
        kern,
        out_shape=jax.ShapeDtypeStruct((N, H, W, cout_p), x.dtype),
        grid=(N,),
        in_specs=in_specs,
        out_specs=pl.BlockSpec((1, H, W, cout_p), lambda n: (n, 0, 0, 0)),
        compiler_params=pltpu.CompilerParams(
            dimension_semantics=("parallel",),
            vmem_limit_bytes=vmem_limit),
    )(*args)
    return out[..., :cout] if cout_p != cout else out


# ------------------------------- params & pure-JAX reference ------------------------------ #

def init_params(key, cin, cout):
    ks = jax.random.split(key, 10)
    p = {
        "g1": 1.0 + 0.1 * jax.random.normal(ks[0], (cin,), jnp.float32),
        "b1": 0.1 * jax.random.normal(ks[1], (cin,), jnp.float32),
        "w1": jax.random.normal(ks[2], (3, 3, cin, cout), jnp.float32) / math.sqrt(9 * cin),
        "c1b": 0.1 * jax.random.normal(ks[3], (cout,), jnp.float32),
        "g2": 1.0 + 0.1 * jax.random.normal(ks[4], (cout,), jnp.float32),
        "b2": 0.1 * jax.random.normal(ks[5], (cout,), jnp.float32),
        "w2": jax.random.normal(ks[6], (3, 3, cout, cout), jnp.float32) / math.sqrt(9 * cout),
        "c2b": 0.1 * jax.random.normal(ks[7], (cout,), jnp.float32),
    }
    if cin != cout:
        p["ws"] = jax.random.normal(ks[8], (cin, cout), jnp.float32) / math.sqrt(cin)
        p["bs"] = 0.1 * jax.random.normal(ks[9], (cout,), jnp.float32)
    return p


def ref_gn(x, gamma, beta, groups=GROUPS, eps=EPS):
    N, H, W, C = x.shape
    cg = C // groups
    xg = x.reshape(N, H, W, groups, cg)
    mean = xg.mean(axis=(1, 2, 4), keepdims=True)
    var = ((xg - mean) ** 2).mean(axis=(1, 2, 4), keepdims=True)
    xn = ((xg - mean) * lax.rsqrt(var + eps)).reshape(N, H, W, C)
    return xn * gamma + beta


def ref_conv3x3(x, w, b):
    # Same numerics as the kernel: bf16 operands, f32 accumulation.
    y = lax.conv_general_dilated(x.astype(jnp.bfloat16), w.astype(jnp.bfloat16),
                                 (1, 1), "SAME",
                                 dimension_numbers=("NHWC", "HWIO", "NHWC"),
                                 preferred_element_type=jnp.float32)
    return y + b


def ref_forward(x, p):
    h = ref_gn(x, p["g1"], p["b1"])
    h = h * jax.nn.sigmoid(h)
    h = ref_conv3x3(h, p["w1"], p["c1b"])
    h = ref_gn(h, p["g2"], p["b2"])
    h = h * jax.nn.sigmoid(h)
    h = ref_conv3x3(h, p["w2"], p["c2b"])
    if "ws" in p:
        skip = jnp.einsum("nhwc,cd->nhwd",
                          x.astype(jnp.bfloat16), p["ws"].astype(jnp.bfloat16),
                          preferred_element_type=jnp.float32) + p["bs"]
    else:
        skip = x
    return h + skip


# --------------------------------------- main --------------------------------------- #

if __name__ == "__main__":
    N, H, W = 2, 16, 16
    key = jax.random.PRNGKey(0)

    fwd = jax.jit(resblock_forward)
    ref = jax.jit(ref_forward)

    # Cover: channel padding + learned 1x1 skip, identity skip, per-tap (K=Cin) conv path,
    # and padded identity with output slice-back.
    for cin, cout in [(64, 128), (128, 128), (256, 128), (64, 64)]:
        kx, kp, key = jax.random.split(key, 3)
        x = jax.random.normal(kx, (N, H, W, cin), jnp.float32)   # NHWC (== NCHW [N, cin, H, W])
        params = init_params(kp, cin, cout)

        out = jax.block_until_ready(fwd(x, params))
        expect = jax.block_until_ready(ref(x, params))

        assert out.shape == (N, H, W, cout)
        err = float(jnp.max(jnp.abs(out - expect)))
        assert jnp.allclose(out, expect, atol=1e-2, rtol=1e-2), \
            f"cin={cin} cout={cout} max abs err {err}"

    print("KERNEL_OK")
</pallas_src>

<mosaic_0001>
module attributes {stable_mosaic.version = 11 : i64} {
  func.func @fused_resblock_kernel(%arg0: i32, %arg1: memref<1x16x16x128xf32, #tpu.memory_space<vmem>>, %arg2: memref<128x32xf32, #tpu.memory_space<vmem>>, %arg3: memref<32x128xf32, #tpu.memory_space<vmem>>, %arg4: memref<1x128xf32, #tpu.memory_space<vmem>>, %arg5: memref<1x128xf32, #tpu.memory_space<vmem>>, %arg6: memref<9x128x128xbf16, #tpu.memory_space<vmem>>, %arg7: memref<1x128xf32, #tpu.memory_space<vmem>>, %arg8: memref<128x32xf32, #tpu.memory_space<vmem>>, %arg9: memref<32x128xf32, #tpu.memory_space<vmem>>, %arg10: memref<1x128xf32, #tpu.memory_space<vmem>>, %arg11: memref<1x128xf32, #tpu.memory_space<vmem>>, %arg12: memref<9x128x128xbf16, #tpu.memory_space<vmem>>, %arg13: memref<1x128xf32, #tpu.memory_space<vmem>>, %arg14: memref<128x128xbf16, #tpu.memory_space<vmem>>, %arg15: memref<1x128xf32, #tpu.memory_space<vmem>>, %arg16: memref<1x16x16x128xf32, #tpu.memory_space<vmem>>) attributes {dimension_semantics = [#tpu.dimension_semantics<parallel>], iteration_bounds = array<i64: 2>, scalar_prefetch = 0 : i64, scratch_operands = 0 : i64, tpu.core_type = #tpu.core_type<tc>, window_params = [{transform_indices = @transform_0, window_bounds = array<i64: 1, 16, 16, 128>}, {pipeline_mode = #tpu.pipeline_mode<synchronous>, transform_indices = @transform_1, window_bounds = array<i64: 128, 32>}, {pipeline_mode = #tpu.pipeline_mode<synchronous>, transform_indices = @transform_2, window_bounds = array<i64: 32, 128>}, {pipeline_mode = #tpu.pipeline_mode<synchronous>, transform_indices = @transform_3, window_bounds = array<i64: 1, 128>}, {pipeline_mode = #tpu.pipeline_mode<synchronous>, transform_indices = @transform_4, window_bounds = array<i64: 1, 128>}, {pipeline_mode = #tpu.pipeline_mode<synchronous>, transform_indices = @transform_5, window_bounds = array<i64: 9, 128, 128>}, {pipeline_mode = #tpu.pipeline_mode<synchronous>, transform_indices = @transform_6, window_bounds = array<i64: 1, 128>}, {pipeline_mode = #tpu.pipeline_mode<synchronous>, transform_indices = @transform_7, window_bounds = array<i64: 128, 32>}, {pipeline_mode = #tpu.pipeline_mode<synchronous>, transform_indices = @transform_8, window_bounds = array<i64: 32, 128>}, {pipeline_mode = #tpu.pipeline_mode<synchronous>, transform_indices = @transform_9, window_bounds = array<i64: 1, 128>}, {pipeline_mode = #tpu.pipeline_mode<synchronous>, transform_indices = @transform_10, window_bounds = array<i64: 1, 128>}, {pipeline_mode = #tpu.pipeline_mode<synchronous>, transform_indices = @transform_11, window_bounds = array<i64: 9, 128, 128>}, {pipeline_mode = #tpu.pipeline_mode<synchronous>, transform_indices = @transform_12, window_bounds = array<i64: 1, 128>}, {pipeline_mode = #tpu.pipeline_mode<synchronous>, transform_indices = @transform_13, window_bounds = array<i64: 128, 128>}, {pipeline_mode = #tpu.pipeline_mode<synchronous>, transform_indices = @transform_14, window_bounds = array<i64: 1, 128>}, {transform_indices = @transform_15, window_bounds = array<i64: 1, 16, 16, 128>}]} {
    %c0 = arith.constant 0 : index
    %c0_0 = arith.constant 0 : index
    %c0_1 = arith.constant 0 : index
    %c0_2 = arith.constant 0 : index
    %0 = vector.load %arg1[%c0, %c0_0, %c0_1, %c0_2] : memref<1x16x16x128xf32, #tpu.memory_space<vmem>>, vector<1x16x16x128xf32>
    %1 = vector.shape_cast %0 : vector<1x16x16x128xf32> to vector<16x16x128xf32>
    %2 = vector.shape_cast %1 : vector<16x16x128xf32> to vector<256x128xf32>
    %c0_3 = arith.constant 0 : index
    %c0_4 = arith.constant 0 : index
    %3 = vector.load %arg2[%c0_3, %c0_4] : memref<128x32xf32, #tpu.memory_space<vmem>>, vector<128x32xf32>
    %c0_5 = arith.constant 0 : index
    %c0_6 = arith.constant 0 : index
    %4 = vector.load %arg3[%c0_5, %c0_6] : memref<32x128xf32, #tpu.memory_space<vmem>>, vector<32x128xf32>
    %c0_7 = arith.constant 0 : index
    %c0_8 = arith.constant 0 : index
    %5 = vector.load %arg4[%c0_7, %c0_8] : memref<1x128xf32, #tpu.memory_space<vmem>>, vector<1x128xf32>
    %c0_9 = arith.constant 0 : index
    %c0_10 = arith.constant 0 : index
    %6 = vector.load %arg5[%c0_9, %c0_10] : memref<1x128xf32, #tpu.memory_space<vmem>>, vector<1x128xf32>
    %cst = arith.constant dense<0.000000e+00> : vector<128xf32>
    %7 = vector.multi_reduction <add>, %2, %cst [0] : vector<256x128xf32> to vector<128xf32>
    %8 = vector.shape_cast %7 : vector<128xf32> to vector<1x128xf32>
    %9 = arith.mulf %2, %2 : vector<256x128xf32>
    %cst_11 = arith.constant dense<0.000000e+00> : vector<128xf32>
    %10 = vector.multi_reduction <add>, %9, %cst_11 [0] : vector<256x128xf32> to vector<128xf32>
    %11 = vector.shape_cast %10 : vector<128xf32> to vector<1x128xf32>
    %12 = tpu.concatenate %8, %11 in 0 : vector<1x128xf32>, vector<1x128xf32> -> vector<2x128xf32>
    %cst_12 = arith.constant dense<0.000000e+00> : vector<2x32xf32>
    %13 = tpu.matmul %12, %3, %cst_12 {dimension_numbers = #tpu.dot_dimension_numbers<[1], [0], [0], [1], [0, 0, 1, 1], [], []>} : vector<2x128xf32>, vector<128x32xf32>, vector<2x32xf32> -> vector<2x32xf32>
    %cst_13 = arith.constant 0.001953125 : f32
    %14 = vector.broadcast %cst_13 : f32 to vector<2x32xf32>
    %15 = arith.mulf %13, %14 : vector<2x32xf32>
    %16 = vector.extract_strided_slice %15 {offsets = [0, 0], sizes = [1, 32], strides = [1, 1]} : vector<2x32xf32> to vector<1x32xf32>
    %17 = vector.extract_strided_slice %15 {offsets = [1, 0], sizes = [1, 32], strides = [1, 1]} : vector<2x32xf32> to vector<1x32xf32>
    %18 = arith.mulf %16, %16 : vector<1x32xf32>
    %19 = arith.subf %17, %18 : vector<1x32xf32>
    %cst_14 = arith.constant 0.000000e+00 : f32
    %20 = vector.broadcast %cst_14 : f32 to vector<1x32xf32>
    %21 = arith.maximumf %19, %20 : vector<1x32xf32>
    %cst_15 = arith.constant 9.99999997E-7 : f32
    %22 = vector.broadcast %cst_15 : f32 to vector<1x32xf32>
    %23 = arith.addf %21, %22 : vector<1x32xf32>
    %24 = math.rsqrt %23 : vector<1x32xf32>
    %25 = tpu.concatenate %16, %24 in 0 : vector<1x32xf32>, vector<1x32xf32> -> vector<2x32xf32>
    %cst_16 = arith.constant dense<0.000000e+00> : vector<2x128xf32>
    %26 = tpu.matmul %25, %4, %cst_16 {dimension_numbers = #tpu.dot_dimension_numbers<[1], [0], [0], [1], [0, 0, 1, 1], [], []>} : vector<2x32xf32>, vector<32x128xf32>, vector<2x128xf32> -> vector<2x128xf32>
    %27 = vector.extract_strided_slice %26 {offsets = [0, 0], sizes = [1, 128], strides = [1, 1]} : vector<2x128xf32> to vector<1x128xf32>
    %28 = vector.broadcast %27 : vector<1x128xf32> to vector<256x128xf32>
    %29 = arith.subf %2, %28 : vector<256x128xf32>
    %30 = vector.extract_strided_slice %26 {offsets = [1, 0], sizes = [1, 128], strides = [1, 1]} : vector<2x128xf32> to vector<1x128xf32>
    %31 = arith.mulf %30, %5 : vector<1x128xf32>
    %32 = vector.broadcast %31 : vector<1x128xf32> to vector<256x128xf32>
    %33 = arith.mulf %29, %32 : vector<256x128xf32>
    %34 = vector.broadcast %6 : vector<1x128xf32> to vector<256x128xf32>
    %35 = arith.addf %33, %34 : vector<256x128xf32>
    %36 = arith.negf %35 : vector<256x128xf32>
    %37 = math.exp %36 : vector<256x128xf32>
    %cst_17 = arith.constant 1.000000e+00 : f32
    %38 = vector.broadcast %cst_17 : f32 to vector<256x128xf32>
    %39 = arith.addf %38, %37 : vector<256x128xf32>
    %40 = arith.divf %38, %39 : vector<256x128xf32>
    %41 = arith.mulf %35, %40 : vector<256x128xf32>
    %42 = arith.truncf %41 : vector<256x128xf32> to vector<256x128xbf16>
    %43 = vector.shape_cast %42 : vector<256x128xbf16> to vector<16x16x128xbf16>
    %c0_18 = arith.constant 0 : index
    %c0_19 = arith.constant 0 : index
    %c0_20 = arith.constant 0 : index
    %44 = vector.load %arg6[%c0_18, %c0_19, %c0_20] : memref<9x128x128xbf16, #tpu.memory_space<vmem>>, vector<9x128x128xbf16>
    %c0_21 = arith.constant 0 : index
    %c0_22 = arith.constant 0 : index
    %45 = vector.load %arg7[%c0_21, %c0_22] : memref<1x128xf32, #tpu.memory_space<vmem>>, vector<1x128xf32>
    %cst_23 = arith.constant 0.000000e+00 : bf16
    %46 = vector.broadcast %cst_23 : bf16 to vector<1x16x128xbf16>
    %47 = tpu.concatenate %46, %43, %46 in 0 : vector<1x16x128xbf16>, vector<16x16x128xbf16>, vector<1x16x128xbf16> -> vector<18x16x128xbf16>
    %cst_24 = arith.constant 0.000000e+00 : bf16
    %48 = vector.broadcast %cst_24 : bf16 to vector<18x1x128xbf16>
    %49 = vector.extract_strided_slice %47 {offsets = [0, 0, 0], sizes = [18, 15, 128], strides = [1, 1, 1]} : vector<18x16x128xbf16> to vector<18x15x128xbf16>
    %50 = tpu.concatenate %48, %49 in 1 : vector<18x1x128xbf16>, vector<18x15x128xbf16> -> vector<18x16x128xbf16>
    %51 = vector.extract_strided_slice %47 {offsets = [0, 1, 0], sizes = [18, 15, 128], strides = [1, 1, 1]} : vector<18x16x128xbf16> to vector<18x15x128xbf16>
    %52 = tpu.concatenate %51, %48 in 1 : vector<18x15x128xbf16>, vector<18x1x128xbf16> -> vector<18x16x128xbf16>
    %53 = vector.extract_strided_slice %50 {offsets = [0, 0, 0], sizes = [16, 16, 128], strides = [1, 1, 1]} : vector<18x16x128xbf16> to vector<16x16x128xbf16>
    %54 = vector.extract_strided_slice %47 {offsets = [0, 0, 0], sizes = [16, 16, 128], strides = [1, 1, 1]} : vector<18x16x128xbf16> to vector<16x16x128xbf16>
    %55 = vector.extract_strided_slice %52 {offsets = [0, 0, 0], sizes = [16, 16, 128], strides = [1, 1, 1]} : vector<18x16x128xbf16> to vector<16x16x128xbf16>
    %56 = vector.extract_strided_slice %50 {offsets = [1, 0, 0], sizes = [16, 16, 128], strides = [1, 1, 1]} : vector<18x16x128xbf16> to vector<16x16x128xbf16>
    %57 = vector.extract_strided_slice %47 {offsets = [1, 0, 0], sizes = [16, 16, 128], strides = [1, 1, 1]} : vector<18x16x128xbf16> to vector<16x16x128xbf16>
    %58 = vector.extract_strided_slice %52 {offsets = [1, 0, 0], sizes = [16, 16, 128], strides = [1, 1, 1]} : vector<18x16x128xbf16> to vector<16x16x128xbf16>
    %59 = vector.extract_strided_slice %50 {offsets = [2, 0, 0], sizes = [16, 16, 128], strides = [1, 1, 1]} : vector<18x16x128xbf16> to vector<16x16x128xbf16>
    %60 = vector.extract_strided_slice %47 {offsets = [2, 0, 0], sizes = [16, 16, 128], strides = [1, 1, 1]} : vector<18x16x128xbf16> to vector<16x16x128xbf16>
    %61 = vector.extract_strided_slice %52 {offsets = [2, 0, 0], sizes = [16, 16, 128], strides = [1, 1, 1]} : vector<18x16x128xbf16> to vector<16x16x128xbf16>
    %62 = tpu.concatenate %53, %54, %55, %56, %57, %58, %59, %60, %61 in 2 : vector<16x16x128xbf16>, vector<16x16x128xbf16>, vector<16x16x128xbf16>, vector<16x16x128xbf16>, vector<16x16x128xbf16>, vector<16x16x128xbf16>, vector<16x16x128xbf16>, vector<16x16x128xbf16>, vector<16x16x128xbf16> -> vector<16x16x1152xbf16>
    %63 = vector.shape_cast %62 : vector<16x16x1152xbf16> to vector<256x1152xbf16>
    %64 = vector.shape_cast %44 : vector<9x128x128xbf16> to vector<1152x128xbf16>
    %cst_25 = arith.constant dense<0.000000e+00> : vector<256x128xf32>
    %65 = tpu.matmul %63, %64, %cst_25 {dimension_numbers = #tpu.dot_dimension_numbers<[1], [0], [0], [1], [0, 0, 1, 1], [], []>} : vector<256x1152xbf16>, vector<1152x128xbf16>, vector<256x128xf32> -> vector<256x128xf32>
    %66 = vector.broadcast %45 : vector<1x128xf32> to vector<256x128xf32>
    %67 = arith.addf %65, %66 : vector<256x128xf32>
    %c0_26 = arith.constant 0 : index
    %c0_27 = arith.constant 0 : index
    %68 = vector.load %arg8[%c0_26, %c0_27] : memref<128x32xf32, #tpu.memory_space<vmem>>, vector<128x32xf32>
    %c0_28 = arith.constant 0 : index
    %c0_29 = arith.constant 0 : index
    %69 = vector.load %arg9[%c0_28, %c0_29] : memref<32x128xf32, #tpu.memory_space<vmem>>, vector<32x128xf32>
    %c0_30 = arith.constant 0 : index
    %c0_31 = arith.constant 0 : index
    %70 = vector.load %arg10[%c0_30, %c0_31] : memref<1x128xf32, #tpu.memory_space<vmem>>, vector<1x128xf32>
    %c0_32 = arith.constant 0 : index
    %c0_33 = arith.constant 0 : index
    %71 = vector.load %arg11[%c0_32, %c0_33] : memref<1x128xf32, #tpu.memory_space<vmem>>, vector<1x128xf32>
    %cst_34 = arith.constant dense<0.000000e+00> : vector<128xf32>
    %72 = vector.multi_reduction <add>, %67, %cst_34 [0] : vector<256x128xf32> to vector<128xf32>
    %73 = vector.shape_cast %72 : vector<128xf32> to vector<1x128xf32>
    %74 = arith.mulf %67, %67 : vector<256x128xf32>
    %cst_35 = arith.constant dense<0.000000e+00> : vector<128xf32>
    %75 = vector.multi_reduction <add>, %74, %cst_35 [0] : vector<256x128xf32> to vector<128xf32>
    %76 = vector.shape_cast %75 : vector<128xf32> to vector<1x128xf32>
    %77 = tpu.concatenate %73, %76 in 0 : vector<1x128xf32>, vector<1x128xf32> -> vector<2x128xf32>
    %cst_36 = arith.constant dense<0.000000e+00> : vector<2x32xf32>
    %78 = tpu.matmul %77, %68, %cst_36 {dimension_numbers = #tpu.dot_dimension_numbers<[1], [0], [0], [1], [0, 0, 1, 1], [], []>} : vector<2x128xf32>, vector<128x32xf32>, vector<2x32xf32> -> vector<2x32xf32>
    %cst_37 = arith.constant 9.765625E-4 : f32
    %79 = vector.broadcast %cst_37 : f32 to vector<2x32xf32>
    %80 = arith.mulf %78, %79 : vector<2x32xf32>
    %81 = vector.extract_strided_slice %80 {offsets = [0, 0], sizes = [1, 32], strides = [1, 1]} : vector<2x32xf32> to vector<1x32xf32>
    %82 = vector.extract_strided_slice %80 {offsets = [1, 0], sizes = [1, 32], strides = [1, 1]} : vector<2x32xf32> to vector<1x32xf32>
    %83 = arith.mulf %81, %81 : vector<1x32xf32>
    %84 = arith.subf %82, %83 : vector<1x32xf32>
    %cst_38 = arith.constant 0.000000e+00 : f32
    %85 = vector.broadcast %cst_38 : f32 to vector<1x32xf32>
    %86 = arith.maximumf %84, %85 : vector<1x32xf32>
    %cst_39 = arith.constant 9.99999997E-7 : f32
    %87 = vector.broadcast %cst_39 : f32 to vector<1x32xf32>
    %88 = arith.addf %86, %87 : vector<1x32xf32>
    %89 = math.rsqrt %88 : vector<1x32xf32>
    %90 = tpu.concatenate %81, %89 in 0 : vector<1x32xf32>, vector<1x32xf32> -> vector<2x32xf32>
    %cst_40 = arith.constant dense<0.000000e+00> : vector<2x128xf32>
    %91 = tpu.matmul %90, %69, %cst_40 {dimension_numbers = #tpu.dot_dimension_numbers<[1], [0], [0], [1], [0, 0, 1, 1], [], []>} : vector<2x32xf32>, vector<32x128xf32>, vector<2x128xf32> -> vector<2x128xf32>
    %92 = vector.extract_strided_slice %91 {offsets = [0, 0], sizes = [1, 128], strides = [1, 1]} : vector<2x128xf32> to vector<1x128xf32>
    %93 = vector.broadcast %92 : vector<1x128xf32> to vector<256x128xf32>
    %94 = arith.subf %67, %93 : vector<256x128xf32>
    %95 = vector.extract_strided_slice %91 {offsets = [1, 0], sizes = [1, 128], strides = [1, 1]} : vector<2x128xf32> to vector<1x128xf32>
    %96 = arith.mulf %95, %70 : vector<1x128xf32>
    %97 = vector.broadcast %96 : vector<1x128xf32> to vector<256x128xf32>
    %98 = arith.mulf %94, %97 : vector<256x128xf32>
    %99 = vector.broadcast %71 : vector<1x128xf32> to vector<256x128xf32>
    %100 = arith.addf %98, %99 : vector<256x128xf32>
    %101 = arith.negf %100 : vector<256x128xf32>
    %102 = math.exp %101 : vector<256x128xf32>
    %cst_41 = arith.constant 1.000000e+00 : f32
    %103 = vector.broadcast %cst_41 : f32 to vector<256x128xf32>
    %104 = arith.addf %103, %102 : vector<256x128xf32>
    %105 = arith.divf %103, %104 : vector<256x128xf32>
    %106 = arith.mulf %100, %105 : vector<256x128xf32>
    %107 = arith.truncf %106 : vector<256x128xf32> to vector<256x128xbf16>
    %108 = vector.shape_cast %107 : vector<256x128xbf16> to vector<16x16x128xbf16>
    %c0_42 = arith.constant 0 : index
    %c0_43 = arith.constant 0 : index
    %c0_44 = arith.constant 0 : index
    %109 = vector.load %arg12[%c0_42, %c0_43, %c0_44] : memref<9x128x128xbf16, #tpu.memory_space<vmem>>, vector<9x128x128xbf16>
    %c0_45 = arith.constant 0 : index
    %c0_46 = arith.constant 0 : index
    %110 = vector.load %arg13[%c0_45, %c0_46] : memref<1x128xf32, #tpu.memory_space<vmem>>, vector<1x128xf32>
    %cst_47 = arith.constant 0.000000e+00 : bf16
    %111 = vector.broadcast %cst_47 : bf16 to vector<1x16x128xbf16>
    %112 = tpu.concatenate %111, %108, %111 in 0 : vector<1x16x128xbf16>, vector<16x16x128xbf16>, vector<1x16x128xbf16> -> vector<18x16x128xbf16>
    %cst_48 = arith.constant 0.000000e+00 : bf16
    %113 = vector.broadcast %cst_48 : bf16 to vector<18x1x128xbf16>
    %114 = vector.extract_strided_slice %112 {offsets = [0, 0, 0], sizes = [18, 15, 128], strides = [1, 1, 1]} : vector<18x16x128xbf16> to vector<18x15x128xbf16>
    %115 = tpu.concatenate %113, %114 in 1 : vector<18x1x128xbf16>, vector<18x15x128xbf16> -> vector<18x16x128xbf16>
    %116 = vector.extract_strided_slice %112 {offsets = [0, 1, 0], sizes = [18, 15, 128], strides = [1, 1, 1]} : vector<18x16x128xbf16> to vector<18x15x128xbf16>
    %117 = tpu.concatenate %116, %113 in 1 : vector<18x15x128xbf16>, vector<18x1x128xbf16> -> vector<18x16x128xbf16>
    %118 = vector.extract_strided_slice %115 {offsets = [0, 0, 0], sizes = [16, 16, 128], strides = [1, 1, 1]} : vector<18x16x128xbf16> to vector<16x16x128xbf16>
    %119 = vector.extract_strided_slice %112 {offsets = [0, 0, 0], sizes = [16, 16, 128], strides = [1, 1, 1]} : vector<18x16x128xbf16> to vector<16x16x128xbf16>
    %120 = vector.extract_strided_slice %117 {offsets = [0, 0, 0], sizes = [16, 16, 128], strides = [1, 1, 1]} : vector<18x16x128xbf16> to vector<16x16x128xbf16>
    %121 = vector.extract_strided_slice %115 {offsets = [1, 0, 0], sizes = [16, 16, 128], strides = [1, 1, 1]} : vector<18x16x128xbf16> to vector<16x16x128xbf16>
    %122 = vector.extract_strided_slice %112 {offsets = [1, 0, 0], sizes = [16, 16, 128], strides = [1, 1, 1]} : vector<18x16x128xbf16> to vector<16x16x128xbf16>
    %123 = vector.extract_strided_slice %117 {offsets = [1, 0, 0], sizes = [16, 16, 128], strides = [1, 1, 1]} : vector<18x16x128xbf16> to vector<16x16x128xbf16>
    %124 = vector.extract_strided_slice %115 {offsets = [2, 0, 0], sizes = [16, 16, 128], strides = [1, 1, 1]} : vector<18x16x128xbf16> to vector<16x16x128xbf16>
    %125 = vector.extract_strided_slice %112 {offsets = [2, 0, 0], sizes = [16, 16, 128], strides = [1, 1, 1]} : vector<18x16x128xbf16> to vector<16x16x128xbf16>
    %126 = vector.extract_strided_slice %117 {offsets = [2, 0, 0], sizes = [16, 16, 128], strides = [1, 1, 1]} : vector<18x16x128xbf16> to vector<16x16x128xbf16>
    %127 = tpu.concatenate %118, %119, %120, %121, %122, %123, %124, %125, %126 in 2 : vector<16x16x128xbf16>, vector<16x16x128xbf16>, vector<16x16x128xbf16>, vector<16x16x128xbf16>, vector<16x16x128xbf16>, vector<16x16x128xbf16>, vector<16x16x128xbf16>, vector<16x16x128xbf16>, vector<16x16x128xbf16> -> vector<16x16x1152xbf16>
    %128 = vector.shape_cast %127 : vector<16x16x1152xbf16> to vector<256x1152xbf16>
    %129 = vector.shape_cast %109 : vector<9x128x128xbf16> to vector<1152x128xbf16>
    %cst_49 = arith.constant dense<0.000000e+00> : vector<256x128xf32>
    %130 = tpu.matmul %128, %129, %cst_49 {dimension_numbers = #tpu.dot_dimension_numbers<[1], [0], [0], [1], [0, 0, 1, 1], [], []>} : vector<256x1152xbf16>, vector<1152x128xbf16>, vector<256x128xf32> -> vector<256x128xf32>
    %131 = vector.broadcast %110 : vector<1x128xf32> to vector<256x128xf32>
    %132 = arith.addf %130, %131 : vector<256x128xf32>
    %133 = arith.truncf %2 : vector<256x128xf32> to vector<256x128xbf16>
    %c0_50 = arith.constant 0 : index
    %c0_51 = arith.constant 0 : index
    %134 = vector.load %arg14[%c0_50, %c0_51] : memref<128x128xbf16, #tpu.memory_space<vmem>>, vector<128x128xbf16>
    %cst_52 = arith.constant dense<0.000000e+00> : vector<256x128xf32>
    %135 = tpu.matmul %133, %134, %cst_52 {dimension_numbers = #tpu.dot_dimension_numbers<[1], [0], [0], [1], [0, 0, 1, 1], [], []>} : vector<256x128xbf16>, vector<128x128xbf16>, vector<256x128xf32> -> vector<256x128xf32>
    %c0_53 = arith.constant 0 : index
    %c0_54 = arith.constant 0 : index
    %136 = vector.load %arg15[%c0_53, %c0_54] : memref<1x128xf32, #tpu.memory_space<vmem>>, vector<1x128xf32>
    %137 = vector.broadcast %136 : vector<1x128xf32> to vector<256x128xf32>
    %138 = arith.addf %135, %137 : vector<256x128xf32>
    %139 = arith.addf %132, %138 : vector<256x128xf32>
    %140 = vector.shape_cast %139 : vector<256x128xf32> to vector<16x16x128xf32>
    %c0_55 = arith.constant 0 : index
    %c0_56 = arith.constant 0 : index
    %c0_57 = arith.constant 0 : index
    %c0_58 = arith.constant 0 : index
    %141 = vector.load %arg16[%c0_55, %c0_56, %c0_57, %c0_58] : memref<1x16x16x128xf32, #tpu.memory_space<vmem>>, vector<1x16x16x128xf32>
    %142 = vector.shape_cast %141 : vector<1x16x16x128xf32> to vector<16x16x128xf32>
    %143 = vector.shape_cast %140 : vector<16x16x128xf32> to vector<1x16x16x128xf32>
    tpu.vector_store %arg16[%c0_55, %c0_56, %c0_57, %c0_58], %143 {strides = array<i32>} : memref<1x16x16x128xf32, #tpu.memory_space<vmem>>, vector<1x16x16x128xf32>,
    return
  }
  func.func @transform_0(%arg0: i32) -> (i32, i32, i32, i32) {
    %c0_i32 = arith.constant 0 : i32
    %c0_i32_0 = arith.constant 0 : i32
    %c0_i32_1 = arith.constant 0 : i32
    %c0_i32_2 = arith.constant 0 : i32
    return %arg0, %c0_i32, %c0_i32_0, %c0_i32_1 : i32, i32, i32, i32
  }
  func.func @transform_1(%arg0: i32) -> (i32, i32) {
    %c0_i32 = arith.constant 0 : i32
    %c0_i32_0 = arith.constant 0 : i32
    %c0_i32_1 = arith.constant 0 : i32
    return %c0_i32, %c0_i32_0 : i32, i32
  }
  func.func @transform_2(%arg0: i32) -> (i32, i32) {
    %c0_i32 = arith.constant 0 : i32
    %c0_i32_0 = arith.constant 0 : i32
    %c0_i32_1 = arith.constant 0 : i32
    return %c0_i32, %c0_i32_0 : i32, i32
  }
  func.func @transform_3(%arg0: i32) -> (i32, i32) {
    %c0_i32 = arith.constant 0 : i32
    %c0_i32_0 = arith.constant 0 : i32
    %c0_i32_1 = arith.constant 0 : i32
    return %c0_i32, %c0_i32_0 : i32, i32
  }
  func.func @transform_4(%arg0: i32) -> (i32, i32) {
    %c0_i32 = arith.constant 0 : i32
    %c0_i32_0 = arith.constant 0 : i32
    %c0_i32_1 = arith.constant 0 : i32
    return %c0_i32, %c0_i32_0 : i32, i32
  }
  func.func @transform_5(%arg0: i32) -> (i32, i32, i32) {
    %c0_i32 = arith.constant 0 : i32
    %c0_i32_0 = arith.constant 0 : i32
    %c0_i32_1 = arith.constant 0 : i32
    %c0_i32_2 = arith.constant 0 : i32
    return %c0_i32, %c0_i32_0, %c0_i32_1 : i32, i32, i32
  }
  func.func @transform_6(%arg0: i32) -> (i32, i32) {
    %c0_i32 = arith.constant 0 : i32
    %c0_i32_0 = arith.constant 0 : i32
    %c0_i32_1 = arith.constant 0 : i32
    return %c0_i32, %c0_i32_0 : i32, i32
  }
  func.func @transform_7(%arg0: i32) -> (i32, i32) {
    %c0_i32 = arith.constant 0 : i32
    %c0_i32_0 = arith.constant 0 : i32
    %c0_i32_1 = arith.constant 0 : i32
    return %c0_i32, %c0_i32_0 : i32, i32
  }
  func.func @transform_8(%arg0: i32) -> (i32, i32) {
    %c0_i32 = arith.constant 0 : i32
    %c0_i32_0 = arith.constant 0 : i32
    %c0_i32_1 = arith.constant 0 : i32
    return %c0_i32, %c0_i32_0 : i32, i32
  }
  func.func @transform_9(%arg0: i32) -> (i32, i32) {
    %c0_i32 = arith.constant 0 : i32
    %c0_i32_0 = arith.constant 0 : i32
    %c0_i32_1 = arith.constant 0 : i32
    return %c0_i32, %c0_i32_0 : i32, i32
  }
  func.func @transform_10(%arg0: i32) -> (i32, i32) {
    %c0_i32 = arith.constant 0 : i32
    %c0_i32_0 = arith.constant 0 : i32
    %c0_i32_1 = arith.constant 0 : i32
    return %c0_i32, %c0_i32_0 : i32, i32
  }
  func.func @transform_11(%arg0: i32) -> (i32, i32, i32) {
    %c0_i32 = arith.constant 0 : i32
    %c0_i32_0 = arith.constant 0 : i32
    %c0_i32_1 = arith.constant 0 : i32
    %c0_i32_2 = arith.constant 0 : i32
    return %c0_i32, %c0_i32_0, %c0_i32_1 : i32, i32, i32
  }
  func.func @transform_12(%arg0: i32) -> (i32, i32) {
    %c0_i32 = arith.constant 0 : i32
    %c0_i32_0 = arith.constant 0 : i32
    %c0_i32_1 = arith.constant 0 : i32
    return %c0_i32, %c0_i32_0 : i32, i32
  }
  func.func @transform_13(%arg0: i32) -> (i32, i32) {
    %c0_i32 = arith.constant 0 : i32
    %c0_i32_0 = arith.constant 0 : i32
    %c0_i32_1 = arith.constant 0 : i32
    return %c0_i32, %c0_i32_0 : i32, i32
  }
  func.func @transform_14(%arg0: i32) -> (i32, i32) {
    %c0_i32 = arith.constant 0 : i32
    %c0_i32_0 = arith.constant 0 : i32
    %c0_i32_1 = arith.constant 0 : i32
    return %c0_i32, %c0_i32_0 : i32, i32
  }
  func.func @transform_15(%arg0: i32) -> (i32, i32, i32, i32) {
    %c0_i32 = arith.constant 0 : i32
    %c0_i32_0 = arith.constant 0 : i32
    %c0_i32_1 = arith.constant 0 : i32
    %c0_i32_2 = arith.constant 0 : i32
    return %arg0, %c0_i32, %c0_i32_0, %c0_i32_1 : i32, i32, i32, i32
  }
}

</mosaic_0001>

<llo_original>
// kernel: resblock_forward.1
$region0: #{resblock_forward.1}
  #allocation0 [shape = 'u32[]', space=smem, size = 0x4, offset = 0x4, fixed_abs, tag = 'smem constant byte address 0x4 - core index']
  #allocation1 [shape = 'u32[144,128]{1,0:T(1,128)}', space=vmem, size = 0x12000, scoped, tag = 'internal scratch']
  %s0 = inlined_call_operand.vmem [shape: f32[2,16,16,128], index: 0, kind: input, shape index: {}]
  %s1 = inlined_call_operand.vmem [shape: f32[128,32], index: 1, kind: input, shape index: {}]
  %s2 = inlined_call_operand.vmem [shape: f32[32,128], index: 2, kind: input, shape index: {}]
  %s3 = inlined_call_operand.vmem [shape: f32[1,128], index: 3, kind: input, shape index: {}]
  %s4 = inlined_call_operand.vmem [shape: f32[1,128], index: 4, kind: input, shape index: {}]
  %s5 = inlined_call_operand.vmem [shape: bf16[9,128,128], index: 5, kind: input, shape index: {}]
  %s6 = inlined_call_operand.vmem [shape: f32[1,128], index: 6, kind: input, shape index: {}]
  %s7 = inlined_call_operand.vmem [shape: f32[128,32], index: 7, kind: input, shape index: {}]
  %s8 = inlined_call_operand.vmem [shape: f32[32,128], index: 8, kind: input, shape index: {}]
  %s9 = inlined_call_operand.vmem [shape: f32[1,128], index: 9, kind: input, shape index: {}]
  %s10 = inlined_call_operand.vmem [shape: f32[1,128], index: 10, kind: input, shape index: {}]
  %s11 = inlined_call_operand.vmem [shape: bf16[9,128,128], index: 11, kind: input, shape index: {}]
  %s12 = inlined_call_operand.vmem [shape: f32[1,128], index: 12, kind: input, shape index: {}]
  %s13 = inlined_call_operand.vmem [shape: bf16[128,128], index: 13, kind: input, shape index: {}]
  %s14 = inlined_call_operand.vmem [shape: f32[1,128], index: 14, kind: input, shape index: {}]
  %s15 = inlined_call_operand.hbm [shape: f32[2,16,16,128], index: 15, kind: output, shape index: {}]
  %s16 = sld [smem:[#allocation0]]
  $region93: #{resblock_forward.1} parent=0
    _
  %s18 = ssub.s32 1, %s16
  %s19 = scalar_select 0, %s18, %s16
  $region1: #{resblock_forward.1} parent=0
    #allocation2 [shape = 'u8[262144]{0}', space=vmem, size = 0x40000, scoped, tag = 'output window, operand 0']
    #allocation3 [shape = 's32[2]{0}', space=sflag, size = 0x8, scoped, tag = 'scoped memory for resblock_forward.1']
    %20 = vsyncpa [#allocation3], 0
    %s21 = scalar_lea.sflag [#allocation3], 1
    %22 = vsyncpa %s21, 0
    loop: start=0, step=1, limit=4
    $region2: #{resblock_forward.1} parent=1 // loop_pre_header
      _
    $region3: #{resblock_forward.1} parent=1 // loop_header
      %s24 = sphi 0, %s28
      %p25 = scmp.ge.s32.totalorder %s24, 4
      %s34 = sphi 0, %s36
      %s37 = sphi 0, %s34
      %s38 = sphi 0, %s37
      %s54 = sphi 0, %s38
      %s58 = sphi 0, %s58
      %s60 = sphi 0, %s58
      %s61 = sphi 0, %s60
      %s75 = sphi 0, %s61
      %s79 = sphi 0, %s79
      %s81 = sphi 0, %s79
      %s82 = sphi 0, %s81
      %s96 = sphi 0, %s82
      %s100 = sphi 0, %s100
      %s102 = sphi 0, %s100
      %s103 = sphi 0, %s102
      %s117 = sphi 0, %s103
      %s121 = sphi 0, %s121
      %s123 = sphi 0, %s121
      %s124 = sphi 0, %s123
      %s138 = sphi 0, %s124
      %s142 = sphi 0, %s142
      %s144 = sphi 0, %s142
      %s145 = sphi 0, %s144
      %s159 = sphi 0, %s145
      %s163 = sphi 0, %s163
      %s165 = sphi 0, %s163
      %s166 = sphi 0, %s165
      %s180 = sphi 0, %s166
      %s184 = sphi 0, %s184
      %s186 = sphi 0, %s184
      %s187 = sphi 0, %s186
      %s201 = sphi 0, %s187
      %s205 = sphi 0, %s205
      %s207 = sphi 0, %s205
      %s208 = sphi 0, %s207
      %s222 = sphi 0, %s208
      %s226 = sphi 0, %s226
      %s228 = sphi 0, %s226
      %s229 = sphi 0, %s228
      %s243 = sphi 0, %s229
      %s247 = sphi 0, %s247
      %s249 = sphi 0, %s247
      %s250 = sphi 0, %s249
      %s264 = sphi 0, %s250
      %s268 = sphi 0, %s268
      %s270 = sphi 0, %s268
      %s271 = sphi 0, %s270
      %s285 = sphi 0, %s271
      %s289 = sphi 0, %s289
      %s291 = sphi 0, %s289
      %s292 = sphi 0, %s291
      %s306 = sphi 0, %s292
      %s310 = sphi 0, %s310
      %s312 = sphi 0, %s310
      %s313 = sphi 0, %s312
      %s327 = sphi 0, %s313
      %s331 = sphi 0, %s331
      %s333 = sphi 0, %s331
      %s334 = sphi 0, %s333
      %s348 = sphi 0, %s334
      %s354 = sphi 0, %s356
      %s357 = sphi 0, %s354
      %s358 = sphi 0, %s357
      %s374 = sphi 0, %s358
    $region4: #{resblock_forward.1} parent=1 // loop_header_branch
      %27 = sbr.rel (%p25) target = $region8
    $region5: #{resblock_forward.1} parent=1 // loop_body
      %s29 = ssub.s32 %s24, 1
      %s30 = ssub.s32 %s24, 2
      %s31 = sadd.s32 %s24, 1
      %s32 = ssub.s32 %s24, %s31
      %p33 = scmp.eq.s32.totalorder %s32, 0
      %s35 = sadd.s32 %s34, 1
      %s36 = scalar_select %p33, %s34, %s35
      %p39 = pneg %p33
      %p40 = scmp.eq.s32.totalorder %s24, 1
      %p41 = por %p39, %p40
      %p42 = scmp.ne.s32.totalorder %s34, %s37
      %p43 = scmp.eq.s32.totalorder %s24, 0
      %p44 = por %p42, %p43
      %p45 = scmp.ne.s32.totalorder %s34, %s37
      %p46 = scmp.eq.s32.totalorder %s29, 1
      %p47 = por %p45, %p46
      %p48 = scmp.ne.s32.totalorder %s37, %s38
      %p49 = scmp.eq.s32.totalorder %s29, 0
      %p50 = por %p48, %p49
      %p51 = scmp.ne.s32.totalorder %s37, %s38
      %p52 = scmp.eq.s32.totalorder %s30, 1
      %p53 = por %p51, %p52
      %p55 = scmp.ne.s32.totalorder %s38, %s54
      %p56 = scmp.eq.s32.totalorder %s30, 0
      %p57 = por %p55, %p56
      %s59 = sadd.s32 %s58, 1
      %p62 = scmp.eq.s32.totalorder %s24, 1
      %p63 = scmp.ne.s32.totalorder %s58, %s60
      %p64 = scmp.eq.s32.totalorder %s24, 0
      %p65 = por %p63, %p64
      %p66 = scmp.ne.s32.totalorder %s58, %s60
      %p67 = scmp.eq.s32.totalorder %s29, 1
      %p68 = por %p66, %p67
      %p69 = scmp.ne.s32.totalorder %s60, %s61
      %p70 = scmp.eq.s32.totalorder %s29, 0
      %p71 = por %p69, %p70
      %p72 = scmp.ne.s32.totalorder %s60, %s61
      %p73 = scmp.eq.s32.totalorder %s30, 1
      %p74 = por %p72, %p73
      %p76 = scmp.ne.s32.totalorder %s61, %s75
      %p77 = scmp.eq.s32.totalorder %s30, 0
      %p78 = por %p76, %p77
      %s80 = sadd.s32 %s79, 1
      %p83 = scmp.eq.s32.totalorder %s24, 1
      %p84 = scmp.ne.s32.totalorder %s79, %s81
      %p85 = scmp.eq.s32.totalorder %s24, 0
      %p86 = por %p84, %p85
      %p87 = scmp.ne.s32.totalorder %s79, %s81
      %p88 = scmp.eq.s32.totalorder %s29, 1
      %p89 = por %p87, %p88
      %p90 = scmp.ne.s32.totalorder %s81, %s82
      %p91 = scmp.eq.s32.totalorder %s29, 0
      %p92 = por %p90, %p91
      %p93 = scmp.ne.s32.totalorder %s81, %s82
      %p94 = scmp.eq.s32.totalorder %s30, 1
      %p95 = por %p93, %p94
      %p97 = scmp.ne.s32.totalorder %s82, %s96
      %p98 = scmp.eq.s32.totalorder %s30, 0
      %p99 = por %p97, %p98
      %s101 = sadd.s32 %s100, 1
      %p104 = scmp.eq.s32.totalorder %s24, 1
      %p105 = scmp.ne.s32.totalorder %s100, %s102
      %p106 = scmp.eq.s32.totalorder %s24, 0
      %p107 = por %p105, %p106
      %p108 = scmp.ne.s32.totalorder %s100, %s102
      %p109 = scmp.eq.s32.totalorder %s29, 1
      %p110 = por %p108, %p109
      %p111 = scmp.ne.s32.totalorder %s102, %s103
      %p112 = scmp.eq.s32.totalorder %s29, 0
      %p113 = por %p111, %p112
      %p114 = scmp.ne.s32.totalorder %s102, %s103
      %p115 = scmp.eq.s32.totalorder %s30, 1
      %p116 = por %p114, %p115
      %p118 = scmp.ne.s32.totalorder %s103, %s117
      %p119 = scmp.eq.s32.totalorder %s30, 0
      %p120 = por %p118, %p119
      %s122 = sadd.s32 %s121, 1
      %p125 = scmp.eq.s32.totalorder %s24, 1
      %p126 = scmp.ne.s32.totalorder %s121, %s123
      %p127 = scmp.eq.s32.totalorder %s24, 0
      %p128 = por %p126, %p127
      %p129 = scmp.ne.s32.totalorder %s121, %s123
      %p130 = scmp.eq.s32.totalorder %s29, 1
      %p131 = por %p129, %p130
      %p132 = scmp.ne.s32.totalorder %s123, %s124
      %p133 = scmp.eq.s32.totalorder %s29, 0
      %p134 = por %p132, %p133
      %p135 = scmp.ne.s32.totalorder %s123, %s124
      %p136 = scmp.eq.s32.totalorder %s30, 1
      %p137 = por %p135, %p136
      %p139 = scmp.ne.s32.totalorder %s124, %s138
      %p140 = scmp.eq.s32.totalorder %s30, 0
      %p141 = por %p139, %p140
      %s143 = sadd.s32 %s142, 1
      %p146 = scmp.eq.s32.totalorder %s24, 1
      %p147 = scmp.ne.s32.totalorder %s142, %s144
      %p148 = scmp.eq.s32.totalorder %s24, 0
      %p149 = por %p147, %p148
      %p150 = scmp.ne.s32.totalorder %s142, %s144
      %p151 = scmp.eq.s32.totalorder %s29, 1
      %p152 = por %p150, %p151
      %p153 = scmp.ne.s32.totalorder %s144, %s145
      %p154 = scmp.eq.s32.totalorder %s29, 0
      %p155 = por %p153, %p154
      %p156 = scmp.ne.s32.totalorder %s144, %s145
      %p157 = scmp.eq.s32.totalorder %s30, 1
      %p158 = por %p156, %p157
      %p160 = scmp.ne.s32.totalorder %s145, %s159
      %p161 = scmp.eq.s32.totalorder %s30, 0
      %p162 = por %p160, %p161
      %s164 = sadd.s32 %s163, 1
      %p167 = scmp.eq.s32.totalorder %s24, 1
      %p168 = scmp.ne.s32.totalorder %s163, %s165
      %p169 = scmp.eq.s32.totalorder %s24, 0
      %p170 = por %p168, %p169
      %p171 = scmp.ne.s32.totalorder %s163, %s165
      %p172 = scmp.eq.s32.totalorder %s29, 1
      %p173 = por %p171, %p172
      %p174 = scmp.ne.s32.totalorder %s165, %s166
      %p175 = scmp.eq.s32.totalorder %s29, 0
      %p176 = por %p174, %p175
      %p177 = scmp.ne.s32.totalorder %s165, %s166
      %p178 = scmp.eq.s32.totalorder %s30, 1
      %p179 = por %p177, %p178
      %p181 = scmp.ne.s32.totalorder %s166, %s180
      %p182 = scmp.eq.s32.totalorder %s30, 0
      %p183 = por %p181, %p182
      %s185 = sadd.s32 %s184, 1
      %p188 = scmp.eq.s32.totalorder %s24, 1
      %p189 = scmp.ne.s32.totalorder %s184, %s186
      %p190 = scmp.eq.s32.totalorder %s24, 0
      %p191 = por %p189, %p190
      %p192 = scmp.ne.s32.totalorder %s184, %s186
      %p193 = scmp.eq.s32.totalorder %s29, 1
      %p194 = por %p192, %p193
      %p195 = scmp.ne.s32.totalorder %s186, %s187
      %p196 = scmp.eq.s32.totalorder %s29, 0
      %p197 = por %p195, %p196
      %p198 = scmp.ne.s32.totalorder %s186, %s187
      %p199 = scmp.eq.s32.totalorder %s30, 1
      %p200 = por %p198, %p199
      %p202 = scmp.ne.s32.totalorder %s187, %s201
      %p203 = scmp.eq.s32.totalorder %s30, 0
      %p204 = por %p202, %p203
      %s206 = sadd.s32 %s205, 1
      %p209 = scmp.eq.s32.totalorder %s24, 1
      %p210 = scmp.ne.s32.totalorder %s205, %s207
      %p211 = scmp.eq.s32.totalorder %s24, 0
      %p212 = por %p210, %p211
      %p213 = scmp.ne.s32.totalorder %s205, %s207
      %p214 = scmp.eq.s32.totalorder %s29, 1
      %p215 = por %p213, %p214
      %p216 = scmp.ne.s32.totalorder %s207, %s208
      %p217 = scmp.eq.s32.totalorder %s29, 0
      %p218 = por %p216, %p217
      %p219 = scmp.ne.s32.totalorder %s207, %s208
      %p220 = scmp.eq.s32.totalorder %s30, 1
      %p221 = por %p219, %p220
      %p223 = scmp.ne.s32.totalorder %s208, %s222
      %p224 = scmp.eq.s32.totalorder %s30, 0
      %p225 = por %p223, %p224
      %s227 = sadd.s32 %s226, 1
      %p230 = scmp.eq.s32.totalorder %s24, 1
      %p231 = scmp.ne.s32.totalorder %s226, %s228
      %p232 = scmp.eq.s32.totalorder %s24, 0
      %p233 = por %p231, %p232
      %p234 = scmp.ne.s32.totalorder %s226, %s228
      %p235 = scmp.eq.s32.totalorder %s29, 1
      %p236 = por %p234, %p235
      %p237 = scmp.ne.s32.totalorder %s228, %s229
      %p238 = scmp.eq.s32.totalorder %s29, 0
      %p239 = por %p237, %p238
      %p240 = scmp.ne.s32.totalorder %s228, %s229
      %p241 = scmp.eq.s32.totalorder %s30, 1
      %p242 = por %p240, %p241
      %p244 = scmp.ne.s32.totalorder %s229, %s243
      %p245 = scmp.eq.s32.totalorder %s30, 0
      %p246 = por %p244, %p245
      %s248 = sadd.s32 %s247, 1
      %p251 = scmp.eq.s32.totalorder %s24, 1
      %p252 = scmp.ne.s32.totalorder %s247, %s249
      %p253 = scmp.eq.s32.totalorder %s24, 0
      %p254 = por %p252, %p253
      %p255 = scmp.ne.s32.totalorder %s247, %s249
      %p256 = scmp.eq.s32.totalorder %s29, 1
      %p257 = por %p255, %p256
      %p258 = scmp.ne.s32.totalorder %s249, %s250
      %p259 = scmp.eq.s32.totalorder %s29, 0
      %p260 = por %p258, %p259
      %p261 = scmp.ne.s32.totalorder %s249, %s250
      %p262 = scmp.eq.s32.totalorder %s30, 1
      %p263 = por %p261, %p262
      %p265 = scmp.ne.s32.totalorder %s250, %s264
      %p266 = scmp.eq.s32.totalorder %s30, 0
      %p267 = por %p265, %p266
      %s269 = sadd.s32 %s268, 1
      %p272 = scmp.eq.s32.totalorder %s24, 1
      %p273 = scmp.ne.s32.totalorder %s268, %s270
      %p274 = scmp.eq.s32.totalorder %s24, 0
      %p275 = por %p273, %p274
      %p276 = scmp.ne.s32.totalorder %s268, %s270
      %p277 = scmp.eq.s32.totalorder %s29, 1
      %p278 = por %p276, %p277
      %p279 = scmp.ne.s32.totalorder %s270, %s271
      %p280 = scmp.eq.s32.totalorder %s29, 0
      %p281 = por %p279, %p280
      %p282 = scmp.ne.s32.totalorder %s270, %s271
      %p283 = scmp.eq.s32.totalorder %s30, 1
      %p284 = por %p282, %p283
      %p286 = scmp.ne.s32.totalorder %s271, %s285
      %p287 = scmp.eq.s32.totalorder %s30, 0
      %p288 = por %p286, %p287
      %s290 = sadd.s32 %s289, 1
      %p293 = scmp.eq.s32.totalorder %s24, 1
      %p294 = scmp.ne.s32.totalorder %s289, %s291
      %p295 = scmp.eq.s32.totalorder %s24, 0
      %p296 = por %p294, %p295
      %p297 = scmp.ne.s32.totalorder %s289, %s291
      %p298 = scmp.eq.s32.totalorder %s29, 1
      %p299 = por %p297, %p298
      %p300 = scmp.ne.s32.totalorder %s291, %s292
      %p301 = scmp.eq.s32.totalorder %s29, 0
      %p302 = por %p300, %p301
      %p303 = scmp.ne.s32.totalorder %s291, %s292
      %p304 = scmp.eq.s32.totalorder %s30, 1
      %p305 = por %p303, %p304
      %p307 = scmp.ne.s32.totalorder %s292, %s306
      %p308 = scmp.eq.s32.totalorder %s30, 0
      %p309 = por %p307, %p308
      %s311 = sadd.s32 %s310, 1
      %p314 = scmp.eq.s32.totalorder %s24, 1
      %p315 = scmp.ne.s32.totalorder %s310, %s312
      %p316 = scmp.eq.s32.totalorder %s24, 0
      %p317 = por %p315, %p316
      %p318 = scmp.ne.s32.totalorder %s310, %s312
      %p319 = scmp.eq.s32.totalorder %s29, 1
      %p320 = por %p318, %p319
      %p321 = scmp.ne.s32.totalorder %s312, %s313
      %p322 = scmp.eq.s32.totalorder %s29, 0
      %p323 = por %p321, %p322
      %p324 = scmp.ne.s32.totalorder %s312, %s313
      %p325 = scmp.eq.s32.totalorder %s30, 1
      %p326 = por %p324, %p325
      %p328 = scmp.ne.s32.totalorder %s313, %s327
      %p329 = scmp.eq.s32.totalorder %s30, 0
      %p330 = por %p328, %p329
      %s332 = sadd.s32 %s331, 1
      %p335 = scmp.eq.s32.totalorder %s24, 1
      %p336 = scmp.ne.s32.totalorder %s331, %s333
      %p337 = scmp.eq.s32.totalorder %s24, 0
      %p338 = por %p336, %p337
      %p339 = scmp.ne.s32.totalorder %s331, %s333
      %p340 = scmp.eq.s32.totalorder %s29, 1
      %p341 = por %p339, %p340
      %p342 = scmp.ne.s32.totalorder %s333, %s334
      %p343 = scmp.eq.s32.totalorder %s29, 0
      %p344 = por %p342, %p343
      %p345 = scmp.ne.s32.totalorder %s333, %s334
      %p346 = scmp.eq.s32.totalorder %s30, 1
      %p347 = por %p345, %p346
      %p349 = scmp.ne.s32.totalorder %s334, %s348
      %p350 = scmp.eq.s32.totalorder %s30, 0
      %p351 = por %p349, %p350
      %s352 = ssub.s32 %s24, %s31
      %p353 = scmp.eq.s32.totalorder %s352, 0
      %s355 = sadd.s32 %s354, 1
      %s356 = scalar_select %p353, %s354, %s355
      %p359 = pneg %p353
      %p360 = scmp.eq.s32.totalorder %s24, 1
      %p361 = por %p359, %p360
      %p362 = scmp.ne.s32.totalorder %s354, %s357
      %p363 = scmp.eq.s32.totalorder %s24, 0
      %p364 = por %p362, %p363
      %p365 = scmp.ne.s32.totalorder %s354, %s357
      %p366 = scmp.eq.s32.totalorder %s29, 1
      %p367 = por %p365, %p366
      %p368 = scmp.ne.s32.totalorder %s357, %s358
      %p369 = scmp.eq.s32.totalorder %s29, 0
      %p370 = por %p368, %p369
      %p371 = scmp.ne.s32.totalorder %s357, %s358
      %p372 = scmp.eq.s32.totalorder %s30, 1
      %p373 = por %p371, %p372
      %p375 = scmp.ne.s32.totalorder %s358, %s374
      %p376 = scmp.eq.s32.totalorder %s30, 0
      %p377 = por %p375, %p376
      %p378 = scmp.le.s32.totalorder 1, %s24
      %p379 = scmp.lt.s32.totalorder %s24, 3
      %p380 = pnand %p378, %p379
      %p381 = pneg %p380
      // Predicated region
      $region9: #{resblock_forward.1} parent=5 // pred_check
        _
      $region10: #{resblock_forward.1} parent=5 // pred_check_branch
        %383 = sbr.rel (%p380) target = $region12
      $region11: #{resblock_forward.1} parent=5 // pred_region
        %s384 = ssub.s32 %s24, 1
        // Predicated region
        $region13: #{resblock_forward.1} parent=11 // pred_check
          %p385 = pneg %p71
        $region14: #{resblock_forward.1} parent=11 // pred_check_branch
          %387 = sbr.rel (%p385) target = $region16
        $region15: #{resblock_forward.1} parent=11 // pred_region
          _
        $region16: #{resblock_forward.1} parent=11 // pred_fallthru
          _
        // Predicated region
        $region17: #{resblock_forward.1} parent=11 // pred_check
          %p388 = pneg %p92
        $region18: #{resblock_forward.1} parent=11 // pred_check_branch
          %390 = sbr.rel (%p388) target = $region20
        $region19: #{resblock_forward.1} parent=11 // pred_region
          _
        $region20: #{resblock_forward.1} parent=11 // pred_fallthru
          _
        // Predicated region
        $region21: #{resblock_forward.1} parent=11 // pred_check
          %p391 = pneg %p113
        $region22: #{resblock_forward.1} parent=11 // pred_check_branch
          %393 = sbr.rel (%p391) target = $region24
        $region23: #{resblock_forward.1} parent=11 // pred_region
          _
        $region24: #{resblock_forward.1} parent=11 // pred_fallthru
          _
        // Predicated region
        $region25: #{resblock_forward.1} parent=11 // pred_check
          %p394 = pneg %p134
        $region26: #{resblock_forward.1} parent=11 // pred_check_branch
          %396 = sbr.rel (%p394) target = $region28
        $region27: #{resblock_forward.1} parent=11 // pred_region
          _
        $region28: #{resblock_forward.1} parent=11 // pred_fallthru
          _
        // Predicated region
        $region29: #{resblock_forward.1} parent=11 // pred_check
          %p397 = pneg %p155
        $region30: #{resblock_forward.1} parent=11 // pred_check_branch
          %399 = sbr.rel (%p397) target = $region32
        $region31: #{resblock_forward.1} parent=11 // pred_region
          _
        $region32: #{resblock_forward.1} parent=11 // pred_fallthru
          _
        // Predicated region
        $region33: #{resblock_forward.1} parent=11 // pred_check
          %p400 = pneg %p176
        $region34: #{resblock_forward.1} parent=11 // pred_check_branch
          %402 = sbr.rel (%p400) target = $region36
        $region35: #{resblock_forward.1} parent=11 // pred_region
          _
        $region36: #{resblock_forward.1} parent=11 // pred_fallthru
          _
        // Predicated region
        $region37: #{resblock_forward.1} parent=11 // pred_check
          %p403 = pneg %p197
        $region38: #{resblock_forward.1} parent=11 // pred_check_branch
          %405 = sbr.rel (%p403) target = $region40
        $region39: #{resblock_forward.1} parent=11 // pred_region
          _
        $region40: #{resblock_forward.1} parent=11 // pred_fallthru
          _
        // Predicated region
        $region41: #{resblock_forward.1} parent=11 // pred_check
          %p406 = pneg %p218
        $region42: #{resblock_forward.1} parent=11 // pred_check_branch
          %408 = sbr.rel (%p406) target = $region44
        $region43: #{resblock_forward.1} parent=11 // pred_region
          _
        $region44: #{resblock_forward.1} parent=11 // pred_fallthru
          _
        // Predicated region
        $region45: #{resblock_forward.1} parent=11 // pred_check
          %p409 = pneg %p239
        $region46: #{resblock_forward.1} parent=11 // pred_check_branch
          %411 = sbr.rel (%p409) target = $region48
        $region47: #{resblock_forward.1} parent=11 // pred_region
          _
        $region48: #{resblock_forward.1} parent=11 // pred_fallthru
          _
        // Predicated region
        $region49: #{resblock_forward.1} parent=11 // pred_check
          %p412 = pneg %p260
        $region50: #{resblock_forward.1} parent=11 // pred_check_branch
          %414 = sbr.rel (%p412) target = $region52
        $region51: #{resblock_forward.1} parent=11 // pred_region
          _
        $region52: #{resblock_forward.1} parent=11 // pred_fallthru
          _
        // Predicated region
        $region53: #{resblock_forward.1} parent=11 // pred_check
          %p415 = pneg %p281
        $region54: #{resblock_forward.1} parent=11 // pred_check_branch
          %417 = sbr.rel (%p415) target = $region56
        $region55: #{resblock_forward.1} parent=11 // pred_region
          _
        $region56: #{resblock_forward.1} parent=11 // pred_fallthru
          _
        // Predicated region
        $region57: #{resblock_forward.1} parent=11 // pred_check
          %p418 = pneg %p302
        $region58: #{resblock_forward.1} parent=11 // pred_check_branch
          %420 = sbr.rel (%p418) target = $region60
        $region59: #{resblock_forward.1} parent=11 // pred_region
          _
        $region60: #{resblock_forward.1} parent=11 // pred_fallthru
          _
        // Predicated region
        $region61: #{resblock_forward.1} parent=11 // pred_check
          %p421 = pneg %p323
        $region62: #{resblock_forward.1} parent=11 // pred_check_branch
          %423 = sbr.rel (%p421) target = $region64
        $region63: #{resblock_forward.1} parent=11 // pred_region
          _
        $region64: #{resblock_forward.1} parent=11 // pred_fallthru
          _
        // Predicated region
        $region65: #{resblock_forward.1} parent=11 // pred_check
          %p424 = pneg %p344
        $region66: #{resblock_forward.1} parent=11 // pred_check_branch
          %426 = sbr.rel (%p424) target = $region68
        $region67: #{resblock_forward.1} parent=11 // pred_region
          _
        $region68: #{resblock_forward.1} parent=11 // pred_fallthru
          _
      $region12: #{resblock_forward.1} parent=5 // pred_fallthru
        _
      %p427 = scmp.lt.s32.totalorder %s24, 2
      // Predicated region
      $region69: #{resblock_forward.1} parent=5 // pred_check
        %p428 = pneg %p427
      $region70: #{resblock_forward.1} parent=5 // pred_check_branch
        %430 = sbr.rel (%p428) target = $region72
      $region71: #{resblock_forward.1} parent=5 // pred_region
        // Predicated region
        $region73: #{resblock_forward.1} parent=71 // pred_check
          %p431 = pneg %p44
        $region74: #{resblock_forward.1} parent=71 // pred_check_branch
          %433 = sbr.rel (%p431) target = $region76
        $region75: #{resblock_forward.1} parent=71 // pred_region
          %p434 = scmp.lt.s32.totalorder %s24, 1
          %s435 = scalar_select %p434, %s24, 1
          %s436 = smul.addr %s435, 32
          %s437 = smul.addr %s436, 8
          %s438 = scalar_lea.vmem %s0, %s437
        $region76: #{resblock_forward.1} parent=71 // pred_fallthru
          _
      $region72: #{resblock_forward.1} parent=5 // pred_fallthru
        _
      %p439 = scmp.le.s32.totalorder 1, %s24
      %p440 = scmp.lt.s32.totalorder %s24, 3
      %p441 = pnand %p439, %p440
      %p442 = pneg %p441
      // Predicated region
      $region77: #{resblock_forward.1} parent=5 // pred_check
        _
      $region78: #{resblock_forward.1} parent=5 // pred_check_branch
        %444 = sbr.rel (%p441) target = $region80
      $region79: #{resblock_forward.1} parent=5 // pred_region
        %s445 = ssub.s32 %s24, 1
        %p446 = scmp.lt.s32.totalorder %s29, 1
        %s447 = scalar_select %p446, %s29, 1
        %s448 = smul.addr %s447, 32
        %s449 = smul.addr %s448, 8
        %s450 = scalar_lea.vmem %s0, %s449
        %p451 = pneg %p50
        %p452 = pneg %p47
        %p453 = pneg %p71
        %p454 = pneg %p68
        %p455 = pneg %p92
        %p456 = pneg %p89
        %p457 = pneg %p113
        %p458 = pneg %p110
        %p459 = pneg %p134
        %p460 = pneg %p131
        %p461 = pneg %p155
        %p462 = pneg %p152
        %p463 = pneg %p176
        %p464 = pneg %p173
        %p465 = pneg %p197
        %p466 = pneg %p194
        %p467 = pneg %p218
        %p468 = pneg %p215
        %p469 = pneg %p239
        %p470 = pneg %p236
        %p471 = pneg %p260
        %p472 = pneg %p257
        %p473 = pneg %p281
        %p474 = pneg %p278
        %p475 = pneg %p302
        %p476 = pneg %p299
        %p477 = pneg %p323
        %p478 = pneg %p320
        %p479 = pneg %p344
        %p480 = pneg %p341
        %p481 = pneg %p370
        %p482 = pneg %p367
        %s483 = sand.u32 %s357, 1
        %s484 = scalar_lea.sflag [#allocation3], %s483
        %s485 = sand.u32 %s357, 1
        %s486 = smul.addr %s485, 256
        %s487 = scalar_lea.vmem [#allocation2], %s486
        %p488 = scmp.lt.s32.totalorder %s29, 1
        %s489 = scalar_select %p488, %s29, 1
        %s490 = smul.addr %s489, 32
        %s491 = smul.addr %s490, 8
        %s492 = scalar_lea.vmem %s0, %s491
        %v494 = vld [vmem:[%s492] sm:$0xff]
        %v495 = vld [vmem:[%s492 + $0x8] sm:$0xff]
        %v496 = vld [vmem:[%s492 + $0x10] sm:$0xff]
        %v497 = vld [vmem:[%s492 + $0x18] sm:$0xff]
        %v498 = vld [vmem:[%s492 + $0x20] sm:$0xff]
        %v499 = vld [vmem:[%s492 + $0x28] sm:$0xff]
        %v500 = vld [vmem:[%s492 + $0x30] sm:$0xff]
        %v501 = vld [vmem:[%s492 + $0x38] sm:$0xff]
        %v502 = vld [vmem:[%s492 + $0x40] sm:$0xff]
        %v503 = vld [vmem:[%s492 + $0x48] sm:$0xff]
        %v504 = vld [vmem:[%s492 + $0x50] sm:$0xff]
        %v505 = vld [vmem:[%s492 + $0x58] sm:$0xff]
        %v506 = vld [vmem:[%s492 + $0x60] sm:$0xff]
        %v507 = vld [vmem:[%s492 + $0x68] sm:$0xff]
        %v508 = vld [vmem:[%s492 + $0x70] sm:$0xff]
        %v509 = vld [vmem:[%s492 + $0x78] sm:$0xff]
        %v510 = vld [vmem:[%s492 + $0x80] sm:$0xff]
        %v511 = vld [vmem:[%s492 + $0x88] sm:$0xff]
        %v512 = vld [vmem:[%s492 + $0x90] sm:$0xff]
        %v513 = vld [vmem:[%s492 + $0x98] sm:$0xff]
        %v514 = vld [vmem:[%s492 + $0xa0] sm:$0xff]
        %v515 = vld [vmem:[%s492 + $0xa8] sm:$0xff]
        %v516 = vld [vmem:[%s492 + $0xb0] sm:$0xff]
        %v517 = vld [vmem:[%s492 + $0xb8] sm:$0xff]
        %v518 = vld [vmem:[%s492 + $0xc0] sm:$0xff]
        %v519 = vld [vmem:[%s492 + $0xc8] sm:$0xff]
        %v520 = vld [vmem:[%s492 + $0xd0] sm:$0xff]
        %v521 = vld [vmem:[%s492 + $0xd8] sm:$0xff]
        %v522 = vld [vmem:[%s492 + $0xe0] sm:$0xff]
        %v523 = vld [vmem:[%s492 + $0xe8] sm:$0xff]
        %v524 = vld [vmem:[%s492 + $0xf0] sm:$0xff]
        %v525 = vld [vmem:[%s492 + $0xf8] sm:$0xff]
        %v526 = vld [vmem:[%s1] sm:$0xff]
        %v527 = vld [vmem:[%s1 + $0x8] sm:$0xff]
        %v528 = vld [vmem:[%s1 + $0x10] sm:$0xff]
        %v529 = vld [vmem:[%s1 + $0x18] sm:$0xff]
        %v530 = vld [vmem:[%s1 + $0x20] sm:$0xff]
        %v531 = vld [vmem:[%s1 + $0x28] sm:$0xff]
        %v532 = vld [vmem:[%s1 + $0x30] sm:$0xff]
        %v533 = vld [vmem:[%s1 + $0x38] sm:$0xff]
        %v534 = vld [vmem:[%s1 + $0x40] sm:$0xff]
        %v535 = vld [vmem:[%s1 + $0x48] sm:$0xff]
        %v536 = vld [vmem:[%s1 + $0x50] sm:$0xff]
        %v537 = vld [vmem:[%s1 + $0x58] sm:$0xff]
        %v538 = vld [vmem:[%s1 + $0x60] sm:$0xff]
        %v539 = vld [vmem:[%s1 + $0x68] sm:$0xff]
        %v540 = vld [vmem:[%s1 + $0x70] sm:$0xff]
        %v541 = vld [vmem:[%s1 + $0x78] sm:$0xff]
        %v542 = vld [vmem:[%s2] sm:$0xff]
        %v543 = vld [vmem:[%s2 + $0x8] sm:$0xff]
        %v544 = vld [vmem:[%s2 + $0x10] sm:$0xff]
        %v545 = vld [vmem:[%s2 + $0x18] sm:$0xff]
        %v546 = vld [vmem:[%s3] sm:$0x1]
        %v547 = vld [vmem:[%s4] sm:$0x1]
        %v548 = vadd.f32 %v494, %v495
        %v549 = vadd.f32 %v548, %v496
        %v550 = vadd.f32 %v549, %v497
        %v551 = vadd.f32 %v550, %v498
        %v552 = vadd.f32 %v551, %v499
        %v553 = vadd.f32 %v552, %v500
        %v554 = vadd.f32 %v553, %v501
        %v555 = vadd.f32 %v554, %v502
        %v556 = vadd.f32 %v555, %v503
        %v557 = vadd.f32 %v556, %v504
        %v558 = vadd.f32 %v557, %v505
        %v559 = vadd.f32 %v558, %v506
        %v560 = vadd.f32 %v559, %v507
        %v561 = vadd.f32 %v560, %v508
        %v562 = vadd.f32 %v561, %v509
        %v563 = vadd.f32 %v562, %v510
        %v564 = vadd.f32 %v563, %v511
        %v565 = vadd.f32 %v564, %v512
        %v566 = vadd.f32 %v565, %v513
        %v567 = vadd.f32 %v566, %v514
        %v568 = vadd.f32 %v567, %v515
        %v569 = vadd.f32 %v568, %v516
        %v570 = vadd.f32 %v569, %v517
        %v571 = vadd.f32 %v570, %v518
        %v572 = vadd.f32 %v571, %v519
        %v573 = vadd.f32 %v572, %v520
        %v574 = vadd.f32 %v573, %v521
        %v575 = vadd.f32 %v574, %v522
        %v576 = vadd.f32 %v575, %v523
        %v577 = vadd.f32 %v576, %v524
        %v578 = vadd.f32 %v577, %v525
        %v579 = vrot.slane %v578, 4
        %v580 = vadd.f32 %v578, %v579
        %v581 = vrot.slane %v580, 2
        %v582 = vadd.f32 %v580, %v581
        %v583 = vrot.slane %v582, 1
        %v584 = vadd.f32 %v582, %v583
        %v585 = vmul.f32 %v494, %v494
        %v586 = vmul.f32 %v495, %v495
        %v587 = vmul.f32 %v496, %v496
        %v588 = vmul.f32 %v497, %v497
        %v589 = vmul.f32 %v498, %v498
        %v590 = vmul.f32 %v499, %v499
        %v591 = vmul.f32 %v500, %v500
        %v592 = vmul.f32 %v501, %v501
        %v593 = vmul.f32 %v502, %v502
        %v594 = vmul.f32 %v503, %v503
        %v595 = vmul.f32 %v504, %v504
        %v596 = vmul.f32 %v505, %v505
        %v597 = vmul.f32 %v506, %v506
        %v598 = vmul.f32 %v507, %v507
        %v599 = vmul.f32 %v508, %v508
        %v600 = vmul.f32 %v509, %v509
        %v601 = vmul.f32 %v510, %v510
        %v602 = vmul.f32 %v511, %v511
        %v603 = vmul.f32 %v512, %v512
        %v604 = vmul.f32 %v513, %v513
        %v605 = vmul.f32 %v514, %v514
        %v606 = vmul.f32 %v515, %v515
        %v607 = vmul.f32 %v516, %v516
        %v608 = vmul.f32 %v517, %v517
        %v609 = vmul.f32 %v518, %v518
        %v610 = vmul.f32 %v519, %v519
        %v611 = vmul.f32 %v520, %v520
        %v612 = vmul.f32 %v521, %v521
        %v613 = vmul.f32 %v522, %v522
        %v614 = vmul.f32 %v523, %v523
        %v615 = vmul.f32 %v524, %v524
        %v616 = vmul.f32 %v525, %v525
        %v617 = vadd.f32 %v585, %v586
        %v618 = vadd.f32 %v617, %v587
        %v619 = vadd.f32 %v618, %v588
        %v620 = vadd.f32 %v619, %v589
        %v621 = vadd.f32 %v620, %v590
        %v622 = vadd.f32 %v621, %v591
        %v623 = vadd.f32 %v622, %v592
        %v624 = vadd.f32 %v623, %v593
        %v625 = vadd.f32 %v624, %v594
        %v626 = vadd.f32 %v625, %v595
        %v627 = vadd.f32 %v626, %v596
        %v628 = vadd.f32 %v627, %v597
        %v629 = vadd.f32 %v628, %v598
        %v630 = vadd.f32 %v629, %v599
        %v631 = vadd.f32 %v630, %v600
        %v632 = vadd.f32 %v631, %v601
        %v633 = vadd.f32 %v632, %v602
        %v634 = vadd.f32 %v633, %v603
        %v635 = vadd.f32 %v634, %v604
        %v636 = vadd.f32 %v635, %v605
        %v637 = vadd.f32 %v636, %v606
        %v638 = vadd.f32 %v637, %v607
        %v639 = vadd.f32 %v638, %v608
        %v640 = vadd.f32 %v639, %v609
        %v641 = vadd.f32 %v640, %v610
        %v642 = vadd.f32 %v641, %v611
        %v643 = vadd.f32 %v642, %v612
        %v644 = vadd.f32 %v643, %v613
        %v645 = vadd.f32 %v644, %v614
        %v646 = vadd.f32 %v645, %v615
        %v647 = vadd.f32 %v646, %v616
        %v648 = vrot.slane %v647, 4
        %v649 = vadd.f32 %v647, %v648
        %v650 = vrot.slane %v649, 2
        %v651 = vadd.f32 %v649, %v650
        %v652 = vrot.slane %v651, 1
        %v653 = vadd.f32 %v651, %v652
        %vm654 = vcmask 1040384
        %v655 = vsel %vm654, %v584, %v653
        %656 = vmatprep.subr.mxu0 0.0
        %657 = vmatpush1.msra.mxu0 %v526
        %658 = vmatprep.subr.mxu0 0.0
        %659 = vmatpush1.msra.mxu0 %v527
        %660 = vmatprep.subr.mxu0 0.0
        %661 = vmatpush1.msra.mxu0 %v528
        %662 = vmatprep.subr.mxu0 0.0
        %663 = vmatpush1.msra.mxu0 %v529
        %664 = vmatprep.subr.mxu0 0.0
        %665 = vmatpush1.msra.mxu0 %v530
        %666 = vmatprep.subr.mxu0 0.0
        %667 = vmatpush1.msra.mxu0 %v531
        %668 = vmatprep.subr.mxu0 0.0
        %669 = vmatpush1.msra.mxu0 %v532
        %670 = vmatprep.subr.mxu0 0.0
        %671 = vmatpush1.msra.mxu0 %v533
        %672 = vmatprep.subr.mxu0 0.0
        %673 = vmatpush1.msra.mxu0 %v534
        %674 = vmatprep.subr.mxu0 0.0
        %675 = vmatpush1.msra.mxu0 %v535
        %676 = vmatprep.subr.mxu0 0.0
        %677 = vmatpush1.msra.mxu0 %v536
        %678 = vmatprep.subr.mxu0 0.0
        %679 = vmatpush1.msra.mxu0 %v537
        %680 = vmatprep.subr.mxu0 0.0
        %681 = vmatpush1.msra.mxu0 %v538
        %682 = vmatprep.subr.mxu0 0.0
        %683 = vmatpush1.msra.mxu0 %v539
        %684 = vmatprep.subr.mxu0 0.0
        %685 = vmatpush1.msra.mxu0 %v540
        %686 = vmatprep.subr.mxu0 0.0
        %687 = vmatpush1.msra.mxu0 %v541
        %688 = vmatprep.subr.mxu0 0.0
        %689 = vmatpush1.msra.mxu0 0.0
        %690 = vmatprep.subr.mxu0 0.0
        %691 = vmatpush1.msra.mxu0 0.0
        %692 = vmatprep.subr.mxu0 0.0
        %693 = vmatpush1.msra.mxu0 0.0
        %694 = vmatprep.subr.mxu0 0.0
        %695 = vmatpush1.msra.mxu0 0.0
        %696 = vmatprep.subr.mxu0 0.0
        %697 = vmatpush1.msra.mxu0 0.0
        %698 = vmatprep.subr.mxu0 0.0
        %699 = vmatpush1.msra.mxu0 0.0
        %700 = vmatprep.subr.mxu0 0.0
        %701 = vmatpush1.msra.mxu0 0.0
        %702 = vmatprep.subr.mxu0 0.0
        %703 = vmatpush1.msra.mxu0 0.0
        %704 = vmatprep.subr.mxu0 0.0
        %705 = vmatpush1.msra.mxu0 0.0
        %706 = vmatprep.subr.mxu0 0.0
        %707 = vmatpush1.msra.mxu0 0.0
        %708 = vmatprep.subr.mxu0 0.0
        %709 = vmatpush1.msra.mxu0 0.0
        %710 = vmatprep.subr.mxu0 0.0
        %711 = vmatpush1.msra.mxu0 0.0
        %712 = vmatprep.subr.mxu0 0.0
        %713 = vmatpush1.msra.mxu0 0.0
        %714 = vmatprep.subr.mxu0 0.0
        %715 = vmatpush1.msra.mxu0 0.0
        %716 = vmatprep.subr.mxu0 0.0
        %717 = vmatpush1.msra.mxu0 0.0
        %718 = vmatprep.subr.mxu0 0.0
        %719 = vmatpush1.msra.mxu0 0.0
        %720 = vmatprep.mubr.f32.mxu0 0.0
        %721 = vmatmul.mubr.f32.gmra.mrb[0].mxu0 %v655
        %v722 = vpop.f32.mrb[0].mxu0
        %v723 = vadd.f32 0.0, %v722
        %v724 = vpop.f32.mrb[0].mxu0
        %725 = vdwg.mxu0
        %v726 = vmul.f32 %v723, 0.001953125
        %v727 = vmul.f32 %v726, %v726
        %v729 = vrot.slane %v727, 7
        %v731 = vsub.f32 %v726, %v729
        %v732 = vmax.f32 %v731, 0.0
        %v733 = vadd.f32 %v732, 1e-06
        %v734 = vrsqrt.pop %v733
        %v735 = vsel %vm654, %v726, %v734
        %vm736 = vcmask 261120
        %v738 = vsel %vm736, %v735, 0
        %740 = vmatprep.subr.mxu0 0.0
        %741 = vmatpush1.msra.mxu0 %v542
        %742 = vmatprep.subr.mxu0 0.0
        %743 = vmatpush1.msra.mxu0 %v543
        %744 = vmatprep.subr.mxu0 0.0
        %745 = vmatpush1.msra.mxu0 %v544
        %746 = vmatprep.subr.mxu0 0.0
        %747 = vmatpush1.msra.mxu0 %v545
        %748 = vmatprep.subr.mxu0 0.0
        %749 = vmatpush1.msra.mxu0 0.0
        %750 = vmatprep.subr.mxu0 0.0
        %751 = vmatpush1.msra.mxu0 0.0
        %752 = vmatprep.subr.mxu0 0.0
        %753 = vmatpush1.msra.mxu0 0.0
        %754 = vmatprep.subr.mxu0 0.0
        %755 = vmatpush1.msra.mxu0 0.0
        %756 = vmatprep.subr.mxu0 0.0
        %757 = vmatpush1.msra.mxu0 0.0
        %758 = vmatprep.subr.mxu0 0.0
        %759 = vmatpush1.msra.mxu0 0.0
        %760 = vmatprep.subr.mxu0 0.0
        %761 = vmatpush1.msra.mxu0 0.0
        %762 = vmatprep.subr.mxu0 0.0
        %763 = vmatpush1.msra.mxu0 0.0
        %764 = vmatprep.subr.mxu0 0.0
        %765 = vmatpush1.msra.mxu0 0.0
        %766 = vmatprep.subr.mxu0 0.0
        %767 = vmatpush1.msra.mxu0 0.0
        %768 = vmatprep.subr.mxu0 0.0
        %769 = vmatpush1.msra.mxu0 0.0
        %770 = vmatprep.subr.mxu0 0.0
        %771 = vmatpush1.msra.mxu0 0.0
        %772 = vmatprep.subr.mxu0 0.0
        %773 = vmatpush1.msra.mxu0 0.0
        %774 = vmatprep.subr.mxu0 0.0
        %775 = vmatpush1.msra.mxu0 0.0
        %776 = vmatprep.subr.mxu0 0.0
        %777 = vmatpush1.msra.mxu0 0.0
        %778 = vmatprep.subr.mxu0 0.0
        %779 = vmatpush1.msra.mxu0 0.0
        %780 = vmatprep.subr.mxu0 0.0
        %781 = vmatpush1.msra.mxu0 0.0
        %782 = vmatprep.subr.mxu0 0.0
        %783 = vmatpush1.msra.mxu0 0.0
        %784 = vmatprep.subr.mxu0 0.0
        %785 = vmatpush1.msra.mxu0 0.0
        %786 = vmatprep.subr.mxu0 0.0
        %787 = vmatpush1.msra.mxu0 0.0
        %788 = vmatprep.subr.mxu0 0.0
        %789 = vmatpush1.msra.mxu0 0.0
        %790 = vmatprep.subr.mxu0 0.0
        %791 = vmatpush1.msra.mxu0 0.0
        %792 = vmatprep.subr.mxu0 0.0
        %793 = vmatpush1.msra.mxu0 0.0
        %794 = vmatprep.subr.mxu0 0.0
        %795 = vmatpush1.msra.mxu0 0.0
        %796 = vmatprep.subr.mxu0 0.0
        %797 = vmatpush1.msra.mxu0 0.0
        %798 = vmatprep.subr.mxu0 0.0
        %799 = vmatpush1.msra.mxu0 0.0
        %800 = vmatprep.subr.mxu0 0.0
        %801 = vmatpush1.msra.mxu0 0.0
        %802 = vmatprep.subr.mxu0 0.0
        %803 = vmatpush1.msra.mxu0 0.0
        %804 = vmatprep.mubr.f32.mxu0 0.0
        %805 = vmatmul.mubr.f32.gmra.mrb[0].mxu0 %v738
        %v806 = vpop.f32.mrb[0].mxu0
        %v807 = vadd.f32 0.0, %v806
        %v808 = vpop.f32.mrb[0].mxu0
        %809 = vdwg.mxu0
        %v810 = vlaneseq
        %v811 = vshrl.u32 %v810, 7
        %v812 = vsub.s32 0, %v811
        %v813 = vrot.slane %v807, %v812
        %v814 = vsub.f32 %v494, %v813
        %v815 = vsub.f32 %v495, %v813
        %v816 = vsub.f32 %v496, %v813
        %v817 = vsub.f32 %v497, %v813
        %v818 = vsub.f32 %v498, %v813
        %v819 = vsub.f32 %v499, %v813
        %v820 = vsub.f32 %v500, %v813
        %v821 = vsub.f32 %v501, %v813
        %v822 = vsub.f32 %v502, %v813
        %v823 = vsub.f32 %v503, %v813
        %v824 = vsub.f32 %v504, %v813
        %v825 = vsub.f32 %v505, %v813
        %v826 = vsub.f32 %v506, %v813
        %v827 = vsub.f32 %v507, %v813
        %v828 = vsub.f32 %v508, %v813
        %v829 = vsub.f32 %v509, %v813
        %v830 = vsub.f32 %v510, %v813
        %v831 = vsub.f32 %v511, %v813
        %v832 = vsub.f32 %v512, %v813
        %v833 = vsub.f32 %v513, %v813
        %v834 = vsub.f32 %v514, %v813
        %v835 = vsub.f32 %v515, %v813
        %v836 = vsub.f32 %v516, %v813
        %v837 = vsub.f32 %v517, %v813
        %v838 = vsub.f32 %v518, %v813
        %v839 = vsub.f32 %v519, %v813
        %v840 = vsub.f32 %v520, %v813
        %v841 = vsub.f32 %v521, %v813
        %v842 = vsub.f32 %v522, %v813
        %v843 = vsub.f32 %v523, %v813
        %v844 = vsub.f32 %v524, %v813
        %v845 = vsub.f32 %v525, %v813
        %v847 = vlaneseq
        %v848 = vshrl.u32 %v847, 7
        %v849 = vsub.s32 0, %v848
        %v850 = vrot.slane %v546, %v849
        %v852 = vmul.f32 %v807, %v850
        %v853 = vlaneseq
        %v854 = vshrl.u32 %v853, 7
        %v855 = vsub.s32 1, %v854
        %v856 = vrot.slane %v852, %v855
        %v857 = vmul.f32 %v814, %v856
        %v858 = vmul.f32 %v815, %v856
        %v859 = vmul.f32 %v816, %v856
        %v860 = vmul.f32 %v817, %v856
        %v861 = vmul.f32 %v818, %v856
        %v862 = vmul.f32 %v819, %v856
        %v863 = vmul.f32 %v820, %v856
        %v864 = vmul.f32 %v821, %v856
        %v865 = vmul.f32 %v822, %v856
        %v866 = vmul.f32 %v823, %v856
        %v867 = vmul.f32 %v824, %v856
        %v868 = vmul.f32 %v825, %v856
        %v869 = vmul.f32 %v826, %v856
        %v870 = vmul.f32 %v827, %v856
        %v871 = vmul.f32 %v828, %v856
        %v872 = vmul.f32 %v829, %v856
        %v873 = vmul.f32 %v830, %v856
        %v874 = vmul.f32 %v831, %v856
        %v875 = vmul.f32 %v832, %v856
        %v876 = vmul.f32 %v833, %v856
        %v877 = vmul.f32 %v834, %v856
        %v878 = vmul.f32 %v835, %v856
        %v879 = vmul.f32 %v836, %v856
        %v880 = vmul.f32 %v837, %v856
        %v881 = vmul.f32 %v838, %v856
        %v882 = vmul.f32 %v839, %v856
        %v883 = vmul.f32 %v840, %v856
        %v884 = vmul.f32 %v841, %v856
        %v885 = vmul.f32 %v842, %v856
        %v886 = vmul.f32 %v843, %v856
        %v887 = vmul.f32 %v844, %v856
        %v888 = vmul.f32 %v845, %v856
        %v890 = vlaneseq
        %v891 = vshrl.u32 %v890, 7
        %v892 = vsub.s32 0, %v891
        %v893 = vrot.slane %v547, %v892
        %v895 = vadd.f32 %v857, %v893
        %v896 = vadd.f32 %v858, %v893
        %v897 = vadd.f32 %v859, %v893
        %v898 = vadd.f32 %v860, %v893
        %v899 = vadd.f32 %v861, %v893
        %v900 = vadd.f32 %v862, %v893
        %v901 = vadd.f32 %v863, %v893
        %v902 = vadd.f32 %v864, %v893
        %v903 = vadd.f32 %v865, %v893
        %v904 = vadd.f32 %v866, %v893
        %v905 = vadd.f32 %v867, %v893
        %v906 = vadd.f32 %v868, %v893
        %v907 = vadd.f32 %v869, %v893
        %v908 = vadd.f32 %v870, %v893
        %v909 = vadd.f32 %v871, %v893
        %v910 = vadd.f32 %v872, %v893
        %v911 = vadd.f32 %v873, %v893
        %v912 = vadd.f32 %v874, %v893
        %v913 = vadd.f32 %v875, %v893
        %v914 = vadd.f32 %v876, %v893
        %v915 = vadd.f32 %v877, %v893
        %v916 = vadd.f32 %v878, %v893
        %v917 = vadd.f32 %v879, %v893
        %v918 = vadd.f32 %v880, %v893
        %v919 = vadd.f32 %v881, %v893
        %v920 = vadd.f32 %v882, %v893
        %v921 = vadd.f32 %v883, %v893
        %v922 = vadd.f32 %v884, %v893
        %v923 = vadd.f32 %v885, %v893
        %v924 = vadd.f32 %v886, %v893
        %v925 = vadd.f32 %v887, %v893
        %v926 = vadd.f32 %v888, %v893
        %v927 = vxor.u32 %v895, 2147483648
        %v928 = vxor.u32 %v896, 2147483648
        %v929 = vxor.u32 %v897, 2147483648
        %v930 = vxor.u32 %v898, 2147483648
        %v931 = vxor.u32 %v899, 2147483648
        %v932 = vxor.u32 %v900, 2147483648
        %v933 = vxor.u32 %v901, 2147483648
        %v934 = vxor.u32 %v902, 2147483648
        %v935 = vxor.u32 %v903, 2147483648
        %v936 = vxor.u32 %v904, 2147483648
        %v937 = vxor.u32 %v905, 2147483648
        %v938 = vxor.u32 %v906, 2147483648
        %v939 = vxor.u32 %v907, 2147483648
        %v940 = vxor.u32 %v908, 2147483648
        %v941 = vxor.u32 %v909, 2147483648
        %v942 = vxor.u32 %v910, 2147483648
        %v943 = vxor.u32 %v911, 2147483648
        %v944 = vxor.u32 %v912, 2147483648
        %v945 = vxor.u32 %v913, 2147483648
        %v946 = vxor.u32 %v914, 2147483648
        %v947 = vxor.u32 %v915, 2147483648
        %v948 = vxor.u32 %v916, 2147483648
        %v949 = vxor.u32 %v917, 2147483648
        %v950 = vxor.u32 %v918, 2147483648
        %v951 = vxor.u32 %v919, 2147483648
        %v952 = vxor.u32 %v920, 2147483648
        %v953 = vxor.u32 %v921, 2147483648
        %v954 = vxor.u32 %v922, 2147483648
        %v955 = vxor.u32 %v923, 2147483648
        %v956 = vxor.u32 %v924, 2147483648
        %v957 = vxor.u32 %v925, 2147483648
        %v958 = vxor.u32 %v926, 2147483648
        %v959 = vmul.f32 %v927, 1.442695
        %v960 = vpow.pop %v959
        %v961 = vmul.f32 %v928, 1.442695
        %v962 = vpow.pop %v961
        %v963 = vmul.f32 %v929, 1.442695
        %v964 = vpow.pop %v963
        %v965 = vmul.f32 %v930, 1.442695
        %v966 = vpow.pop %v965
        %v967 = vmul.f32 %v931, 1.442695
        %v968 = vpow.pop %v967
        %v969 = vmul.f32 %v932, 1.442695
        %v970 = vpow.pop %v969
        %v971 = vmul.f32 %v933, 1.442695
        %v972 = vpow.pop %v971
        %v973 = vmul.f32 %v934, 1.442695
        %v974 = vpow.pop %v973
        %v975 = vmul.f32 %v935, 1.442695
        %v976 = vpow.pop %v975
        %v977 = vmul.f32 %v936, 1.442695
        %v978 = vpow.pop %v977
        %v979 = vmul.f32 %v937, 1.442695
        %v980 = vpow.pop %v979
        %v981 = vmul.f32 %v938, 1.442695
        %v982 = vpow.pop %v981
        %v983 = vmul.f32 %v939, 1.442695
        %v984 = vpow.pop %v983
        %v985 = vmul.f32 %v940, 1.442695
        %v986 = vpow.pop %v985
        %v987 = vmul.f32 %v941, 1.442695
        %v988 = vpow.pop %v987
        %v989 = vmul.f32 %v942, 1.442695
        %v990 = vpow.pop %v989
        %v991 = vmul.f32 %v943, 1.442695
        %v992 = vpow.pop %v991
        %v993 = vmul.f32 %v944, 1.442695
        %v994 = vpow.pop %v993
        %v995 = vmul.f32 %v945, 1.442695
        %v996 = vpow.pop %v995
        %v997 = vmul.f32 %v946, 1.442695
        %v998 = vpow.pop %v997
        %v999 = vmul.f32 %v947, 1.442695
        %v1000 = vpow.pop %v999
        %v1001 = vmul.f32 %v948, 1.442695
        %v1002 = vpow.pop %v1001
        %v1003 = vmul.f32 %v949, 1.442695
        %v1004 = vpow.pop %v1003
        %v1005 = vmul.f32 %v950, 1.442695
        %v1006 = vpow.pop %v1005
        %v1007 = vmul.f32 %v951, 1.442695
        %v1008 = vpow.pop %v1007
        %v1009 = vmul.f32 %v952, 1.442695
        %v1010 = vpow.pop %v1009
        %v1011 = vmul.f32 %v953, 1.442695
        %v1012 = vpow.pop %v1011
        %v1013 = vmul.f32 %v954, 1.442695
        %v1014 = vpow.pop %v1013
        %v1015 = vmul.f32 %v955, 1.442695
        %v1016 = vpow.pop %v1015
        %v1017 = vmul.f32 %v956, 1.442695
        %v1018 = vpow.pop %v1017
        %v1019 = vmul.f32 %v957, 1.442695
        %v1020 = vpow.pop %v1019
        %v1021 = vmul.f32 %v958, 1.442695
        %v1022 = vpow.pop %v1021
        %v1023 = vadd.f32 %v960, 1.0
        %v1024 = vadd.f32 %v962, 1.0
        %v1025 = vadd.f32 %v964, 1.0
        %v1026 = vadd.f32 %v966, 1.0
        %v1027 = vadd.f32 %v968, 1.0
        %v1028 = vadd.f32 %v970, 1.0
        %v1029 = vadd.f32 %v972, 1.0
        %v1030 = vadd.f32 %v974, 1.0
        %v1031 = vadd.f32 %v976, 1.0
        %v1032 = vadd.f32 %v978, 1.0
        %v1033 = vadd.f32 %v980, 1.0
        %v1034 = vadd.f32 %v982, 1.0
        %v1035 = vadd.f32 %v984, 1.0
        %v1036 = vadd.f32 %v986, 1.0
        %v1037 = vadd.f32 %v988, 1.0
        %v1038 = vadd.f32 %v990, 1.0
        %v1039 = vadd.f32 %v992, 1.0
        %v1040 = vadd.f32 %v994, 1.0
        %v1041 = vadd.f32 %v996, 1.0
        %v1042 = vadd.f32 %v998, 1.0
        %v1043 = vadd.f32 %v1000, 1.0
        %v1044 = vadd.f32 %v1002, 1.0
        %v1045 = vadd.f32 %v1004, 1.0
        %v1046 = vadd.f32 %v1006, 1.0
        %v1047 = vadd.f32 %v1008, 1.0
        %v1048 = vadd.f32 %v1010, 1.0
        %v1049 = vadd.f32 %v1012, 1.0
        %v1050 = vadd.f32 %v1014, 1.0
        %v1051 = vadd.f32 %v1016, 1.0
        %v1052 = vadd.f32 %v1018, 1.0
        %v1053 = vadd.f32 %v1020, 1.0
        %v1054 = vadd.f32 %v1022, 1.0
        %v1055 = vrcp.pop %v1023
        %v1056 = vmul.f32 1.0, %v1055
        %v1057 = vrcp.pop %v1024
        %v1058 = vmul.f32 1.0, %v1057
        %v1059 = vrcp.pop %v1025
        %v1060 = vmul.f32 1.0, %v1059
        %v1061 = vrcp.pop %v1026
        %v1062 = vmul.f32 1.0, %v1061
        %v1063 = vrcp.pop %v1027
        %v1064 = vmul.f32 1.0, %v1063
        %v1065 = vrcp.pop %v1028
        %v1066 = vmul.f32 1.0, %v1065
        %v1067 = vrcp.pop %v1029
        %v1068 = vmul.f32 1.0, %v1067
        %v1069 = vrcp.pop %v1030
        %v1070 = vmul.f32 1.0, %v1069
        %v1071 = vrcp.pop %v1031
        %v1072 = vmul.f32 1.0, %v1071
        %v1073 = vrcp.pop %v1032
        %v1074 = vmul.f32 1.0, %v1073
        %v1075 = vrcp.pop %v1033
        %v1076 = vmul.f32 1.0, %v1075
        %v1077 = vrcp.pop %v1034
        %v1078 = vmul.f32 1.0, %v1077
        %v1079 = vrcp.pop %v1035
        %v1080 = vmul.f32 1.0, %v1079
        %v1081 = vrcp.pop %v1036
        %v1082 = vmul.f32 1.0, %v1081
        %v1083 = vrcp.pop %v1037
        %v1084 = vmul.f32 1.0, %v1083
        %v1085 = vrcp.pop %v1038
        %v1086 = vmul.f32 1.0, %v1085
        %v1087 = vrcp.pop %v1039
        %v1088 = vmul.f32 1.0, %v1087
        %v1089 = vrcp.pop %v1040
        %v1090 = vmul.f32 1.0, %v1089
        %v1091 = vrcp.pop %v1041
        %v1092 = vmul.f32 1.0, %v1091
        %v1093 = vrcp.pop %v1042
        %v1094 = vmul.f32 1.0, %v1093
        %v1095 = vrcp.pop %v1043
        %v1096 = vmul.f32 1.0, %v1095
        %v1097 = vrcp.pop %v1044
        %v1098 = vmul.f32 1.0, %v1097
        %v1099 = vrcp.pop %v1045
        %v1100 = vmul.f32 1.0, %v1099
        %v1101 = vrcp.pop %v1046
        %v1102 = vmul.f32 1.0, %v1101
        %v1103 = vrcp.pop %v1047
        %v1104 = vmul.f32 1.0, %v1103
        %v1105 = vrcp.pop %v1048
        %v1106 = vmul.f32 1.0, %v1105
        %v1107 = vrcp.pop %v1049
        %v1108 = vmul.f32 1.0, %v1107
        %v1109 = vrcp.pop %v1050
        %v1110 = vmul.f32 1.0, %v1109
        %v1111 = vrcp.pop %v1051
        %v1112 = vmul.f32 1.0, %v1111
        %v1113 = vrcp.pop %v1052
        %v1114 = vmul.f32 1.0, %v1113
        %v1115 = vrcp.pop %v1053
        %v1116 = vmul.f32 1.0, %v1115
        %v1117 = vrcp.pop %v1054
        %v1118 = vmul.f32 1.0, %v1117
        %v1119 = vmul.f32 %v895, %v1056
        %v1120 = vmul.f32 %v896, %v1058
        %v1121 = vmul.f32 %v897, %v1060
        %v1122 = vmul.f32 %v898, %v1062
        %v1123 = vmul.f32 %v899, %v1064
        %v1124 = vmul.f32 %v900, %v1066
        %v1125 = vmul.f32 %v901, %v1068
        %v1126 = vmul.f32 %v902, %v1070
        %v1127 = vmul.f32 %v903, %v1072
        %v1128 = vmul.f32 %v904, %v1074
        %v1129 = vmul.f32 %v905, %v1076
        %v1130 = vmul.f32 %v906, %v1078
        %v1131 = vmul.f32 %v907, %v1080
        %v1132 = vmul.f32 %v908, %v1082
        %v1133 = vmul.f32 %v909, %v1084
        %v1134 = vmul.f32 %v910, %v1086
        %v1135 = vmul.f32 %v911, %v1088
        %v1136 = vmul.f32 %v912, %v1090
        %v1137 = vmul.f32 %v913, %v1092
        %v1138 = vmul.f32 %v914, %v1094
        %v1139 = vmul.f32 %v915, %v1096
        %v1140 = vmul.f32 %v916, %v1098
        %v1141 = vmul.f32 %v917, %v1100
        %v1142 = vmul.f32 %v918, %v1102
        %v1143 = vmul.f32 %v919, %v1104
        %v1144 = vmul.f32 %v920, %v1106
        %v1145 = vmul.f32 %v921, %v1108
        %v1146 = vmul.f32 %v922, %v1110
        %v1147 = vmul.f32 %v923, %v1112
        %v1148 = vmul.f32 %v924, %v1114
        %v1149 = vmul.f32 %v925, %v1116
        %v1150 = vmul.f32 %v926, %v1118
        %v1151 = vpack.c.bf16 %v1120, %v1119
        %v1152 = vpack.c.bf16 %v1122, %v1121
        %v1153 = vpack.c.bf16 %v1124, %v1123
        %v1154 = vpack.c.bf16 %v1126, %v1125
        %v1155 = vpack.c.bf16 %v1128, %v1127
        %v1156 = vpack.c.bf16 %v1130, %v1129
        %v1157 = vpack.c.bf16 %v1132, %v1131
        %v1158 = vpack.c.bf16 %v1134, %v1133
        %v1159 = vpack.c.bf16 %v1136, %v1135
        %v1160 = vpack.c.bf16 %v1138, %v1137
        %v1161 = vpack.c.bf16 %v1140, %v1139
        %v1162 = vpack.c.bf16 %v1142, %v1141
        %v1163 = vpack.c.bf16 %v1144, %v1143
        %v1164 = vpack.c.bf16 %v1146, %v1145
        %v1165 = vpack.c.bf16 %v1148, %v1147
        %v1166 = vpack.c.bf16 %v1150, %v1149
        %v1167 = vld [vmem:[%s5] sm:$0xf]
        %v1168 = vld [vmem:[%s5 + $0x4] sm:$0xf]
        %v1169 = vld [vmem:[%s5 + $0x8] sm:$0xf]
        %v1170 = vld [vmem:[%s5 + $0xc] sm:$0xf]
        %v1171 = vld [vmem:[%s5 + $0x10] sm:$0xf]
        %v1172 = vld [vmem:[%s5 + $0x14] sm:$0xf]
        %v1173 = vld [vmem:[%s5 + $0x18] sm:$0xf]
        %v1174 = vld [vmem:[%s5 + $0x1c] sm:$0xf]
        %v1175 = vld [vmem:[%s5 + $0x20] sm:$0xf]
        %v1176 = vld [vmem:[%s5 + $0x24] sm:$0xf]
        %v1177 = vld [vmem:[%s5 + $0x28] sm:$0xf]
        %v1178 = vld [vmem:[%s5 + $0x2c] sm:$0xf]
        %v1179 = vld [vmem:[%s5 + $0x30] sm:$0xf]
        %v1180 = vld [vmem:[%s5 + $0x34] sm:$0xf]
        %v1181 = vld [vmem:[%s5 + $0x38] sm:$0xf]
        %v1182 = vld [vmem:[%s5 + $0x3c] sm:$0xf]
        %v1183 = vld [vmem:[%s5 + $0x40] sm:$0xf]
        %v1184 = vld [vmem:[%s5 + $0x44] sm:$0xf]
        %v1185 = vld [vmem:[%s5 + $0x48] sm:$0xf]
        %v1186 = vld [vmem:[%s5 + $0x4c] sm:$0xf]
        %v1187 = vld [vmem:[%s5 + $0x50] sm:$0xf]
        %v1188 = vld [vmem:[%s5 + $0x54] sm:$0xf]
        %v1189 = vld [vmem:[%s5 + $0x58] sm:$0xf]
        %v1190 = vld [vmem:[%s5 + $0x5c] sm:$0xf]
        %v1191 = vld [vmem:[%s5 + $0x60] sm:$0xf]
        %v1192 = vld [vmem:[%s5 + $0x64] sm:$0xf]
        %v1193 = vld [vmem:[%s5 + $0x68] sm:$0xf]
        %v1194 = vld [vmem:[%s5 + $0x6c] sm:$0xf]
        %v1195 = vld [vmem:[%s5 + $0x70] sm:$0xf]
        %v1196 = vld [vmem:[%s5 + $0x74] sm:$0xf]
        %v1197 = vld [vmem:[%s5 + $0x78] sm:$0xf]
        %v1198 = vld [vmem:[%s5 + $0x7c] sm:$0xf]
        %v1199 = vld [vmem:[%s5 + $0x80] sm:$0xf]
        %v1200 = vld [vmem:[%s5 + $0x84] sm:$0xf]
        %v1201 = vld [vmem:[%s5 + $0x88] sm:$0xf]
        %v1202 = vld [vmem:[%s5 + $0x8c] sm:$0xf]
        %v1203 = vld [vmem:[%s5 + $0x90] sm:$0xf]
        %v1204 = vld [vmem:[%s5 + $0x94] sm:$0xf]
        %v1205 = vld [vmem:[%s5 + $0x98] sm:$0xf]
        %v1206 = vld [vmem:[%s5 + $0x9c] sm:$0xf]
        %v1207 = vld [vmem:[%s5 + $0xa0] sm:$0xf]
        %v1208 = vld [vmem:[%s5 + $0xa4] sm:$0xf]
        %v1209 = vld [vmem:[%s5 + $0xa8] sm:$0xf]
        %v1210 = vld [vmem:[%s5 + $0xac] sm:$0xf]
        %v1211 = vld [vmem:[%s5 + $0xb0] sm:$0xf]
        %v1212 = vld [vmem:[%s5 + $0xb4] sm:$0xf]
        %v1213 = vld [vmem:[%s5 + $0xb8] sm:$0xf]
        %v1214 = vld [vmem:[%s5 + $0xbc] sm:$0xf]
        %v1215 = vld [vmem:[%s5 + $0xc0] sm:$0xf]
        %v1216 = vld [vmem:[%s5 + $0xc4] sm:$0xf]
        %v1217 = vld [vmem:[%s5 + $0xc8] sm:$0xf]
        %v1218 = vld [vmem:[%s5 + $0xcc] sm:$0xf]
        %v1219 = vld [vmem:[%s5 + $0xd0] sm:$0xf]
        %v1220 = vld [vmem:[%s5 + $0xd4] sm:$0xf]
        %v1221 = vld [vmem:[%s5 + $0xd8] sm:$0xf]
        %v1222 = vld [vmem:[%s5 + $0xdc] sm:$0xf]
        %v1223 = vld [vmem:[%s5 + $0xe0] sm:$0xf]
        %v1224 = vld [vmem:[%s5 + $0xe4] sm:$0xf]
        %v1225 = vld [vmem:[%s5 + $0xe8] sm:$0xf]
        %v1226 = vld [vmem:[%s5 + $0xec] sm:$0xf]
        %v1227 = vld [vmem:[%s5 + $0xf0] sm:$0xf]
        %v1228 = vld [vmem:[%s5 + $0xf4] sm:$0xf]
        %v1229 = vld [vmem:[%s5 + $0xf8] sm:$0xf]
        %v1230 = vld [vmem:[%s5 + $0xfc] sm:$0xf]
        %v1231 = vld [vmem:[%s5 + $0x100] sm:$0xf]
        %v1232 = vld [vmem:[%s5 + $0x104] sm:$0xf]
        %v1233 = vld [vmem:[%s5 + $0x108] sm:$0xf]
        %v1234 = vld [vmem:[%s5 + $0x10c] sm:$0xf]
        %v1235 = vld [vmem:[%s5 + $0x110] sm:$0xf]
        %v1236 = vld [vmem:[%s5 + $0x114] sm:$0xf]
        %v1237 = vld [vmem:[%s5 + $0x118] sm:$0xf]
        %v1238 = vld [vmem:[%s5 + $0x11c] sm:$0xf]
        %v1239 = vld [vmem:[%s5 + $0x120] sm:$0xf]
        %v1240 = vld [vmem:[%s5 + $0x124] sm:$0xf]
        %v1241 = vld [vmem:[%s5 + $0x128] sm:$0xf]
        %v1242 = vld [vmem:[%s5 + $0x12c] sm:$0xf]
        %v1243 = vld [vmem:[%s5 + $0x130] sm:$0xf]
        %v1244 = vld [vmem:[%s5 + $0x134] sm:$0xf]
        %v1245 = vld [vmem:[%s5 + $0x138] sm:$0xf]
        %v1246 = vld [vmem:[%s5 + $0x13c] sm:$0xf]
        %v1247 = vld [vmem:[%s5 + $0x140] sm:$0xf]
        %v1248 = vld [vmem:[%s5 + $0x144] sm:$0xf]
        %v1249 = vld [vmem:[%s5 + $0x148] sm:$0xf]
        %v1250 = vld [vmem:[%s5 + $0x14c] sm:$0xf]
        %v1251 = vld [vmem:[%s5 + $0x150] sm:$0xf]
        %v1252 = vld [vmem:[%s5 + $0x154] sm:$0xf]
        %v1253 = vld [vmem:[%s5 + $0x158] sm:$0xf]
        %v1254 = vld [vmem:[%s5 + $0x15c] sm:$0xf]
        %v1255 = vld [vmem:[%s5 + $0x160] sm:$0xf]
        %v1256 = vld [vmem:[%s5 + $0x164] sm:$0xf]
        %v1257 = vld [vmem:[%s5 + $0x168] sm:$0xf]
        %v1258 = vld [vmem:[%s5 + $0x16c] sm:$0xf]
        %v1259 = vld [vmem:[%s5 + $0x170] sm:$0xf]
        %v1260 = vld [vmem:[%s5 + $0x174] sm:$0xf]
        %v1261 = vld [vmem:[%s5 + $0x178] sm:$0xf]
        %v1262 = vld [vmem:[%s5 + $0x17c] sm:$0xf]
        %v1263 = vld [vmem:[%s5 + $0x180] sm:$0xf]
        %v1264 = vld [vmem:[%s5 + $0x184] sm:$0xf]
        %v1265 = vld [vmem:[%s5 + $0x188] sm:$0xf]
        %v1266 = vld [vmem:[%s5 + $0x18c] sm:$0xf]
        %v1267 = vld [vmem:[%s5 + $0x190] sm:$0xf]
        %v1268 = vld [vmem:[%s5 + $0x194] sm:$0xf]
        %v1269 = vld [vmem:[%s5 + $0x198] sm:$0xf]
        %v1270 = vld [vmem:[%s5 + $0x19c] sm:$0xf]
        %v1271 = vld [vmem:[%s5 + $0x1a0] sm:$0xf]
        %v1272 = vld [vmem:[%s5 + $0x1a4] sm:$0xf]
        %v1273 = vld [vmem:[%s5 + $0x1a8] sm:$0xf]
        %v1274 = vld [vmem:[%s5 + $0x1ac] sm:$0xf]
        %v1275 = vld [vmem:[%s5 + $0x1b0] sm:$0xf]
        %v1276 = vld [vmem:[%s5 + $0x1b4] sm:$0xf]
        %v1277 = vld [vmem:[%s5 + $0x1b8] sm:$0xf]
        %v1278 = vld [vmem:[%s5 + $0x1bc] sm:$0xf]
        %v1279 = vld [vmem:[%s5 + $0x1c0] sm:$0xf]
        %v1280 = vld [vmem:[%s5 + $0x1c4] sm:$0xf]
        %v1281 = vld [vmem:[%s5 + $0x1c8] sm:$0xf]
        %v1282 = vld [vmem:[%s5 + $0x1cc] sm:$0xf]
        %v1283 = vld [vmem:[%s5 + $0x1d0] sm:$0xf]
        %v1284 = vld [vmem:[%s5 + $0x1d4] sm:$0xf]
        %v1285 = vld [vmem:[%s5 + $0x1d8] sm:$0xf]
        %v1286 = vld [vmem:[%s5 + $0x1dc] sm:$0xf]
        %v1287 = vld [vmem:[%s5 + $0x1e0] sm:$0xf]
        %v1288 = vld [vmem:[%s5 + $0x1e4] sm:$0xf]
        %v1289 = vld [vmem:[%s5 + $0x1e8] sm:$0xf]
        %v1290 = vld [vmem:[%s5 + $0x1ec] sm:$0xf]
        %v1291 = vld [vmem:[%s5 + $0x1f0] sm:$0xf]
        %v1292 = vld [vmem:[%s5 + $0x1f4] sm:$0xf]
        %v1293 = vld [vmem:[%s5 + $0x1f8] sm:$0xf]
        %v1294 = vld [vmem:[%s5 + $0x1fc] sm:$0xf]
        %v1295 = vld [vmem:[%s5 + $0x200] sm:$0xf]
        %v1296 = vld [vmem:[%s5 + $0x204] sm:$0xf]
        %v1297 = vld [vmem:[%s5 + $0x208] sm:$0xf]
        %v1298 = vld [vmem:[%s5 + $0x20c] sm:$0xf]
        %v1299 = vld [vmem:[%s5 + $0x210] sm:$0xf]
        %v1300 = vld [vmem:[%s5 + $0x214] sm:$0xf]
        %v1301 = vld [vmem:[%s5 + $0x218] sm:$0xf]
        %v1302 = vld [vmem:[%s5 + $0x21c] sm:$0xf]
        %v1303 = vld [vmem:[%s5 + $0x220] sm:$0xf]
        %v1304 = vld [vmem:[%s5 + $0x224] sm:$0xf]
        %v1305 = vld [vmem:[%s5 + $0x228] sm:$0xf]
        %v1306 = vld [vmem:[%s5 + $0x22c] sm:$0xf]
        %v1307 = vld [vmem:[%s5 + $0x230] sm:$0xf]
        %v1308 = vld [vmem:[%s5 + $0x234] sm:$0xf]
        %v1309 = vld [vmem:[%s5 + $0x238] sm:$0xf]
        %v1310 = vld [vmem:[%s5 + $0x23c] sm:$0xf]
        %v1311 = vld [vmem:[%s6] sm:$0x1]
        %v1313 = vshrl.u32 0, 16
        %v1315 = vrot.slane %v1313, 7
        %v1316 = vshll.u32 0, 16
        %v1318 = vor.u32 %v1315, %v1316
        %v1320 = vshrl.u32 %v1151, 16
        %v1322 = vrot.slane %v1320, 7
        %v1323 = vshll.u32 %v1151, 16
        %v1325 = vor.u32 %v1322, %v1323
        %v1327 = vshrl.u32 %v1152, 16
        %v1329 = vrot.slane %v1327, 7
        %v1330 = vshll.u32 %v1152, 16
        %v1332 = vor.u32 %v1329, %v1330
        %v1334 = vshrl.u32 %v1153, 16
        %v1336 = vrot.slane %v1334, 7
        %v1337 = vshll.u32 %v1153, 16
        %v1339 = vor.u32 %v1336, %v1337
        %v1341 = vshrl.u32 %v1154, 16
        %v1343 = vrot.slane %v1341, 7
        %v1344 = vshll.u32 %v1154, 16
        %v1346 = vor.u32 %v1343, %v1344
        %v1348 = vshrl.u32 %v1155, 16
        %v1350 = vrot.slane %v1348, 7
        %v1351 = vshll.u32 %v1155, 16
        %v1353 = vor.u32 %v1350, %v1351
        %v1355 = vshrl.u32 %v1156, 16
        %v1357 = vrot.slane %v1355, 7
        %v1358 = vshll.u32 %v1156, 16
        %v1360 = vor.u32 %v1357, %v1358
        %v1362 = vshrl.u32 %v1157, 16
        %v1364 = vrot.slane %v1362, 7
        %v1365 = vshll.u32 %v1157, 16
        %v1367 = vor.u32 %v1364, %v1365
        %v1369 = vshrl.u32 %v1158, 16
        %v1371 = vrot.slane %v1369, 7
        %v1372 = vshll.u32 %v1158, 16
        %v1374 = vor.u32 %v1371, %v1372
        %v1376 = vshrl.u32 %v1159, 16
        %v1378 = vrot.slane %v1376, 7
        %v1379 = vshll.u32 %v1159, 16
        %v1381 = vor.u32 %v1378, %v1379
        %v1383 = vshrl.u32 %v1160, 16
        %v1385 = vrot.slane %v1383, 7
        %v1386 = vshll.u32 %v1160, 16
        %v1388 = vor.u32 %v1385, %v1386
        %v1390 = vshrl.u32 %v1161, 16
        %v1392 = vrot.slane %v1390, 7
        %v1393 = vshll.u32 %v1161, 16
        %v1395 = vor.u32 %v1392, %v1393
        %v1397 = vshrl.u32 %v1162, 16
        %v1399 = vrot.slane %v1397, 7
        %v1400 = vshll.u32 %v1162, 16
        %v1402 = vor.u32 %v1399, %v1400
        %v1404 = vshrl.u32 %v1163, 16
        %v1406 = vrot.slane %v1404, 7
        %v1407 = vshll.u32 %v1163, 16
        %v1409 = vor.u32 %v1406, %v1407
        %v1411 = vshrl.u32 %v1164, 16
        %v1413 = vrot.slane %v1411, 7
        %v1414 = vshll.u32 %v1164, 16
        %v1416 = vor.u32 %v1413, %v1414
        %v1418 = vshrl.u32 %v1165, 16
        %v1420 = vrot.slane %v1418, 7
        %v1421 = vshll.u32 %v1165, 16
        %v1423 = vor.u32 %v1420, %v1421
        %v1425 = vshrl.u32 %v1166, 16
        %v1427 = vrot.slane %v1425, 7
        %v1428 = vshll.u32 %v1166, 16
        %v1430 = vor.u32 %v1427, %v1428
        %vm1448 = vcmask 1040384
        %vm1449 = vsmask.f32 256
        %vm1450 = vmand %vm1448, %vm1449
        %v1451 = vsel %vm1450, 0, %v1318
        %v1452 = vsel %vm1450, 0, %v1325
        %v1453 = vsel %vm1450, 0, %v1332
        %v1454 = vsel %vm1450, 0, %v1339
        %v1455 = vsel %vm1450, 0, %v1346
        %v1456 = vsel %vm1450, 0, %v1353
        %v1457 = vsel %vm1450, 0, %v1360
        %v1458 = vsel %vm1450, 0, %v1367
        %v1459 = vsel %vm1450, 0, %v1374
        %v1460 = vsel %vm1450, 0, %v1381
        %v1461 = vsel %vm1450, 0, %v1388
        %v1462 = vsel %vm1450, 0, %v1395
        %v1463 = vsel %vm1450, 0, %v1402
        %v1464 = vsel %vm1450, 0, %v1409
        %v1465 = vsel %vm1450, 0, %v1416
        %v1466 = vsel %vm1450, 0, %v1423
        %v1467 = vsel %vm1450, 0, %v1430
        %v1468 = vrot.slane %v1316, 1
        %v1469 = vor.u32 %v1313, %v1468
        %v1470 = vrot.slane %v1323, 1
        %v1471 = vor.u32 %v1320, %v1470
        %v1472 = vrot.slane %v1330, 1
        %v1473 = vor.u32 %v1327, %v1472
        %v1474 = vrot.slane %v1337, 1
        %v1475 = vor.u32 %v1334, %v1474
        %v1476 = vrot.slane %v1344, 1
        %v1477 = vor.u32 %v1341, %v1476
        %v1478 = vrot.slane %v1351, 1
        %v1479 = vor.u32 %v1348, %v1478
        %v1480 = vrot.slane %v1358, 1
        %v1481 = vor.u32 %v1355, %v1480
        %v1482 = vrot.slane %v1365, 1
        %v1483 = vor.u32 %v1362, %v1482
        %v1484 = vrot.slane %v1372, 1
        %v1485 = vor.u32 %v1369, %v1484
        %v1486 = vrot.slane %v1379, 1
        %v1487 = vor.u32 %v1376, %v1486
        %v1488 = vrot.slane %v1386, 1
        %v1489 = vor.u32 %v1383, %v1488
        %v1490 = vrot.slane %v1393, 1
        %v1491 = vor.u32 %v1390, %v1490
        %v1492 = vrot.slane %v1400, 1
        %v1493 = vor.u32 %v1397, %v1492
        %v1494 = vrot.slane %v1407, 1
        %v1495 = vor.u32 %v1404, %v1494
        %v1496 = vrot.slane %v1414, 1
        %v1497 = vor.u32 %v1411, %v1496
        %v1498 = vrot.slane %v1421, 1
        %v1499 = vor.u32 %v1418, %v1498
        %v1500 = vrot.slane %v1428, 1
        %v1501 = vor.u32 %v1425, %v1500
        %vm1519 = vcmask 1047552
        %vm1520 = vsmask.f32 7424
        %vm1521 = vmand %vm1519, %vm1520
        %v1522 = vsel %vm1521, %v1469, 0
        %v1523 = vsel %vm1521, %v1471, 0
        %v1524 = vsel %vm1521, %v1473, 0
        %v1525 = vsel %vm1521, %v1475, 0
        %v1526 = vsel %vm1521, %v1477, 0
        %v1527 = vsel %vm1521, %v1479, 0
        %v1528 = vsel %vm1521, %v1481, 0
        %v1529 = vsel %vm1521, %v1483, 0
        %v1530 = vsel %vm1521, %v1485, 0
        %v1531 = vsel %vm1521, %v1487, 0
        %v1532 = vsel %vm1521, %v1489, 0
        %v1533 = vsel %vm1521, %v1491, 0
        %v1534 = vsel %vm1521, %v1493, 0
        %v1535 = vsel %vm1521, %v1495, 0
        %v1536 = vsel %vm1521, %v1497, 0
        %v1537 = vsel %vm1521, %v1499, 0
        %v1538 = vsel %vm1521, %v1501, 0
        %v1540 = vlaneseq
        %v1541 = vshrl.u32 %v1540, 7
        %v1542 = vsub.s32 0, %v1541
        %v1543 = vrot.slane %v1311, %v1542
        %v1689 = vunpack.c.l.b16 %v1167
        %v1690 = vunpack.c.l.b16 %v1168
        %v1691 = vunpack.c.l.b16 %v1169
        %v1692 = vunpack.c.l.b16 %v1170
        %v1693 = vunpack.c.l.b16 %v1171
        %v1694 = vunpack.c.l.b16 %v1172
        %v1695 = vunpack.c.l.b16 %v1173
        %v1696 = vunpack.c.l.b16 %v1174
        %v1697 = vunpack.c.l.b16 %v1175
        %v1698 = vunpack.c.l.b16 %v1176
        %v1699 = vunpack.c.l.b16 %v1177
        %v1700 = vunpack.c.l.b16 %v1178
        %v1701 = vunpack.c.l.b16 %v1179
        %v1702 = vunpack.c.l.b16 %v1180
        %v1703 = vunpack.c.l.b16 %v1181
        %v1704 = vunpack.c.l.b16 %v1182
        %v1705 = vunpack.c.l.b16 %v1183
        %v1706 = vunpack.c.l.b16 %v1184
        %v1707 = vunpack.c.l.b16 %v1185
        %v1708 = vunpack.c.l.b16 %v1186
        %v1709 = vunpack.c.l.b16 %v1187
        %v1710 = vunpack.c.l.b16 %v1188
        %v1711 = vunpack.c.l.b16 %v1189
        %v1712 = vunpack.c.l.b16 %v1190
        %v1713 = vunpack.c.l.b16 %v1191
        %v1714 = vunpack.c.l.b16 %v1192
        %v1715 = vunpack.c.l.b16 %v1193
        %v1716 = vunpack.c.l.b16 %v1194
        %v1717 = vunpack.c.l.b16 %v1195
        %v1718 = vunpack.c.l.b16 %v1196
        %v1719 = vunpack.c.l.b16 %v1197
        %v1720 = vunpack.c.l.b16 %v1198
        %v1721 = vunpack.c.l.b16 %v1199
        %v1722 = vunpack.c.l.b16 %v1200
        %v1723 = vunpack.c.l.b16 %v1201
        %v1724 = vunpack.c.l.b16 %v1202
        %v1725 = vunpack.c.l.b16 %v1203
        %v1726 = vunpack.c.l.b16 %v1204
        %v1727 = vunpack.c.l.b16 %v1205
        %v1728 = vunpack.c.l.b16 %v1206
        %v1729 = vunpack.c.l.b16 %v1207
        %v1730 = vunpack.c.l.b16 %v1208
        %v1731 = vunpack.c.l.b16 %v1209
        %v1732 = vunpack.c.l.b16 %v1210
        %v1733 = vunpack.c.l.b16 %v1211
        %v1734 = vunpack.c.l.b16 %v1212
        %v1735 = vunpack.c.l.b16 %v1213
        %v1736 = vunpack.c.l.b16 %v1214
        %v1737 = vunpack.c.l.b16 %v1215
        %v1738 = vunpack.c.l.b16 %v1216
        %v1739 = vunpack.c.l.b16 %v1217
        %v1740 = vunpack.c.l.b16 %v1218
        %v1741 = vunpack.c.l.b16 %v1219
        %v1742 = vunpack.c.l.b16 %v1220
        %v1743 = vunpack.c.l.b16 %v1221
        %v1744 = vunpack.c.l.b16 %v1222
        %v1745 = vunpack.c.l.b16 %v1223
        %v1746 = vunpack.c.l.b16 %v1224
        %v1747 = vunpack.c.l.b16 %v1225
        %v1748 = vunpack.c.l.b16 %v1226
        %v1749 = vunpack.c.l.b16 %v1227
        %v1750 = vunpack.c.l.b16 %v1228
        %v1751 = vunpack.c.l.b16 %v1229
        %v1752 = vunpack.c.l.b16 %v1230
        %v1753 = vunpack.c.l.b16 %v1231
        %v1754 = vunpack.c.l.b16 %v1232
        %v1755 = vunpack.c.l.b16 %v1233
        %v1756 = vunpack.c.l.b16 %v1234
        %v1757 = vunpack.c.l.b16 %v1235
        %v1758 = vunpack.c.l.b16 %v1236
        %v1759 = vunpack.c.l.b16 %v1237
        %v1760 = vunpack.c.l.b16 %v1238
        %v1761 = vunpack.c.l.b16 %v1239
        %v1762 = vunpack.c.l.b16 %v1240
        %v1763 = vunpack.c.l.b16 %v1241
        %v1764 = vunpack.c.l.b16 %v1242
        %v1765 = vunpack.c.l.b16 %v1243
        %v1766 = vunpack.c.l.b16 %v1244
        %v1767 = vunpack.c.l.b16 %v1245
        %v1768 = vunpack.c.l.b16 %v1246
        %v1769 = vunpack.c.l.b16 %v1247
        %v1770 = vunpack.c.l.b16 %v1248
        %v1771 = vunpack.c.l.b16 %v1249
        %v1772 = vunpack.c.l.b16 %v1250
        %v1773 = vunpack.c.l.b16 %v1251
        %v1774 = vunpack.c.l.b16 %v1252
        %v1775 = vunpack.c.l.b16 %v1253
        %v1776 = vunpack.c.l.b16 %v1254
        %v1777 = vunpack.c.l.b16 %v1255
        %v1778 = vunpack.c.l.b16 %v1256
        %v1779 = vunpack.c.l.b16 %v1257
        %v1780 = vunpack.c.l.b16 %v1258
        %v1781 = vunpack.c.l.b16 %v1259
        %v1782 = vunpack.c.l.b16 %v1260
        %v1783 = vunpack.c.l.b16 %v1261
        %v1784 = vunpack.c.l.b16 %v1262
        %v1785 = vunpack.c.l.b16 %v1263
        %v1786 = vunpack.c.l.b16 %v1264
        %v1787 = vunpack.c.l.b16 %v1265
        %v1788 = vunpack.c.l.b16 %v1266
        %v1789 = vunpack.c.l.b16 %v1267
        %v1790 = vunpack.c.l.b16 %v1268
        %v1791 = vunpack.c.l.b16 %v1269
        %v1792 = vunpack.c.l.b16 %v1270
        %v1793 = vunpack.c.l.b16 %v1271
        %v1794 = vunpack.c.l.b16 %v1272
        %v1795 = vunpack.c.l.b16 %v1273
        %v1796 = vunpack.c.l.b16 %v1274
        %v1797 = vunpack.c.l.b16 %v1275
        %v1798 = vunpack.c.l.b16 %v1276
        %v1799 = vunpack.c.l.b16 %v1277
        %v1800 = vunpack.c.l.b16 %v1278
        %v1801 = vunpack.c.l.b16 %v1279
        %v1802 = vunpack.c.l.b16 %v1280
        %v1803 = vunpack.c.l.b16 %v1281
        %v1804 = vunpack.c.l.b16 %v1282
        %v1805 = vunpack.c.l.b16 %v1283
        %v1806 = vunpack.c.l.b16 %v1284
        %v1807 = vunpack.c.l.b16 %v1285
        %v1808 = vunpack.c.l.b16 %v1286
        %v1809 = vunpack.c.l.b16 %v1287
        %v1810 = vunpack.c.l.b16 %v1288
        %v1811 = vunpack.c.l.b16 %v1289
        %v1812 = vunpack.c.l.b16 %v1290
        %v1813 = vunpack.c.l.b16 %v1291
        %v1814 = vunpack.c.l.b16 %v1292
        %v1815 = vunpack.c.l.b16 %v1293
        %v1816 = vunpack.c.l.b16 %v1294
        %v1817 = vunpack.c.l.b16 %v1295
        %v1818 = vunpack.c.l.b16 %v1296
        %v1819 = vunpack.c.l.b16 %v1297
        %v1820 = vunpack.c.l.b16 %v1298
        %v1821 = vunpack.c.l.b16 %v1299
        %v1822 = vunpack.c.l.b16 %v1300
        %v1823 = vunpack.c.l.b16 %v1301
        %v1824 = vunpack.c.l.b16 %v1302
        %v1825 = vunpack.c.l.b16 %v1303
        %v1826 = vunpack.c.l.b16 %v1304
        %v1827 = vunpack.c.l.b16 %v1305
        %v1828 = vunpack.c.l.b16 %v1306
        %v1829 = vunpack.c.l.b16 %v1307
        %v1830 = vunpack.c.l.b16 %v1308
        %v1831 = vunpack.c.l.b16 %v1309
        %v1832 = vunpack.c.l.b16 %v1310
        %v1833 = vpack.c.b16 %v1690, %v1689
        %v1834 = vpack.c.b16 %v1692, %v1691
        %v1835 = vpack.c.b16 %v1694, %v1693
        %v1836 = vpack.c.b16 %v1696, %v1695
        %v1837 = vpack.c.b16 %v1698, %v1697
        %v1838 = vpack.c.b16 %v1700, %v1699
        %v1839 = vpack.c.b16 %v1702, %v1701
        %v1840 = vpack.c.b16 %v1704, %v1703
        %v1841 = vpack.c.b16 %v1706, %v1705
        %v1842 = vpack.c.b16 %v1708, %v1707
        %v1843 = vpack.c.b16 %v1710, %v1709
        %v1844 = vpack.c.b16 %v1712, %v1711
        %v1845 = vpack.c.b16 %v1714, %v1713
        %v1846 = vpack.c.b16 %v1716, %v1715
        %v1847 = vpack.c.b16 %v1718, %v1717
        %v1848 = vpack.c.b16 %v1720, %v1719
        %v1849 = vpack.c.b16 %v1722, %v1721
        %v1850 = vpack.c.b16 %v1724, %v1723
        %v1851 = vpack.c.b16 %v1726, %v1725
        %v1852 = vpack.c.b16 %v1728, %v1727
        %v1853 = vpack.c.b16 %v1730, %v1729
        %v1854 = vpack.c.b16 %v1732, %v1731
        %v1855 = vpack.c.b16 %v1734, %v1733
        %v1856 = vpack.c.b16 %v1736, %v1735
        %v1857 = vpack.c.b16 %v1738, %v1737
        %v1858 = vpack.c.b16 %v1740, %v1739
        %v1859 = vpack.c.b16 %v1742, %v1741
        %v1860 = vpack.c.b16 %v1744, %v1743
        %v1861 = vpack.c.b16 %v1746, %v1745
        %v1862 = vpack.c.b16 %v1748, %v1747
        %v1863 = vpack.c.b16 %v1750, %v1749
        %v1864 = vpack.c.b16 %v1752, %v1751
        %v1865 = vpack.c.b16 %v1754, %v1753
        %v1866 = vpack.c.b16 %v1756, %v1755
        %v1867 = vpack.c.b16 %v1758, %v1757
        %v1868 = vpack.c.b16 %v1760, %v1759
        %v1869 = vpack.c.b16 %v1762, %v1761
        %v1870 = vpack.c.b16 %v1764, %v1763
        %v1871 = vpack.c.b16 %v1766, %v1765
        %v1872 = vpack.c.b16 %v1768, %v1767
        %v1873 = vpack.c.b16 %v1770, %v1769
        %v1874 = vpack.c.b16 %v1772, %v1771
        %v1875 = vpack.c.b16 %v1774, %v1773
        %v1876 = vpack.c.b16 %v1776, %v1775
        %v1877 = vpack.c.b16 %v1778, %v1777
        %v1878 = vpack.c.b16 %v1780, %v1779
        %v1879 = vpack.c.b16 %v1782, %v1781
        %v1880 = vpack.c.b16 %v1784, %v1783
        %v1881 = vpack.c.b16 %v1786, %v1785
        %v1882 = vpack.c.b16 %v1788, %v1787
        %v1883 = vpack.c.b16 %v1790, %v1789
        %v1884 = vpack.c.b16 %v1792, %v1791
        %v1885 = vpack.c.b16 %v1794, %v1793
        %v1886 = vpack.c.b16 %v1796, %v1795
        %v1887 = vpack.c.b16 %v1798, %v1797
        %v1888 = vpack.c.b16 %v1800, %v1799
        %v1889 = vpack.c.b16 %v1802, %v1801
        %v1890 = vpack.c.b16 %v1804, %v1803
        %v1891 = vpack.c.b16 %v1806, %v1805
        %v1892 = vpack.c.b16 %v1808, %v1807
        %v1893 = vpack.c.b16 %v1810, %v1809
        %v1894 = vpack.c.b16 %v1812, %v1811
        %v1895 = vpack.c.b16 %v1814, %v1813
        %v1896 = vpack.c.b16 %v1816, %v1815
        %v1897 = vpack.c.b16 %v1818, %v1817
        %v1898 = vpack.c.b16 %v1820, %v1819
        %v1899 = vpack.c.b16 %v1822, %v1821
        %v1900 = vpack.c.b16 %v1824, %v1823
        %v1901 = vpack.c.b16 %v1826, %v1825
        %v1902 = vpack.c.b16 %v1828, %v1827
        %v1903 = vpack.c.b16 %v1830, %v1829
        %v1904 = vpack.c.b16 %v1832, %v1831
        %1977 = vmatprep.subr.bf16.mxu0 0
        %1978 = vmatpush1.bf16.msra.mxu0 %v1833
        %1979 = vmatprep.subr.bf16.mxu0 0
        %1980 = vmatpush1.bf16.msra.mxu0 %v1834
        %1981 = vmatprep.subr.bf16.mxu0 0
        %1982 = vmatpush1.bf16.msra.mxu0 %v1835
        %1983 = vmatprep.subr.bf16.mxu0 0
        %1984 = vmatpush1.bf16.msra.mxu0 %v1836
        %1985 = vmatprep.subr.bf16.mxu0 0
        %1986 = vmatpush1.bf16.msra.mxu0 %v1837
        %1987 = vmatprep.subr.bf16.mxu0 0
        %1988 = vmatpush1.bf16.msra.mxu0 %v1838
        %1989 = vmatprep.subr.bf16.mxu0 0
        %1990 = vmatpush1.bf16.msra.mxu0 %v1839
        %1991 = vmatprep.subr.bf16.mxu0 0
        %1992 = vmatpush1.bf16.msra.mxu0 %v1840
        %1993 = vmatprep.subr.bf16.mxu0 0
        %1994 = vmatpush1.bf16.msra.mxu0 %v1841
        %1995 = vmatprep.subr.bf16.mxu0 0
        %1996 = vmatpush1.bf16.msra.mxu0 %v1842
        %1997 = vmatprep.subr.bf16.mxu0 0
        %1998 = vmatpush1.bf16.msra.mxu0 %v1843
        %1999 = vmatprep.subr.bf16.mxu0 0
        %2000 = vmatpush1.bf16.msra.mxu0 %v1844
        %2001 = vmatprep.subr.bf16.mxu0 0
        %2002 = vmatpush1.bf16.msra.mxu0 %v1845
        %2003 = vmatprep.subr.bf16.mxu0 0
        %2004 = vmatpush1.bf16.msra.mxu0 %v1846
        %2005 = vmatprep.subr.bf16.mxu0 0
        %2006 = vmatpush1.bf16.msra.mxu0 %v1847
        %2007 = vmatprep.subr.bf16.mxu0 0
        %2008 = vmatpush1.bf16.msra.mxu0 %v1848
        %2009 = vmatprep.mubr.bf16.mxu0 0
        %2010 = vmatmul.mubr.bf16.gmra.mrb[0].mxu0 %v1451
        %v2011 = vpop.f32.mrb[0].mxu0
        %v2012 = vadd.f32 %v1543, %v2011
        %v2013 = vpop.f32.mrb[0].mxu0
        %v2014 = vpop.f32.mrb[0].mxu0
        %v2015 = vadd.f32 %v1543, %v2014
        %v2016 = vpop.f32.mrb[0].mxu0
        %2017 = vmatprep.mubr.bf16.mxu0 %v1151
        %2018 = vmatmul.mubr.bf16.gmra.mrb[0].mxu0 %v1452
        %v2019 = vpop.f32.mrb[0].mxu0
        %v2020 = vadd.f32 %v1543, %v2019
        %v2021 = vpop.f32.mrb[0].mxu0
        %v2022 = vpop.f32.mrb[0].mxu0
        %v2023 = vadd.f32 %v1543, %v2022
        %v2024 = vpop.f32.mrb[0].mxu0
        %2025 = vmatprep.mubr.bf16.mxu0 %v1152
        %2026 = vmatmul.mubr.bf16.gmra.mrb[0].mxu0 %v1453
        %v2027 = vpop.f32.mrb[0].mxu0
        %v2028 = vadd.f32 %v1543, %v2027
        %v2029 = vpop.f32.mrb[0].mxu0
        %v2030 = vpop.f32.mrb[0].mxu0
        %v2031 = vadd.f32 %v1543, %v2030
        %v2032 = vpop.f32.mrb[0].mxu0
        %2033 = vmatprep.mubr.bf16.mxu0 %v1153
        %2034 = vmatmul.mubr.bf16.gmra.mrb[0].mxu0 %v1454
        %v2035 = vpop.f32.mrb[0].mxu0
        %v2036 = vadd.f32 %v1543, %v2035
        %v2037 = vpop.f32.mrb[0].mxu0
        %v2038 = vpop.f32.mrb[0].mxu0
        %v2039 = vadd.f32 %v1543, %v2038
        %v2040 = vpop.f32.mrb[0].mxu0
        %2041 = vmatprep.mubr.bf16.mxu0 %v1154
        %2042 = vmatmul.mubr.bf16.gmra.mrb[0].mxu0 %v1455
        %v2043 = vpop.f32.mrb[0].mxu0
        %v2044 = vadd.f32 %v1543, %v2043
        %v2045 = vpop.f32.mrb[0].mxu0
        %v2046 = vpop.f32.mrb[0].mxu0
        %v2047 = vadd.f32 %v1543, %v2046
        %v2048 = vpop.f32.mrb[0].mxu0
        %2049 = vmatprep.mubr.bf16.mxu0 %v1155
        %2050 = vmatmul.mubr.bf16.gmra.mrb[0].mxu0 %v1456
        %v2051 = vpop.f32.mrb[0].mxu0
        %v2052 = vadd.f32 %v1543, %v2051
        %v2053 = vpop.f32.mrb[0].mxu0
        %v2054 = vpop.f32.mrb[0].mxu0
        %v2055 = vadd.f32 %v1543, %v2054
        %v2056 = vpop.f32.mrb[0].mxu0
        %2057 = vmatprep.mubr.bf16.mxu0 %v1156
        %2058 = vmatmul.mubr.bf16.gmra.mrb[0].mxu0 %v1457
        %v2059 = vpop.f32.mrb[0].mxu0
        %v2060 = vadd.f32 %v1543, %v2059
        %v2061 = vpop.f32.mrb[0].mxu0
        %v2062 = vpop.f32.mrb[0].mxu0
        %v2063 = vadd.f32 %v1543, %v2062
        %v2064 = vpop.f32.mrb[0].mxu0
        %2065 = vmatprep.mubr.bf16.mxu0 %v1157
        %2066 = vmatmul.mubr.bf16.gmra.mrb[0].mxu0 %v1458
        %v2067 = vpop.f32.mrb[0].mxu0
        %v2068 = vadd.f32 %v1543, %v2067
        %v2069 = vpop.f32.mrb[0].mxu0
        %v2070 = vpop.f32.mrb[0].mxu0
        %v2071 = vadd.f32 %v1543, %v2070
        %v2072 = vpop.f32.mrb[0].mxu0
        %2073 = vmatprep.mubr.bf16.mxu0 %v1158
        %2074 = vmatmul.mubr.bf16.gmra.mrb[0].mxu0 %v1459
        %v2075 = vpop.f32.mrb[0].mxu0
        %v2076 = vadd.f32 %v1543, %v2075
        %v2077 = vpop.f32.mrb[0].mxu0
        %v2078 = vpop.f32.mrb[0].mxu0
        %v2079 = vadd.f32 %v1543, %v2078
        %v2080 = vpop.f32.mrb[0].mxu0
        %2081 = vmatprep.mubr.bf16.mxu0 %v1159
        %2082 = vmatmul.mubr.bf16.gmra.mrb[0].mxu0 %v1460
        %v2083 = vpop.f32.mrb[0].mxu0
        %v2084 = vadd.f32 %v1543, %v2083
        %v2085 = vpop.f32.mrb[0].mxu0
        %v2086 = vpop.f32.mrb[0].mxu0
        %v2087 = vadd.f32 %v1543, %v2086
        %v2088 = vpop.f32.mrb[0].mxu0
        %2089 = vmatprep.mubr.bf16.mxu0 %v1160
        %2090 = vmatmul.mubr.bf16.gmra.mrb[0].mxu0 %v1461
        %v2091 = vpop.f32.mrb[0].mxu0
        %v2092 = vadd.f32 %v1543, %v2091
        %v2093 = vpop.f32.mrb[0].mxu0
        %v2094 = vpop.f32.mrb[0].mxu0
        %v2095 = vadd.f32 %v1543, %v2094
        %v2096 = vpop.f32.mrb[0].mxu0
        %2097 = vmatprep.mubr.bf16.mxu0 %v1161
        %2098 = vmatmul.mubr.bf16.gmra.mrb[0].mxu0 %v1462
        %v2099 = vpop.f32.mrb[0].mxu0
        %v2100 = vadd.f32 %v1543, %v2099
        %v2101 = vpop.f32.mrb[0].mxu0
        %v2102 = vpop.f32.mrb[0].mxu0
        %v2103 = vadd.f32 %v1543, %v2102
        %v2104 = vpop.f32.mrb[0].mxu0
        %2105 = vmatprep.mubr.bf16.mxu0 %v1162
        %2106 = vmatmul.mubr.bf16.gmra.mrb[0].mxu0 %v1463
        %v2107 = vpop.f32.mrb[0].mxu0
        %v2108 = vadd.f32 %v1543, %v2107
        %v2109 = vpop.f32.mrb[0].mxu0
        %v2110 = vpop.f32.mrb[0].mxu0
        %v2111 = vadd.f32 %v1543, %v2110
        %v2112 = vpop.f32.mrb[0].mxu0
        %2113 = vmatprep.mubr.bf16.mxu0 %v1163
        %2114 = vmatmul.mubr.bf16.gmra.mrb[0].mxu0 %v1464
        %v2115 = vpop.f32.mrb[0].mxu0
        %v2116 = vadd.f32 %v1543, %v2115
        %v2117 = vpop.f32.mrb[0].mxu0
        %v2118 = vpop.f32.mrb[0].mxu0
        %v2119 = vadd.f32 %v1543, %v2118
        %v2120 = vpop.f32.mrb[0].mxu0
        %2121 = vmatprep.mubr.bf16.mxu0 %v1164
        %2122 = vmatmul.mubr.bf16.gmra.mrb[0].mxu0 %v1465
        %v2123 = vpop.f32.mrb[0].mxu0
        %v2124 = vadd.f32 %v1543, %v2123
        %v2125 = vpop.f32.mrb[0].mxu0
        %v2126 = vpop.f32.mrb[0].mxu0
        %v2127 = vadd.f32 %v1543, %v2126
        %v2128 = vpop.f32.mrb[0].mxu0
        %2129 = vmatprep.mubr.bf16.mxu0 %v1165
        %2130 = vmatmul.mubr.bf16.gmra.mrb[0].mxu0 %v1466
        %v2131 = vpop.f32.mrb[0].mxu0
        %v2132 = vadd.f32 %v1543, %v2131
        %v2133 = vpop.f32.mrb[0].mxu0
        %v2134 = vpop.f32.mrb[0].mxu0
        %v2135 = vadd.f32 %v1543, %v2134
        %v2136 = vpop.f32.mrb[0].mxu0
        %2137 = vdwg.mxu0
        %2138 = vmatprep.subr.bf16.mxu0 0
        %2139 = vmatpush1.bf16.msra.mxu0 %v1849
        %2140 = vmatprep.subr.bf16.mxu0 0
        %2141 = vmatpush1.bf16.msra.mxu0 %v1850
        %2142 = vmatprep.subr.bf16.mxu0 0
        %2143 = vmatpush1.bf16.msra.mxu0 %v1851
        %2144 = vmatprep.subr.bf16.mxu0 0
        %2145 = vmatpush1.bf16.msra.mxu0 %v1852
        %2146 = vmatprep.subr.bf16.mxu0 0
        %2147 = vmatpush1.bf16.msra.mxu0 %v1853
        %2148 = vmatprep.subr.bf16.mxu0 0
        %2149 = vmatpush1.bf16.msra.mxu0 %v1854
        %2150 = vmatprep.subr.bf16.mxu0 0
        %2151 = vmatpush1.bf16.msra.mxu0 %v1855
        %2152 = vmatprep.subr.bf16.mxu0 0
        %2153 = vmatpush1.bf16.msra.mxu0 %v1856
        %2154 = vmatprep.subr.bf16.mxu0 0
        %2155 = vmatpush1.bf16.msra.mxu0 %v1857
        %2156 = vmatprep.subr.bf16.mxu0 0
        %2157 = vmatpush1.bf16.msra.mxu0 %v1858
        %2158 = vmatprep.subr.bf16.mxu0 0
        %2159 = vmatpush1.bf16.msra.mxu0 %v1859
        %2160 = vmatprep.subr.bf16.mxu0 0
        %2161 = vmatpush1.bf16.msra.mxu0 %v1860
        %2162 = vmatprep.subr.bf16.mxu0 0
        %2163 = vmatpush1.bf16.msra.mxu0 %v1861
        %2164 = vmatprep.subr.bf16.mxu0 0
        %2165 = vmatpush1.bf16.msra.mxu0 %v1862
        %2166 = vmatprep.subr.bf16.mxu0 0
        %2167 = vmatpush1.bf16.msra.mxu0 %v1863
        %2168 = vmatprep.subr.bf16.mxu0 0
        %2169 = vmatpush1.bf16.msra.mxu0 %v1864
        %2170 = vmatprep.mubr.bf16.mxu0 %v1452
        %2171 = vmatmul.mubr.bf16.gmra.mrb[0].mxu0 %v1522
        %v2172 = vpop.f32.mrb[0].mxu0
        %v2173 = vadd.f32 %v2012, %v2172
        %v2174 = vpop.f32.mrb[0].mxu0
        %v2175 = vpop.f32.mrb[0].mxu0
        %v2176 = vadd.f32 %v2015, %v2175
        %v2177 = vpop.f32.mrb[0].mxu0
        %2178 = vmatprep.mubr.bf16.mxu0 %v1453
        %2179 = vmatmul.mubr.bf16.gmra.mrb[0].mxu0 %v1523
        %v2180 = vpop.f32.mrb[0].mxu0
        %v2181 = vadd.f32 %v2020, %v2180
        %v2182 = vpop.f32.mrb[0].mxu0
        %v2183 = vpop.f32.mrb[0].mxu0
        %v2184 = vadd.f32 %v2023, %v2183
        %v2185 = vpop.f32.mrb[0].mxu0
        %2186 = vmatprep.mubr.bf16.mxu0 %v1454
        %2187 = vmatmul.mubr.bf16.gmra.mrb[0].mxu0 %v1524
        %v2188 = vpop.f32.mrb[0].mxu0
        %v2189 = vadd.f32 %v2028, %v2188
        %v2190 = vpop.f32.mrb[0].mxu0
        %v2191 = vpop.f32.mrb[0].mxu0
        %v2192 = vadd.f32 %v2031, %v2191
        %v2193 = vpop.f32.mrb[0].mxu0
        %2194 = vmatprep.mubr.bf16.mxu0 %v1455
        %2195 = vmatmul.mubr.bf16.gmra.mrb[0].mxu0 %v1525
        %v2196 = vpop.f32.mrb[0].mxu0
        %v2197 = vadd.f32 %v2036, %v2196
        %v2198 = vpop.f32.mrb[0].mxu0
        %v2199 = vpop.f32.mrb[0].mxu0
        %v2200 = vadd.f32 %v2039, %v2199
        %v2201 = vpop.f32.mrb[0].mxu0
        %2202 = vmatprep.mubr.bf16.mxu0 %v1456
        %2203 = vmatmul.mubr.bf16.gmra.mrb[0].mxu0 %v1526
        %v2204 = vpop.f32.mrb[0].mxu0
        %v2205 = vadd.f32 %v2044, %v2204
        %v2206 = vpop.f32.mrb[0].mxu0
        %v2207 = vpop.f32.mrb[0].mxu0
        %v2208 = vadd.f32 %v2047, %v2207
        %v2209 = vpop.f32.mrb[0].mxu0
        %2210 = vmatprep.mubr.bf16.mxu0 %v1457
        %2211 = vmatmul.mubr.bf16.gmra.mrb[0].mxu0 %v1527
        %v2212 = vpop.f32.mrb[0].mxu0
        %v2213 = vadd.f32 %v2052, %v2212
        %v2214 = vpop.f32.mrb[0].mxu0
        %v2215 = vpop.f32.mrb[0].mxu0
        %v2216 = vadd.f32 %v2055, %v2215
        %v2217 = vpop.f32.mrb[0].mxu0
        %2218 = vmatprep.mubr.bf16.mxu0 %v1458
        %2219 = vmatmul.mubr.bf16.gmra.mrb[0].mxu0 %v1528
        %v2220 = vpop.f32.mrb[0].mxu0
        %v2221 = vadd.f32 %v2060, %v2220
        %v2222 = vpop.f32.mrb[0].mxu0
        %v2223 = vpop.f32.mrb[0].mxu0
        %v2224 = vadd.f32 %v2063, %v2223
        %v2225 = vpop.f32.mrb[0].mxu0
        %2226 = vmatprep.mubr.bf16.mxu0 %v1459
        %2227 = vmatmul.mubr.bf16.gmra.mrb[0].mxu0 %v1529
        %v2228 = vpop.f32.mrb[0].mxu0
        %v2229 = vadd.f32 %v2068, %v2228
        %v2230 = vpop.f32.mrb[0].mxu0
        %v2231 = vpop.f32.mrb[0].mxu0
        %v2232 = vadd.f32 %v2071, %v2231
        %v2233 = vpop.f32.mrb[0].mxu0
        %2234 = vmatprep.mubr.bf16.mxu0 %v1460
        %2235 = vmatmul.mubr.bf16.gmra.mrb[0].mxu0 %v1530
        %v2236 = vpop.f32.mrb[0].mxu0
        %v2237 = vadd.f32 %v2076, %v2236
        %v2238 = vpop.f32.mrb[0].mxu0
        %v2239 = vpop.f32.mrb[0].mxu0
        %v2240 = vadd.f32 %v2079, %v2239
        %v2241 = vpop.f32.mrb[0].mxu0
        %2242 = vmatprep.mubr.bf16.mxu0 %v1461
        %2243 = vmatmul.mubr.bf16.gmra.mrb[0].mxu0 %v1531
        %v2244 = vpop.f32.mrb[0].mxu0
        %v2245 = vadd.f32 %v2084, %v2244
        %v2246 = vpop.f32.mrb[0].mxu0
        %v2247 = vpop.f32.mrb[0].mxu0
        %v2248 = vadd.f32 %v2087, %v2247
        %v2249 = vpop.f32.mrb[0].mxu0
        %2250 = vmatprep.mubr.bf16.mxu0 %v1462
        %2251 = vmatmul.mubr.bf16.gmra.mrb[0].mxu0 %v1532
        %v2252 = vpop.f32.mrb[0].mxu0
        %v2253 = vadd.f32 %v2092, %v2252
        %v2254 = vpop.f32.mrb[0].mxu0
        %v2255 = vpop.f32.mrb[0].mxu0
        %v2256 = vadd.f32 %v2095, %v2255
        %v2257 = vpop.f32.mrb[0].mxu0
        %2258 = vmatprep.mubr.bf16.mxu0 %v1463
        %2259 = vmatmul.mubr.bf16.gmra.mrb[0].mxu0 %v1533
        %v2260 = vpop.f32.mrb[0].mxu0
        %v2261 = vadd.f32 %v2100, %v2260
        %v2262 = vpop.f32.mrb[0].mxu0
        %v2263 = vpop.f32.mrb[0].mxu0
        %v2264 = vadd.f32 %v2103, %v2263
        %v2265 = vpop.f32.mrb[0].mxu0
        %2266 = vmatprep.mubr.bf16.mxu0 %v1464
        %2267 = vmatmul.mubr.bf16.gmra.mrb[0].mxu0 %v1534
        %v2268 = vpop.f32.mrb[0].mxu0
        %v2269 = vadd.f32 %v2108, %v2268
        %v2270 = vpop.f32.mrb[0].mxu0
        %v2271 = vpop.f32.mrb[0].mxu0
        %v2272 = vadd.f32 %v2111, %v2271
        %v2273 = vpop.f32.mrb[0].mxu0
        %2274 = vmatprep.mubr.bf16.mxu0 %v1465
        %2275 = vmatmul.mubr.bf16.gmra.mrb[0].mxu0 %v1535
        %v2276 = vpop.f32.mrb[0].mxu0
        %v2277 = vadd.f32 %v2116, %v2276
        %v2278 = vpop.f32.mrb[0].mxu0
        %v2279 = vpop.f32.mrb[0].mxu0
        %v2280 = vadd.f32 %v2119, %v2279
        %v2281 = vpop.f32.mrb[0].mxu0
        %2282 = vmatprep.mubr.bf16.mxu0 %v1466
        %2283 = vmatmul.mubr.bf16.gmra.mrb[0].mxu0 %v1536
        %v2284 = vpop.f32.mrb[0].mxu0
        %v2285 = vadd.f32 %v2124, %v2284
        %v2286 = vpop.f32.mrb[0].mxu0
        %v2287 = vpop.f32.mrb[0].mxu0
        %v2288 = vadd.f32 %v2127, %v2287
        %v2289 = vpop.f32.mrb[0].mxu0
        %2290 = vmatprep.mubr.bf16.mxu0 %v1467
        %2291 = vmatmul.mubr.bf16.gmra.mrb[0].mxu0 %v1537
        %v2292 = vpop.f32.mrb[0].mxu0
        %v2293 = vadd.f32 %v2132, %v2292
        %v2294 = vpop.f32.mrb[0].mxu0
        %v2295 = vpop.f32.mrb[0].mxu0
        %v2296 = vadd.f32 %v2135, %v2295
        %v2297 = vpop.f32.mrb[0].mxu0
        %2298 = vdwg.mxu0
        %2299 = vmatprep.subr.bf16.mxu0 0
        %2300 = vmatpush1.bf16.msra.mxu0 %v1865
        %2301 = vmatprep.subr.bf16.mxu0 0
        %2302 = vmatpush1.bf16.msra.mxu0 %v1866
        %2303 = vmatprep.subr.bf16.mxu0 0
        %2304 = vmatpush1.bf16.msra.mxu0 %v1867
        %2305 = vmatprep.subr.bf16.mxu0 0
        %2306 = vmatpush1.bf16.msra.mxu0 %v1868
        %2307 = vmatprep.subr.bf16.mxu0 0
        %2308 = vmatpush1.bf16.msra.mxu0 %v1869
        %2309 = vmatprep.subr.bf16.mxu0 0
        %2310 = vmatpush1.bf16.msra.mxu0 %v1870
        %2311 = vmatprep.subr.bf16.mxu0 0
        %2312 = vmatpush1.bf16.msra.mxu0 %v1871
        %2313 = vmatprep.subr.bf16.mxu0 0
        %2314 = vmatpush1.bf16.msra.mxu0 %v1872
        %2315 = vmatprep.subr.bf16.mxu0 0
        %2316 = vmatpush1.bf16.msra.mxu0 %v1873
        %2317 = vmatprep.subr.bf16.mxu0 0
        %2318 = vmatpush1.bf16.msra.mxu0 %v1874
        %2319 = vmatprep.subr.bf16.mxu0 0
        %2320 = vmatpush1.bf16.msra.mxu0 %v1875
        %2321 = vmatprep.subr.bf16.mxu0 0
        %2322 = vmatpush1.bf16.msra.mxu0 %v1876
        %2323 = vmatprep.subr.bf16.mxu0 0
        %2324 = vmatpush1.bf16.msra.mxu0 %v1877
        %2325 = vmatprep.subr.bf16.mxu0 0
        %2326 = vmatpush1.bf16.msra.mxu0 %v1878
        %2327 = vmatprep.subr.bf16.mxu0 0
        %2328 = vmatpush1.bf16.msra.mxu0 %v1879
        %2329 = vmatprep.subr.bf16.mxu0 0
        %2330 = vmatpush1.bf16.msra.mxu0 %v1880
        %2331 = vmatprep.mubr.bf16.mxu0 %v1523
        %2332 = vmatmul.mubr.bf16.gmra.mrb[0].mxu0 %v1151
        %v2333 = vpop.f32.mrb[0].mxu0
        %v2334 = vadd.f32 %v2173, %v2333
        %v2335 = vpop.f32.mrb[0].mxu0
        %v2336 = vpop.f32.mrb[0].mxu0
        %v2337 = vadd.f32 %v2176, %v2336
        %v2338 = vpop.f32.mrb[0].mxu0
        %2339 = vmatprep.mubr.bf16.mxu0 %v1524
        %2340 = vmatmul.mubr.bf16.gmra.mrb[0].mxu0 %v1152
        %v2341 = vpop.f32.mrb[0].mxu0
        %v2342 = vadd.f32 %v2181, %v2341
        %v2343 = vpop.f32.mrb[0].mxu0
        %v2344 = vpop.f32.mrb[0].mxu0
        %v2345 = vadd.f32 %v2184, %v2344
        %v2346 = vpop.f32.mrb[0].mxu0
        %2347 = vmatprep.mubr.bf16.mxu0 %v1525
        %2348 = vmatmul.mubr.bf16.gmra.mrb[0].mxu0 %v1153
        %v2349 = vpop.f32.mrb[0].mxu0
        %v2350 = vadd.f32 %v2189, %v2349
        %v2351 = vpop.f32.mrb[0].mxu0
        %v2352 = vpop.f32.mrb[0].mxu0
        %v2353 = vadd.f32 %v2192, %v2352
        %v2354 = vpop.f32.mrb[0].mxu0
        %2355 = vmatprep.mubr.bf16.mxu0 %v1526
        %2356 = vmatmul.mubr.bf16.gmra.mrb[0].mxu0 %v1154
        %v2357 = vpop.f32.mrb[0].mxu0
        %v2358 = vadd.f32 %v2197, %v2357
        %v2359 = vpop.f32.mrb[0].mxu0
        %v2360 = vpop.f32.mrb[0].mxu0
        %v2361 = vadd.f32 %v2200, %v2360
        %v2362 = vpop.f32.mrb[0].mxu0
        %2363 = vmatprep.mubr.bf16.mxu0 %v1527
        %2364 = vmatmul.mubr.bf16.gmra.mrb[0].mxu0 %v1155
        %v2365 = vpop.f32.mrb[0].mxu0
        %v2366 = vadd.f32 %v2205, %v2365
        %v2367 = vpop.f32.mrb[0].mxu0
        %v2368 = vpop.f32.mrb[0].mxu0
        %v2369 = vadd.f32 %v2208, %v2368
        %v2370 = vpop.f32.mrb[0].mxu0
        %2371 = vmatprep.mubr.bf16.mxu0 %v1528
        %2372 = vmatmul.mubr.bf16.gmra.mrb[0].mxu0 %v1156
        %v2373 = vpop.f32.mrb[0].mxu0
        %v2374 = vadd.f32 %v2213, %v2373
        %v2375 = vpop.f32.mrb[0].mxu0
        %v2376 = vpop.f32.mrb[0].mxu0
        %v2377 = vadd.f32 %v2216, %v2376
        %v2378 = vpop.f32.mrb[0].mxu0
        %2379 = vmatprep.mubr.bf16.mxu0 %v1529
        %2380 = vmatmul.mubr.bf16.gmra.mrb[0].mxu0 %v1157
        %v2381 = vpop.f32.mrb[0].mxu0
        %v2382 = vadd.f32 %v2221, %v2381
        %v2383 = vpop.f32.mrb[0].mxu0
        %v2384 = vpop.f32.mrb[0].mxu0
        %v2385 = vadd.f32 %v2224, %v2384
        %v2386 = vpop.f32.mrb[0].mxu0
        %2387 = vmatprep.mubr.bf16.mxu0 %v1530
        %2388 = vmatmul.mubr.bf16.gmra.mrb[0].mxu0 %v1158
        %v2389 = vpop.f32.mrb[0].mxu0
        %v2390 = vadd.f32 %v2229, %v2389
        %v2391 = vpop.f32.mrb[0].mxu0
        %v2392 = vpop.f32.mrb[0].mxu0
        %v2393 = vadd.f32 %v2232, %v2392
        %v2394 = vpop.f32.mrb[0].mxu0
        %2395 = vmatprep.mubr.bf16.mxu0 %v1531
        %2396 = vmatmul.mubr.bf16.gmra.mrb[0].mxu0 %v1159
        %v2397 = vpop.f32.mrb[0].mxu0
        %v2398 = vadd.f32 %v2237, %v2397
        %v2399 = vpop.f32.mrb[0].mxu0
        %v2400 = vpop.f32.mrb[0].mxu0
        %v2401 = vadd.f32 %v2240, %v2400
        %v2402 = vpop.f32.mrb[0].mxu0
        %2403 = vmatprep.mubr.bf16.mxu0 %v1532
        %2404 = vmatmul.mubr.bf16.gmra.mrb[0].mxu0 %v1160
        %v2405 = vpop.f32.mrb[0].mxu0
        %v2406 = vadd.f32 %v2245, %v2405
        %v2407 = vpop.f32.mrb[0].mxu0
        %v2408 = vpop.f32.mrb[0].mxu0
        %v2409 = vadd.f32 %v2248, %v2408
        %v2410 = vpop.f32.mrb[0].mxu0
        %2411 = vmatprep.mubr.bf16.mxu0 %v1533
        %2412 = vmatmul.mubr.bf16.gmra.mrb[0].mxu0 %v1161
        %v2413 = vpop.f32.mrb[0].mxu0
        %v2414 = vadd.f32 %v2253, %v2413
        %v2415 = vpop.f32.mrb[0].mxu0
        %v2416 = vpop.f32.mrb[0].mxu0
        %v2417 = vadd.f32 %v2256, %v2416
        %v2418 = vpop.f32.mrb[0].mxu0
        %2419 = vmatprep.mubr.bf16.mxu0 %v1534
        %2420 = vmatmul.mubr.bf16.gmra.mrb[0].mxu0 %v1162
        %v2421 = vpop.f32.mrb[0].mxu0
        %v2422 = vadd.f32 %v2261, %v2421
        %v2423 = vpop.f32.mrb[0].mxu0
        %v2424 = vpop.f32.mrb[0].mxu0
        %v2425 = vadd.f32 %v2264, %v2424
        %v2426 = vpop.f32.mrb[0].mxu0
        %2427 = vmatprep.mubr.bf16.mxu0 %v1535
        %2428 = vmatmul.mubr.bf16.gmra.mrb[0].mxu0 %v1163
        %v2429 = vpop.f32.mrb[0].mxu0
        %v2430 = vadd.f32 %v2269, %v2429
        %v2431 = vpop.f32.mrb[0].mxu0
        %v2432 = vpop.f32.mrb[0].mxu0
        %v2433 = vadd.f32 %v2272, %v2432
        %v2434 = vpop.f32.mrb[0].mxu0
        %2435 = vmatprep.mubr.bf16.mxu0 %v1536
        %2436 = vmatmul.mubr.bf16.gmra.mrb[0].mxu0 %v1164
        %v2437 = vpop.f32.mrb[0].mxu0
        %v2438 = vadd.f32 %v2277, %v2437
        %v2439 = vpop.f32.mrb[0].mxu0
        %v2440 = vpop.f32.mrb[0].mxu0
        %v2441 = vadd.f32 %v2280, %v2440
        %v2442 = vpop.f32.mrb[0].mxu0
        %2443 = vmatprep.mubr.bf16.mxu0 %v1537
        %2444 = vmatmul.mubr.bf16.gmra.mrb[0].mxu0 %v1165
        %v2445 = vpop.f32.mrb[0].mxu0
        %v2446 = vadd.f32 %v2285, %v2445
        %v2447 = vpop.f32.mrb[0].mxu0
        %v2448 = vpop.f32.mrb[0].mxu0
        %v2449 = vadd.f32 %v2288, %v2448
        %v2450 = vpop.f32.mrb[0].mxu0
        %2451 = vmatprep.mubr.bf16.mxu0 %v1538
        %2452 = vmatmul.mubr.bf16.gmra.mrb[0].mxu0 %v1166
        %v2453 = vpop.f32.mrb[0].mxu0
        %v2454 = vadd.f32 %v2293, %v2453
        %v2455 = vpop.f32.mrb[0].mxu0
        %v2456 = vpop.f32.mrb[0].mxu0
        %v2457 = vadd.f32 %v2296, %v2456
        %v2458 = vpop.f32.mrb[0].mxu0
        %2459 = vdwg.mxu0
        %2460 = vmatprep.subr.bf16.mxu0 0
        %2461 = vmatpush1.bf16.msra.mxu0 %v1881
        %2462 = vmatprep.subr.bf16.mxu0 0
        %2463 = vmatpush1.bf16.msra.mxu0 %v1882
        %2464 = vmatprep.subr.bf16.mxu0 0
        %2465 = vmatpush1.bf16.msra.mxu0 %v1883
        %2466 = vmatprep.subr.bf16.mxu0 0
        %2467 = vmatpush1.bf16.msra.mxu0 %v1884
        %2468 = vmatprep.subr.bf16.mxu0 0
        %2469 = vmatpush1.bf16.msra.mxu0 %v1885
        %2470 = vmatprep.subr.bf16.mxu0 0
        %2471 = vmatpush1.bf16.msra.mxu0 %v1886
        %2472 = vmatprep.subr.bf16.mxu0 0
        %2473 = vmatpush1.bf16.msra.mxu0 %v1887
        %2474 = vmatprep.subr.bf16.mxu0 0
        %2475 = vmatpush1.bf16.msra.mxu0 %v1888
        %2476 = vmatprep.subr.bf16.mxu0 0
        %2477 = vmatpush1.bf16.msra.mxu0 %v1889
        %2478 = vmatprep.subr.bf16.mxu0 0
        %2479 = vmatpush1.bf16.msra.mxu0 %v1890
        %2480 = vmatprep.subr.bf16.mxu0 0
        %2481 = vmatpush1.bf16.msra.mxu0 %v1891
        %2482 = vmatprep.subr.bf16.mxu0 0
        %2483 = vmatpush1.bf16.msra.mxu0 %v1892
        %2484 = vmatprep.subr.bf16.mxu0 0
        %2485 = vmatpush1.bf16.msra.mxu0 %v1893
        %2486 = vmatprep.subr.bf16.mxu0 0
        %2487 = vmatpush1.bf16.msra.mxu0 %v1894
        %2488 = vmatprep.subr.bf16.mxu0 0
        %2489 = vmatpush1.bf16.msra.mxu0 %v1895
        %2490 = vmatprep.subr.bf16.mxu0 0
        %2491 = vmatpush1.bf16.msra.mxu0 %v1896
        %2492 = vmatprep.mubr.bf16.mxu0 %v1152
        %2493 = vmatmul.mubr.bf16.gmra.mrb[0].mxu0 %v1453
        %v2494 = vpop.f32.mrb[0].mxu0
        %v2495 = vadd.f32 %v2334, %v2494
        %v2496 = vpop.f32.mrb[0].mxu0
        %v2497 = vpop.f32.mrb[0].mxu0
        %v2498 = vadd.f32 %v2337, %v2497
        %v2499 = vpop.f32.mrb[0].mxu0
        %2500 = vmatprep.mubr.bf16.mxu0 %v1153
        %2501 = vmatmul.mubr.bf16.gmra.mrb[0].mxu0 %v1454
        %v2502 = vpop.f32.mrb[0].mxu0
        %v2503 = vadd.f32 %v2342, %v2502
        %v2504 = vpop.f32.mrb[0].mxu0
        %v2505 = vpop.f32.mrb[0].mxu0
        %v2506 = vadd.f32 %v2345, %v2505
        %v2507 = vpop.f32.mrb[0].mxu0
        %2508 = vmatprep.mubr.bf16.mxu0 %v1154
        %2509 = vmatmul.mubr.bf16.gmra.mrb[0].mxu0 %v1455
        %v2510 = vpop.f32.mrb[0].mxu0
        %v2511 = vadd.f32 %v2350, %v2510
        %v2512 = vpop.f32.mrb[0].mxu0
        %v2513 = vpop.f32.mrb[0].mxu0
        %v2514 = vadd.f32 %v2353, %v2513
        %v2515 = vpop.f32.mrb[0].mxu0
        %2516 = vmatprep.mubr.bf16.mxu0 %v1155
        %2517 = vmatmul.mubr.bf16.gmra.mrb[0].mxu0 %v1456
        %v2518 = vpop.f32.mrb[0].mxu0
        %v2519 = vadd.f32 %v2358, %v2518
        %v2520 = vpop.f32.mrb[0].mxu0
        %v2521 = vpop.f32.mrb[0].mxu0
        %v2522 = vadd.f32 %v2361, %v2521
        %v2523 = vpop.f32.mrb[0].mxu0
        %2524 = vmatprep.mubr.bf16.mxu0 %v1156
        %2525 = vmatmul.mubr.bf16.gmra.mrb[0].mxu0 %v1457
        %v2526 = vpop.f32.mrb[0].mxu0
        %v2527 = vadd.f32 %v2366, %v2526
        %v2528 = vpop.f32.mrb[0].mxu0
        %v2529 = vpop.f32.mrb[0].mxu0
        %v2530 = vadd.f32 %v2369, %v2529
        %v2531 = vpop.f32.mrb[0].mxu0
        %2532 = vmatprep.mubr.bf16.mxu0 %v1157
        %2533 = vmatmul.mubr.bf16.gmra.mrb[0].mxu0 %v1458
        %v2534 = vpop.f32.mrb[0].mxu0
        %v2535 = vadd.f32 %v2374, %v2534
        %v2536 = vpop.f32.mrb[0].mxu0
        %v2537 = vpop.f32.mrb[0].mxu0
        %v2538 = vadd.f32 %v2377, %v2537
        %v2539 = vpop.f32.mrb[0].mxu0
        %2540 = vmatprep.mubr.bf16.mxu0 %v1158
        %2541 = vmatmul.mubr.bf16.gmra.mrb[0].mxu0 %v1459
        %v2542 = vpop.f32.mrb[0].mxu0
        %v2543 = vadd.f32 %v2382, %v2542
        %v2544 = vpop.f32.mrb[0].mxu0
        %v2545 = vpop.f32.mrb[0].mxu0
        %v2546 = vadd.f32 %v2385, %v2545
        %v2547 = vpop.f32.mrb[0].mxu0
        %2548 = vmatprep.mubr.bf16.mxu0 %v1159
        %2549 = vmatmul.mubr.bf16.gmra.mrb[0].mxu0 %v1460
        %v2550 = vpop.f32.mrb[0].mxu0
        %v2551 = vadd.f32 %v2390, %v2550
        %v2552 = vpop.f32.mrb[0].mxu0
        %v2553 = vpop.f32.mrb[0].mxu0
        %v2554 = vadd.f32 %v2393, %v2553
        %v2555 = vpop.f32.mrb[0].mxu0
        %2556 = vmatprep.mubr.bf16.mxu0 %v1160
        %2557 = vmatmul.mubr.bf16.gmra.mrb[0].mxu0 %v1461
        %v2558 = vpop.f32.mrb[0].mxu0
        %v2559 = vadd.f32 %v2398, %v2558
        %v2560 = vpop.f32.mrb[0].mxu0
        %v2561 = vpop.f32.mrb[0].mxu0
        %v2562 = vadd.f32 %v2401, %v2561
        %v2563 = vpop.f32.mrb[0].mxu0
        %2564 = vmatprep.mubr.bf16.mxu0 %v1161
        %2565 = vmatmul.mubr.bf16.gmra.mrb[0].mxu0 %v1462
        %v2566 = vpop.f32.mrb[0].mxu0
        %v2567 = vadd.f32 %v2406, %v2566
        %v2568 = vpop.f32.mrb[0].mxu0
        %v2569 = vpop.f32.mrb[0].mxu0
        %v2570 = vadd.f32 %v2409, %v2569
        %v2571 = vpop.f32.mrb[0].mxu0
        %2572 = vmatprep.mubr.bf16.mxu0 %v1162
        %2573 = vmatmul.mubr.bf16.gmra.mrb[0].mxu0 %v1463
        %v2574 = vpop.f32.mrb[0].mxu0
        %v2575 = vadd.f32 %v2414, %v2574
        %v2576 = vpop.f32.mrb[0].mxu0
        %v2577 = vpop.f32.mrb[0].mxu0
        %v2578 = vadd.f32 %v2417, %v2577
        %v2579 = vpop.f32.mrb[0].mxu0
        %2580 = vmatprep.mubr.bf16.mxu0 %v1163
        %2581 = vmatmul.mubr.bf16.gmra.mrb[0].mxu0 %v1464
        %v2582 = vpop.f32.mrb[0].mxu0
        %v2583 = vadd.f32 %v2422, %v2582
        %v2584 = vpop.f32.mrb[0].mxu0
        %v2585 = vpop.f32.mrb[0].mxu0
        %v2586 = vadd.f32 %v2425, %v2585
        %v2587 = vpop.f32.mrb[0].mxu0
        %2588 = vmatprep.mubr.bf16.mxu0 %v1164
        %2589 = vmatmul.mubr.bf16.gmra.mrb[0].mxu0 %v1465
        %v2590 = vpop.f32.mrb[0].mxu0
        %v2591 = vadd.f32 %v2430, %v2590
        %v2592 = vpop.f32.mrb[0].mxu0
        %v2593 = vpop.f32.mrb[0].mxu0
        %v2594 = vadd.f32 %v2433, %v2593
        %v2595 = vpop.f32.mrb[0].mxu0
        %2596 = vmatprep.mubr.bf16.mxu0 %v1165
        %2597 = vmatmul.mubr.bf16.gmra.mrb[0].mxu0 %v1466
        %v2598 = vpop.f32.mrb[0].mxu0
        %v2599 = vadd.f32 %v2438, %v2598
        %v2600 = vpop.f32.mrb[0].mxu0
        %v2601 = vpop.f32.mrb[0].mxu0
        %v2602 = vadd.f32 %v2441, %v2601
        %v2603 = vpop.f32.mrb[0].mxu0
        %2604 = vmatprep.mubr.bf16.mxu0 %v1166
        %2605 = vmatmul.mubr.bf16.gmra.mrb[0].mxu0 %v1467
        %v2606 = vpop.f32.mrb[0].mxu0
        %v2607 = vadd.f32 %v2446, %v2606
        %v2608 = vpop.f32.mrb[0].mxu0
        %v2609 = vpop.f32.mrb[0].mxu0
        %v2610 = vadd.f32 %v2449, %v2609
        %v2611 = vpop.f32.mrb[0].mxu0
        %2612 = vmatprep.mubr.bf16.mxu0 0
        %2613 = vmatmul.mubr.bf16.gmra.mrb[0].mxu0 %v1451
        %v2614 = vpop.f32.mrb[0].mxu0
        %v2615 = vadd.f32 %v2454, %v2614
        %v2616 = vpop.f32.mrb[0].mxu0
        %v2617 = vpop.f32.mrb[0].mxu0
        %v2618 = vadd.f32 %v2457, %v2617
        %v2619 = vpop.f32.mrb[0].mxu0
        %2620 = vdwg.mxu0
        %2621 = vmatprep.subr.bf16.mxu0 0
        %2622 = vmatpush1.bf16.msra.mxu0 %v1897
        %2623 = vmatprep.subr.bf16.mxu0 0
        %2624 = vmatpush1.bf16.msra.mxu0 %v1898
        %2625 = vmatprep.subr.bf16.mxu0 0
        %2626 = vmatpush1.bf16.msra.mxu0 %v1899
        %2627 = vmatprep.subr.bf16.mxu0 0
        %2628 = vmatpush1.bf16.msra.mxu0 %v1900
        %2629 = vmatprep.subr.bf16.mxu0 0
        %2630 = vmatpush1.bf16.msra.mxu0 %v1901
        %2631 = vmatprep.subr.bf16.mxu0 0
        %2632 = vmatpush1.bf16.msra.mxu0 %v1902
        %2633 = vmatprep.subr.bf16.mxu0 0
        %2634 = vmatpush1.bf16.msra.mxu0 %v1903
        %2635 = vmatprep.subr.bf16.mxu0 0
        %2636 = vmatpush1.bf16.msra.mxu0 %v1904
        %2637 = vmatprep.subr.bf16.mxu0 0
        %2638 = vmatpush1.bf16.msra.mxu0 0
        %2639 = vmatprep.subr.bf16.mxu0 0
        %2640 = vmatpush1.bf16.msra.mxu0 0
        %2641 = vmatprep.subr.bf16.mxu0 0
        %2642 = vmatpush1.bf16.msra.mxu0 0
        %2643 = vmatprep.subr.bf16.mxu0 0
        %2644 = vmatpush1.bf16.msra.mxu0 0
        %2645 = vmatprep.subr.bf16.mxu0 0
        %2646 = vmatpush1.bf16.msra.mxu0 0
        %2647 = vmatprep.subr.bf16.mxu0 0
        %2648 = vmatpush1.bf16.msra.mxu0 0
        %2649 = vmatprep.subr.bf16.mxu0 0
        %2650 = vmatpush1.bf16.msra.mxu0 0
        %2651 = vmatprep.subr.bf16.mxu0 0
        %2652 = vmatpush1.bf16.msra.mxu0 0
        %2653 = vmatprep.mubr.bf16.mxu0 0
        %2654 = vmatmul.mubr.bf16.gmra.mrb[0].mxu0 %v1524
        %v2655 = vpop.f32.mrb[0].mxu0
        %v2656 = vadd.f32 %v2495, %v2655
        %v2657 = vpop.f32.mrb[0].mxu0
        %v2658 = vpop.f32.mrb[0].mxu0
        %v2659 = vadd.f32 %v2498, %v2658
        %v2660 = vpop.f32.mrb[0].mxu0
        %2661 = vmatprep.mubr.bf16.mxu0 0
        %2662 = vmatmul.mubr.bf16.gmra.mrb[0].mxu0 %v1525
        %v2663 = vpop.f32.mrb[0].mxu0
        %v2664 = vadd.f32 %v2503, %v2663
        %v2665 = vpop.f32.mrb[0].mxu0
        %v2666 = vpop.f32.mrb[0].mxu0
        %v2667 = vadd.f32 %v2506, %v2666
        %v2668 = vpop.f32.mrb[0].mxu0
        %2669 = vmatprep.mubr.bf16.mxu0 0
        %2670 = vmatmul.mubr.bf16.gmra.mrb[0].mxu0 %v1526
        %v2671 = vpop.f32.mrb[0].mxu0
        %v2672 = vadd.f32 %v2511, %v2671
        %v2673 = vpop.f32.mrb[0].mxu0
        %v2674 = vpop.f32.mrb[0].mxu0
        %v2675 = vadd.f32 %v2514, %v2674
        %v2676 = vpop.f32.mrb[0].mxu0
        %2677 = vmatprep.mubr.bf16.mxu0 0
        %2678 = vmatmul.mubr.bf16.gmra.mrb[0].mxu0 %v1527
        %v2679 = vpop.f32.mrb[0].mxu0
        %v2680 = vadd.f32 %v2519, %v2679
        %v2681 = vpop.f32.mrb[0].mxu0
        %v2682 = vpop.f32.mrb[0].mxu0
        %v2683 = vadd.f32 %v2522, %v2682
        %v2684 = vpop.f32.mrb[0].mxu0
        %2685 = vmatprep.mubr.bf16.mxu0 0
        %2686 = vmatmul.mubr.bf16.gmra.mrb[0].mxu0 %v1528
        %v2687 = vpop.f32.mrb[0].mxu0
        %v2688 = vadd.f32 %v2527, %v2687
        %v2689 = vpop.f32.mrb[0].mxu0
        %v2690 = vpop.f32.mrb[0].mxu0
        %v2691 = vadd.f32 %v2530, %v2690
        %v2692 = vpop.f32.mrb[0].mxu0
        %2693 = vmatprep.mubr.bf16.mxu0 0
        %2694 = vmatmul.mubr.bf16.gmra.mrb[0].mxu0 %v1529
        %v2695 = vpop.f32.mrb[0].mxu0
        %v2696 = vadd.f32 %v2535, %v2695
        %v2697 = vpop.f32.mrb[0].mxu0
        %v2698 = vpop.f32.mrb[0].mxu0
        %v2699 = vadd.f32 %v2538, %v2698
        %v2700 = vpop.f32.mrb[0].mxu0
        %2701 = vmatprep.mubr.bf16.mxu0 0
        %2702 = vmatmul.mubr.bf16.gmra.mrb[0].mxu0 %v1530
        %v2703 = vpop.f32.mrb[0].mxu0
        %v2704 = vadd.f32 %v2543, %v2703
        %v2705 = vpop.f32.mrb[0].mxu0
        %v2706 = vpop.f32.mrb[0].mxu0
        %v2707 = vadd.f32 %v2546, %v2706
        %v2708 = vpop.f32.mrb[0].mxu0
        %2709 = vmatprep.mubr.bf16.mxu0 0
        %2710 = vmatmul.mubr.bf16.gmra.mrb[0].mxu0 %v1531
        %v2711 = vpop.f32.mrb[0].mxu0
        %v2712 = vadd.f32 %v2551, %v2711
        %v2713 = vpop.f32.mrb[0].mxu0
        %v2714 = vpop.f32.mrb[0].mxu0
        %v2715 = vadd.f32 %v2554, %v2714
        %v2716 = vpop.f32.mrb[0].mxu0
        %2717 = vmatprep.mubr.bf16.mxu0 0
        %2718 = vmatmul.mubr.bf16.gmra.mrb[0].mxu0 %v1532
        %v2719 = vpop.f32.mrb[0].mxu0
        %v2720 = vadd.f32 %v2559, %v2719
        %v2721 = vpop.f32.mrb[0].mxu0
        %v2722 = vpop.f32.mrb[0].mxu0
        %v2723 = vadd.f32 %v2562, %v2722
        %v2724 = vpop.f32.mrb[0].mxu0
        %2725 = vmatprep.mubr.bf16.mxu0 0
        %2726 = vmatmul.mubr.bf16.gmra.mrb[0].mxu0 %v1533
        %v2727 = vpop.f32.mrb[0].mxu0
        %v2728 = vadd.f32 %v2567, %v2727
        %v2729 = vpop.f32.mrb[0].mxu0
        %v2730 = vpop.f32.mrb[0].mxu0
        %v2731 = vadd.f32 %v2570, %v2730
        %v2732 = vpop.f32.mrb[0].mxu0
        %2733 = vmatprep.mubr.bf16.mxu0 0
        %2734 = vmatmul.mubr.bf16.gmra.mrb[0].mxu0 %v1534
        %v2735 = vpop.f32.mrb[0].mxu0
        %v2736 = vadd.f32 %v2575, %v2735
        %v2737 = vpop.f32.mrb[0].mxu0
        %v2738 = vpop.f32.mrb[0].mxu0
        %v2739 = vadd.f32 %v2578, %v2738
        %v2740 = vpop.f32.mrb[0].mxu0
        %2741 = vmatprep.mubr.bf16.mxu0 0
        %2742 = vmatmul.mubr.bf16.gmra.mrb[0].mxu0 %v1535
        %v2743 = vpop.f32.mrb[0].mxu0
        %v2744 = vadd.f32 %v2583, %v2743
        %v2745 = vpop.f32.mrb[0].mxu0
        %v2746 = vpop.f32.mrb[0].mxu0
        %v2747 = vadd.f32 %v2586, %v2746
        %v2748 = vpop.f32.mrb[0].mxu0
        %2749 = vmatprep.mubr.bf16.mxu0 0
        %2750 = vmatmul.mubr.bf16.gmra.mrb[0].mxu0 %v1536
        %v2751 = vpop.f32.mrb[0].mxu0
        %v2752 = vadd.f32 %v2591, %v2751
        %v2753 = vpop.f32.mrb[0].mxu0
        %v2754 = vpop.f32.mrb[0].mxu0
        %v2755 = vadd.f32 %v2594, %v2754
        %v2756 = vpop.f32.mrb[0].mxu0
        %2757 = vmatprep.mubr.bf16.mxu0 0
        %2758 = vmatmul.mubr.bf16.gmra.mrb[0].mxu0 %v1537
        %v2759 = vpop.f32.mrb[0].mxu0
        %v2760 = vadd.f32 %v2599, %v2759
        %v2761 = vpop.f32.mrb[0].mxu0
        %v2762 = vpop.f32.mrb[0].mxu0
        %v2763 = vadd.f32 %v2602, %v2762
        %v2764 = vpop.f32.mrb[0].mxu0
        %2765 = vmatprep.mubr.bf16.mxu0 0
        %2766 = vmatmul.mubr.bf16.gmra.mrb[0].mxu0 %v1538
        %v2767 = vpop.f32.mrb[0].mxu0
        %v2768 = vadd.f32 %v2607, %v2767
        %v2769 = vpop.f32.mrb[0].mxu0
        %v2770 = vpop.f32.mrb[0].mxu0
        %v2771 = vadd.f32 %v2610, %v2770
        %v2772 = vpop.f32.mrb[0].mxu0
        %2773 = vmatprep.mubr.bf16.mxu0 0
        %2774 = vmatmul.mubr.bf16.gmra.mrb[0].mxu0 %v1522
        %v2775 = vpop.f32.mrb[0].mxu0
        %v2776 = vadd.f32 %v2615, %v2775
        %v2777 = vpop.f32.mrb[0].mxu0
        %v2778 = vpop.f32.mrb[0].mxu0
        %v2779 = vadd.f32 %v2618, %v2778
        %v2780 = vpop.f32.mrb[0].mxu0
        %2781 = vdwg.mxu0
        %v2782 = vld [vmem:[%s7] sm:$0xff]
        %v2783 = vld [vmem:[%s7 + $0x8] sm:$0xff]
        %v2784 = vld [vmem:[%s7 + $0x10] sm:$0xff]
        %v2785 = vld [vmem:[%s7 + $0x18] sm:$0xff]
        %v2786 = vld [vmem:[%s7 + $0x20] sm:$0xff]
        %v2787 = vld [vmem:[%s7 + $0x28] sm:$0xff]
        %v2788 = vld [vmem:[%s7 + $0x30] sm:$0xff]
        %v2789 = vld [vmem:[%s7 + $0x38] sm:$0xff]
        %v2790 = vld [vmem:[%s7 + $0x40] sm:$0xff]
        %v2791 = vld [vmem:[%s7 + $0x48] sm:$0xff]
        %v2792 = vld [vmem:[%s7 + $0x50] sm:$0xff]
        %v2793 = vld [vmem:[%s7 + $0x58] sm:$0xff]
        %v2794 = vld [vmem:[%s7 + $0x60] sm:$0xff]
        %v2795 = vld [vmem:[%s7 + $0x68] sm:$0xff]
        %v2796 = vld [vmem:[%s7 + $0x70] sm:$0xff]
        %v2797 = vld [vmem:[%s7 + $0x78] sm:$0xff]
        %v2798 = vld [vmem:[%s8] sm:$0xff]
        %v2799 = vld [vmem:[%s8 + $0x8] sm:$0xff]
        %v2800 = vld [vmem:[%s8 + $0x10] sm:$0xff]
        %v2801 = vld [vmem:[%s8 + $0x18] sm:$0xff]
        %v2802 = vld [vmem:[%s9] sm:$0x1]
        %v2803 = vld [vmem:[%s10] sm:$0x1]
        %v2804 = vadd.f32 %v2656, %v2659
        %v2805 = vadd.f32 %v2804, %v2664
        %v2806 = vadd.f32 %v2805, %v2667
        %v2807 = vadd.f32 %v2806, %v2672
        %v2808 = vadd.f32 %v2807, %v2675
        %v2809 = vadd.f32 %v2808, %v2680
        %v2810 = vadd.f32 %v2809, %v2683
        %v2811 = vadd.f32 %v2810, %v2688
        %v2812 = vadd.f32 %v2811, %v2691
        %v2813 = vadd.f32 %v2812, %v2696
        %v2814 = vadd.f32 %v2813, %v2699
        %v2815 = vadd.f32 %v2814, %v2704
        %v2816 = vadd.f32 %v2815, %v2707
        %v2817 = vadd.f32 %v2816, %v2712
        %v2818 = vadd.f32 %v2817, %v2715
        %v2819 = vadd.f32 %v2818, %v2720
        %v2820 = vadd.f32 %v2819, %v2723
        %v2821 = vadd.f32 %v2820, %v2728
        %v2822 = vadd.f32 %v2821, %v2731
        %v2823 = vadd.f32 %v2822, %v2736
        %v2824 = vadd.f32 %v2823, %v2739
        %v2825 = vadd.f32 %v2824, %v2744
        %v2826 = vadd.f32 %v2825, %v2747
        %v2827 = vadd.f32 %v2826, %v2752
        %v2828 = vadd.f32 %v2827, %v2755
        %v2829 = vadd.f32 %v2828, %v2760
        %v2830 = vadd.f32 %v2829, %v2763
        %v2831 = vadd.f32 %v2830, %v2768
        %v2832 = vadd.f32 %v2831, %v2771
        %v2833 = vadd.f32 %v2832, %v2776
        %v2834 = vadd.f32 %v2833, %v2779
        %v2835 = vrot.slane %v2834, 4
        %v2836 = vadd.f32 %v2834, %v2835
        %v2837 = vrot.slane %v2836, 2
        %v2838 = vadd.f32 %v2836, %v2837
        %v2839 = vrot.slane %v2838, 1
        %v2840 = vadd.f32 %v2838, %v2839
        %v2841 = vmul.f32 %v2656, %v2656
        %v2842 = vmul.f32 %v2659, %v2659
        %v2843 = vmul.f32 %v2664, %v2664
        %v2844 = vmul.f32 %v2667, %v2667
        %v2845 = vmul.f32 %v2672, %v2672
        %v2846 = vmul.f32 %v2675, %v2675
        %v2847 = vmul.f32 %v2680, %v2680
        %v2848 = vmul.f32 %v2683, %v2683
        %v2849 = vmul.f32 %v2688, %v2688
        %v2850 = vmul.f32 %v2691, %v2691
        %v2851 = vmul.f32 %v2696, %v2696
        %v2852 = vmul.f32 %v2699, %v2699
        %v2853 = vmul.f32 %v2704, %v2704
        %v2854 = vmul.f32 %v2707, %v2707
        %v2855 = vmul.f32 %v2712, %v2712
        %v2856 = vmul.f32 %v2715, %v2715
        %v2857 = vmul.f32 %v2720, %v2720
        %v2858 = vmul.f32 %v2723, %v2723
        %v2859 = vmul.f32 %v2728, %v2728
        %v2860 = vmul.f32 %v2731, %v2731
        %v2861 = vmul.f32 %v2736, %v2736
        %v2862 = vmul.f32 %v2739, %v2739
        %v2863 = vmul.f32 %v2744, %v2744
        %v2864 = vmul.f32 %v2747, %v2747
        %v2865 = vmul.f32 %v2752, %v2752
        %v2866 = vmul.f32 %v2755, %v2755
        %v2867 = vmul.f32 %v2760, %v2760
        %v2868 = vmul.f32 %v2763, %v2763
        %v2869 = vmul.f32 %v2768, %v2768
        %v2870 = vmul.f32 %v2771, %v2771
        %v2871 = vmul.f32 %v2776, %v2776
        %v2872 = vmul.f32 %v2779, %v2779
        %v2873 = vadd.f32 %v2841, %v2842
        %v2874 = vadd.f32 %v2873, %v2843
        %v2875 = vadd.f32 %v2874, %v2844
        %v2876 = vadd.f32 %v2875, %v2845
        %v2877 = vadd.f32 %v2876, %v2846
        %v2878 = vadd.f32 %v2877, %v2847
        %v2879 = vadd.f32 %v2878, %v2848
        %v2880 = vadd.f32 %v2879, %v2849
        %v2881 = vadd.f32 %v2880, %v2850
        %v2882 = vadd.f32 %v2881, %v2851
        %v2883 = vadd.f32 %v2882, %v2852
        %v2884 = vadd.f32 %v2883, %v2853
        %v2885 = vadd.f32 %v2884, %v2854
        %v2886 = vadd.f32 %v2885, %v2855
        %v2887 = vadd.f32 %v2886, %v2856
        %v2888 = vadd.f32 %v2887, %v2857
        %v2889 = vadd.f32 %v2888, %v2858
        %v2890 = vadd.f32 %v2889, %v2859
        %v2891 = vadd.f32 %v2890, %v2860
        %v2892 = vadd.f32 %v2891, %v2861
        %v2893 = vadd.f32 %v2892, %v2862
        %v2894 = vadd.f32 %v2893, %v2863
        %v2895 = vadd.f32 %v2894, %v2864
        %v2896 = vadd.f32 %v2895, %v2865
        %v2897 = vadd.f32 %v2896, %v2866
        %v2898 = vadd.f32 %v2897, %v2867
        %v2899 = vadd.f32 %v2898, %v2868
        %v2900 = vadd.f32 %v2899, %v2869
        %v2901 = vadd.f32 %v2900, %v2870
        %v2902 = vadd.f32 %v2901, %v2871
        %v2903 = vadd.f32 %v2902, %v2872
        %v2904 = vrot.slane %v2903, 4
        %v2905 = vadd.f32 %v2903, %v2904
        %v2906 = vrot.slane %v2905, 2
        %v2907 = vadd.f32 %v2905, %v2906
        %v2908 = vrot.slane %v2907, 1
        %v2909 = vadd.f32 %v2907, %v2908
        %v2910 = vsel %vm654, %v2840, %v2909
        %2911 = vmatprep.subr.mxu0 0.0
        %2912 = vmatpush1.msra.mxu0 %v2782
        %2913 = vmatprep.subr.mxu0 0.0
        %2914 = vmatpush1.msra.mxu0 %v2783
        %2915 = vmatprep.subr.mxu0 0.0
        %2916 = vmatpush1.msra.mxu0 %v2784
        %2917 = vmatprep.subr.mxu0 0.0
        %2918 = vmatpush1.msra.mxu0 %v2785
        %2919 = vmatprep.subr.mxu0 0.0
        %2920 = vmatpush1.msra.mxu0 %v2786
        %2921 = vmatprep.subr.mxu0 0.0
        %2922 = vmatpush1.msra.mxu0 %v2787
        %2923 = vmatprep.subr.mxu0 0.0
        %2924 = vmatpush1.msra.mxu0 %v2788
        %2925 = vmatprep.subr.mxu0 0.0
        %2926 = vmatpush1.msra.mxu0 %v2789
        %2927 = vmatprep.subr.mxu0 0.0
        %2928 = vmatpush1.msra.mxu0 %v2790
        %2929 = vmatprep.subr.mxu0 0.0
        %2930 = vmatpush1.msra.mxu0 %v2791
        %2931 = vmatprep.subr.mxu0 0.0
        %2932 = vmatpush1.msra.mxu0 %v2792
        %2933 = vmatprep.subr.mxu0 0.0
        %2934 = vmatpush1.msra.mxu0 %v2793
        %2935 = vmatprep.subr.mxu0 0.0
        %2936 = vmatpush1.msra.mxu0 %v2794
        %2937 = vmatprep.subr.mxu0 0.0
        %2938 = vmatpush1.msra.mxu0 %v2795
        %2939 = vmatprep.subr.mxu0 0.0
        %2940 = vmatpush1.msra.mxu0 %v2796
        %2941 = vmatprep.subr.mxu0 0.0
        %2942 = vmatpush1.msra.mxu0 %v2797
        %2943 = vmatprep.subr.mxu0 0.0
        %2944 = vmatpush1.msra.mxu0 0.0
        %2945 = vmatprep.subr.mxu0 0.0
        %2946 = vmatpush1.msra.mxu0 0.0
        %2947 = vmatprep.subr.mxu0 0.0
        %2948 = vmatpush1.msra.mxu0 0.0
        %2949 = vmatprep.subr.mxu0 0.0
        %2950 = vmatpush1.msra.mxu0 0.0
        %2951 = vmatprep.subr.mxu0 0.0
        %2952 = vmatpush1.msra.mxu0 0.0
        %2953 = vmatprep.subr.mxu0 0.0
        %2954 = vmatpush1.msra.mxu0 0.0
        %2955 = vmatprep.subr.mxu0 0.0
        %2956 = vmatpush1.msra.mxu0 0.0
        %2957 = vmatprep.subr.mxu0 0.0
        %2958 = vmatpush1.msra.mxu0 0.0
        %2959 = vmatprep.subr.mxu0 0.0
        %2960 = vmatpush1.msra.mxu0 0.0
        %2961 = vmatprep.subr.mxu0 0.0
        %2962 = vmatpush1.msra.mxu0 0.0
        %2963 = vmatprep.subr.mxu0 0.0
        %2964 = vmatpush1.msra.mxu0 0.0
        %2965 = vmatprep.subr.mxu0 0.0
        %2966 = vmatpush1.msra.mxu0 0.0
        %2967 = vmatprep.subr.mxu0 0.0
        %2968 = vmatpush1.msra.mxu0 0.0
        %2969 = vmatprep.subr.mxu0 0.0
        %2970 = vmatpush1.msra.mxu0 0.0
        %2971 = vmatprep.subr.mxu0 0.0
        %2972 = vmatpush1.msra.mxu0 0.0
        %2973 = vmatprep.subr.mxu0 0.0
        %2974 = vmatpush1.msra.mxu0 0.0
        %2975 = vmatprep.mubr.f32.mxu0 0.0
        %2976 = vmatmul.mubr.f32.gmra.mrb[0].mxu0 %v2910
        %v2977 = vpop.f32.mrb[0].mxu0
        %v2978 = vadd.f32 0.0, %v2977
        %v2979 = vpop.f32.mrb[0].mxu0
        %2980 = vdwg.mxu0
        %v2981 = vmul.f32 %v2978, 0.0009765625
        %v2982 = vmul.f32 %v2981, %v2981
        %v2984 = vrot.slane %v2982, 7
        %v2986 = vsub.f32 %v2981, %v2984
        %v2987 = vmax.f32 %v2986, 0.0
        %v2988 = vadd.f32 %v2987, 1e-06
        %v2989 = vrsqrt.pop %v2988
        %v2990 = vsel %vm654, %v2981, %v2989
        %v2992 = vsel %vm736, %v2990, 0
        %2994 = vmatprep.subr.mxu0 0.0
        %2995 = vmatpush1.msra.mxu0 %v2798
        %2996 = vmatprep.subr.mxu0 0.0
        %2997 = vmatpush1.msra.mxu0 %v2799
        %2998 = vmatprep.subr.mxu0 0.0
        %2999 = vmatpush1.msra.mxu0 %v2800
        %3000 = vmatprep.subr.mxu0 0.0
        %3001 = vmatpush1.msra.mxu0 %v2801
        %3002 = vmatprep.subr.mxu0 0.0
        %3003 = vmatpush1.msra.mxu0 0.0
        %3004 = vmatprep.subr.mxu0 0.0
        %3005 = vmatpush1.msra.mxu0 0.0
        %3006 = vmatprep.subr.mxu0 0.0
        %3007 = vmatpush1.msra.mxu0 0.0
        %3008 = vmatprep.subr.mxu0 0.0
        %3009 = vmatpush1.msra.mxu0 0.0
        %3010 = vmatprep.subr.mxu0 0.0
        %3011 = vmatpush1.msra.mxu0 0.0
        %3012 = vmatprep.subr.mxu0 0.0
        %3013 = vmatpush1.msra.mxu0 0.0
        %3014 = vmatprep.subr.mxu0 0.0
        %3015 = vmatpush1.msra.mxu0 0.0
        %3016 = vmatprep.subr.mxu0 0.0
        %3017 = vmatpush1.msra.mxu0 0.0
        %3018 = vmatprep.subr.mxu0 0.0
        %3019 = vmatpush1.msra.mxu0 0.0
        %3020 = vmatprep.subr.mxu0 0.0
        %3021 = vmatpush1.msra.mxu0 0.0
        %3022 = vmatprep.subr.mxu0 0.0
        %3023 = vmatpush1.msra.mxu0 0.0
        %3024 = vmatprep.subr.mxu0 0.0
        %3025 = vmatpush1.msra.mxu0 0.0
        %3026 = vmatprep.subr.mxu0 0.0
        %3027 = vmatpush1.msra.mxu0 0.0
        %3028 = vmatprep.subr.mxu0 0.0
        %3029 = vmatpush1.msra.mxu0 0.0
        %3030 = vmatprep.subr.mxu0 0.0
        %3031 = vmatpush1.msra.mxu0 0.0
        %3032 = vmatprep.subr.mxu0 0.0
        %3033 = vmatpush1.msra.mxu0 0.0
        %3034 = vmatprep.subr.mxu0 0.0
        %3035 = vmatpush1.msra.mxu0 0.0
        %3036 = vmatprep.subr.mxu0 0.0
        %3037 = vmatpush1.msra.mxu0 0.0
        %3038 = vmatprep.subr.mxu0 0.0
        %3039 = vmatpush1.msra.mxu0 0.0
        %3040 = vmatprep.subr.mxu0 0.0
        %3041 = vmatpush1.msra.mxu0 0.0
        %3042 = vmatprep.subr.mxu0 0.0
        %3043 = vmatpush1.msra.mxu0 0.0
        %3044 = vmatprep.subr.mxu0 0.0
        %3045 = vmatpush1.msra.mxu0 0.0
        %3046 = vmatprep.subr.mxu0 0.0
        %3047 = vmatpush1.msra.mxu0 0.0
        %3048 = vmatprep.subr.mxu0 0.0
        %3049 = vmatpush1.msra.mxu0 0.0
        %3050 = vmatprep.subr.mxu0 0.0
        %3051 = vmatpush1.msra.mxu0 0.0
        %3052 = vmatprep.subr.mxu0 0.0
        %3053 = vmatpush1.msra.mxu0 0.0
        %3054 = vmatprep.subr.mxu0 0.0
        %3055 = vmatpush1.msra.mxu0 0.0
        %3056 = vmatprep.subr.mxu0 0.0
        %3057 = vmatpush1.msra.mxu0 0.0
        %3058 = vmatprep.mubr.f32.mxu0 0.0
        %3059 = vmatmul.mubr.f32.gmra.mrb[0].mxu0 %v2992
        %v3060 = vpop.f32.mrb[0].mxu0
        %v3061 = vadd.f32 0.0, %v3060
        %v3062 = vpop.f32.mrb[0].mxu0
        %3063 = vdwg.mxu0
        %v3064 = vlaneseq
        %v3065 = vshrl.u32 %v3064, 7
        %v3066 = vsub.s32 0, %v3065
        %v3067 = vrot.slane %v3061, %v3066
        %v3068 = vsub.f32 %v2656, %v3067
        %v3069 = vsub.f32 %v2659, %v3067
        %v3070 = vsub.f32 %v2664, %v3067
        %v3071 = vsub.f32 %v2667, %v3067
        %v3072 = vsub.f32 %v2672, %v3067
        %v3073 = vsub.f32 %v2675, %v3067
        %v3074 = vsub.f32 %v2680, %v3067
        %v3075 = vsub.f32 %v2683, %v3067
        %v3076 = vsub.f32 %v2688, %v3067
        %v3077 = vsub.f32 %v2691, %v3067
        %v3078 = vsub.f32 %v2696, %v3067
        %v3079 = vsub.f32 %v2699, %v3067
        %v3080 = vsub.f32 %v2704, %v3067
        %v3081 = vsub.f32 %v2707, %v3067
        %v3082 = vsub.f32 %v2712, %v3067
        %v3083 = vsub.f32 %v2715, %v3067
        %v3084 = vsub.f32 %v2720, %v3067
        %v3085 = vsub.f32 %v2723, %v3067
        %v3086 = vsub.f32 %v2728, %v3067
        %v3087 = vsub.f32 %v2731, %v3067
        %v3088 = vsub.f32 %v2736, %v3067
        %v3089 = vsub.f32 %v2739, %v3067
        %v3090 = vsub.f32 %v2744, %v3067
        %v3091 = vsub.f32 %v2747, %v3067
        %v3092 = vsub.f32 %v2752, %v3067
        %v3093 = vsub.f32 %v2755, %v3067
        %v3094 = vsub.f32 %v2760, %v3067
        %v3095 = vsub.f32 %v2763, %v3067
        %v3096 = vsub.f32 %v2768, %v3067
        %v3097 = vsub.f32 %v2771, %v3067
        %v3098 = vsub.f32 %v2776, %v3067
        %v3099 = vsub.f32 %v2779, %v3067
        %v3101 = vlaneseq
        %v3102 = vshrl.u32 %v3101, 7
        %v3103 = vsub.s32 0, %v3102
        %v3104 = vrot.slane %v2802, %v3103
        %v3106 = vmul.f32 %v3061, %v3104
        %v3107 = vlaneseq
        %v3108 = vshrl.u32 %v3107, 7
        %v3109 = vsub.s32 1, %v3108
        %v3110 = vrot.slane %v3106, %v3109
        %v3111 = vmul.f32 %v3068, %v3110
        %v3112 = vmul.f32 %v3069, %v3110
        %v3113 = vmul.f32 %v3070, %v3110
        %v3114 = vmul.f32 %v3071, %v3110
        %v3115 = vmul.f32 %v3072, %v3110
        %v3116 = vmul.f32 %v3073, %v3110
        %v3117 = vmul.f32 %v3074, %v3110
        %v3118 = vmul.f32 %v3075, %v3110
        %v3119 = vmul.f32 %v3076, %v3110
        %v3120 = vmul.f32 %v3077, %v3110
        %v3121 = vmul.f32 %v3078, %v3110
        %v3122 = vmul.f32 %v3079, %v3110
        %v3123 = vmul.f32 %v3080, %v3110
        %v3124 = vmul.f32 %v3081, %v3110
        %v3125 = vmul.f32 %v3082, %v3110
        %v3126 = vmul.f32 %v3083, %v3110
        %v3127 = vmul.f32 %v3084, %v3110
        %v3128 = vmul.f32 %v3085, %v3110
        %v3129 = vmul.f32 %v3086, %v3110
        %v3130 = vmul.f32 %v3087, %v3110
        %v3131 = vmul.f32 %v3088, %v3110
        %v3132 = vmul.f32 %v3089, %v3110
        %v3133 = vmul.f32 %v3090, %v3110
        %v3134 = vmul.f32 %v3091, %v3110
        %v3135 = vmul.f32 %v3092, %v3110
        %v3136 = vmul.f32 %v3093, %v3110
        %v3137 = vmul.f32 %v3094, %v3110
        %v3138 = vmul.f32 %v3095, %v3110
        %v3139 = vmul.f32 %v3096, %v3110
        %v3140 = vmul.f32 %v3097, %v3110
        %v3141 = vmul.f32 %v3098, %v3110
        %v3142 = vmul.f32 %v3099, %v3110
        %v3144 = vlaneseq
        %v3145 = vshrl.u32 %v3144, 7
        %v3146 = vsub.s32 0, %v3145
        %v3147 = vrot.slane %v2803, %v3146
        %v3149 = vadd.f32 %v3111, %v3147
        %v3150 = vadd.f32 %v3112, %v3147
        %v3151 = vadd.f32 %v3113, %v3147
        %v3152 = vadd.f32 %v3114, %v3147
        %v3153 = vadd.f32 %v3115, %v3147
        %v3154 = vadd.f32 %v3116, %v3147
        %v3155 = vadd.f32 %v3117, %v3147
        %v3156 = vadd.f32 %v3118, %v3147
        %v3157 = vadd.f32 %v3119, %v3147
        %v3158 = vadd.f32 %v3120, %v3147
        %v3159 = vadd.f32 %v3121, %v3147
        %v3160 = vadd.f32 %v3122, %v3147
        %v3161 = vadd.f32 %v3123, %v3147
        %v3162 = vadd.f32 %v3124, %v3147
        %v3163 = vadd.f32 %v3125, %v3147
        %v3164 = vadd.f32 %v3126, %v3147
        %v3165 = vadd.f32 %v3127, %v3147
        %v3166 = vadd.f32 %v3128, %v3147
        %v3167 = vadd.f32 %v3129, %v3147
        %v3168 = vadd.f32 %v3130, %v3147
        %v3169 = vadd.f32 %v3131, %v3147
        %v3170 = vadd.f32 %v3132, %v3147
        %v3171 = vadd.f32 %v3133, %v3147
        %v3172 = vadd.f32 %v3134, %v3147
        %v3173 = vadd.f32 %v3135, %v3147
        %v3174 = vadd.f32 %v3136, %v3147
        %v3175 = vadd.f32 %v3137, %v3147
        %v3176 = vadd.f32 %v3138, %v3147
        %v3177 = vadd.f32 %v3139, %v3147
        %v3178 = vadd.f32 %v3140, %v3147
        %v3179 = vadd.f32 %v3141, %v3147
        %v3180 = vadd.f32 %v3142, %v3147
        %v3181 = vxor.u32 %v3149, 2147483648
        %v3182 = vxor.u32 %v3150, 2147483648
        %v3183 = vxor.u32 %v3151, 2147483648
        %v3184 = vxor.u32 %v3152, 2147483648
        %v3185 = vxor.u32 %v3153, 2147483648
        %v3186 = vxor.u32 %v3154, 2147483648
        %v3187 = vxor.u32 %v3155, 2147483648
        %v3188 = vxor.u32 %v3156, 2147483648
        %v3189 = vxor.u32 %v3157, 2147483648
        %v3190 = vxor.u32 %v3158, 2147483648
        %v3191 = vxor.u32 %v3159, 2147483648
        %v3192 = vxor.u32 %v3160, 2147483648
        %v3193 = vxor.u32 %v3161, 2147483648
        %v3194 = vxor.u32 %v3162, 2147483648
        %v3195 = vxor.u32 %v3163, 2147483648
        %v3196 = vxor.u32 %v3164, 2147483648
        %v3197 = vxor.u32 %v3165, 2147483648
        %v3198 = vxor.u32 %v3166, 2147483648
        %v3199 = vxor.u32 %v3167, 2147483648
        %v3200 = vxor.u32 %v3168, 2147483648
        %v3201 = vxor.u32 %v3169, 2147483648
        %v3202 = vxor.u32 %v3170, 2147483648
        %v3203 = vxor.u32 %v3171, 2147483648
        %v3204 = vxor.u32 %v3172, 2147483648
        %v3205 = vxor.u32 %v3173, 2147483648
        %v3206 = vxor.u32 %v3174, 2147483648
        %v3207 = vxor.u32 %v3175, 2147483648
        %v3208 = vxor.u32 %v3176, 2147483648
        %v3209 = vxor.u32 %v3177, 2147483648
        %v3210 = vxor.u32 %v3178, 2147483648
        %v3211 = vxor.u32 %v3179, 2147483648
        %v3212 = vxor.u32 %v3180, 2147483648
        %v3213 = vmul.f32 %v3181, 1.442695
        %v3214 = vpow.pop %v3213
        %v3215 = vmul.f32 %v3182, 1.442695
        %v3216 = vpow.pop %v3215
        %v3217 = vmul.f32 %v3183, 1.442695
        %v3218 = vpow.pop %v3217
        %v3219 = vmul.f32 %v3184, 1.442695
        %v3220 = vpow.pop %v3219
        %v3221 = vmul.f32 %v3185, 1.442695
        %v3222 = vpow.pop %v3221
        %v3223 = vmul.f32 %v3186, 1.442695
        %v3224 = vpow.pop %v3223
        %v3225 = vmul.f32 %v3187, 1.442695
        %v3226 = vpow.pop %v3225
        %v3227 = vmul.f32 %v3188, 1.442695
        %v3228 = vpow.pop %v3227
        %v3229 = vmul.f32 %v3189, 1.442695
        %v3230 = vpow.pop %v3229
        %v3231 = vmul.f32 %v3190, 1.442695
        %v3232 = vpow.pop %v3231
        %v3233 = vmul.f32 %v3191, 1.442695
        %v3234 = vpow.pop %v3233
        %v3235 = vmul.f32 %v3192, 1.442695
        %v3236 = vpow.pop %v3235
        %v3237 = vmul.f32 %v3193, 1.442695
        %v3238 = vpow.pop %v3237
        %v3239 = vmul.f32 %v3194, 1.442695
        %v3240 = vpow.pop %v3239
        %v3241 = vmul.f32 %v3195, 1.442695
        %v3242 = vpow.pop %v3241
        %v3243 = vmul.f32 %v3196, 1.442695
        %v3244 = vpow.pop %v3243
        %v3245 = vmul.f32 %v3197, 1.442695
        %v3246 = vpow.pop %v3245
        %v3247 = vmul.f32 %v3198, 1.442695
        %v3248 = vpow.pop %v3247
        %v3249 = vmul.f32 %v3199, 1.442695
        %v3250 = vpow.pop %v3249
        %v3251 = vmul.f32 %v3200, 1.442695
        %v3252 = vpow.pop %v3251
        %v3253 = vmul.f32 %v3201, 1.442695
        %v3254 = vpow.pop %v3253
        %v3255 = vmul.f32 %v3202, 1.442695
        %v3256 = vpow.pop %v3255
        %v3257 = vmul.f32 %v3203, 1.442695
        %v3258 = vpow.pop %v3257
        %v3259 = vmul.f32 %v3204, 1.442695
        %v3260 = vpow.pop %v3259
        %v3261 = vmul.f32 %v3205, 1.442695
        %v3262 = vpow.pop %v3261
        %v3263 = vmul.f32 %v3206, 1.442695
        %v3264 = vpow.pop %v3263
        %v3265 = vmul.f32 %v3207, 1.442695
        %v3266 = vpow.pop %v3265
        %v3267 = vmul.f32 %v3208, 1.442695
        %v3268 = vpow.pop %v3267
        %v3269 = vmul.f32 %v3209, 1.442695
        %v3270 = vpow.pop %v3269
        %v3271 = vmul.f32 %v3210, 1.442695
        %v3272 = vpow.pop %v3271
        %v3273 = vmul.f32 %v3211, 1.442695
        %v3274 = vpow.pop %v3273
        %v3275 = vmul.f32 %v3212, 1.442695
        %v3276 = vpow.pop %v3275
        %v3277 = vadd.f32 %v3214, 1.0
        %v3278 = vadd.f32 %v3216, 1.0
        %v3279 = vadd.f32 %v3218, 1.0
        %v3280 = vadd.f32 %v3220, 1.0
        %v3281 = vadd.f32 %v3222, 1.0
        %v3282 = vadd.f32 %v3224, 1.0
        %v3283 = vadd.f32 %v3226, 1.0
        %v3284 = vadd.f32 %v3228, 1.0
        %v3285 = vadd.f32 %v3230, 1.0
        %v3286 = vadd.f32 %v3232, 1.0
        %v3287 = vadd.f32 %v3234, 1.0
        %v3288 = vadd.f32 %v3236, 1.0
        %v3289 = vadd.f32 %v3238, 1.0
        %v3290 = vadd.f32 %v3240, 1.0
        %v3291 = vadd.f32 %v3242, 1.0
        %v3292 = vadd.f32 %v3244, 1.0
        %v3293 = vadd.f32 %v3246, 1.0
        %v3294 = vadd.f32 %v3248, 1.0
        %v3295 = vadd.f32 %v3250, 1.0
        %v3296 = vadd.f32 %v3252, 1.0
        %v3297 = vadd.f32 %v3254, 1.0
        %v3298 = vadd.f32 %v3256, 1.0
        %v3299 = vadd.f32 %v3258, 1.0
        %v3300 = vadd.f32 %v3260, 1.0
        %v3301 = vadd.f32 %v3262, 1.0
        %v3302 = vadd.f32 %v3264, 1.0
        %v3303 = vadd.f32 %v3266, 1.0
        %v3304 = vadd.f32 %v3268, 1.0
        %v3305 = vadd.f32 %v3270, 1.0
        %v3306 = vadd.f32 %v3272, 1.0
        %v3307 = vadd.f32 %v3274, 1.0
        %v3308 = vadd.f32 %v3276, 1.0
        %v3309 = vrcp.pop %v3277
        %v3310 = vmul.f32 1.0, %v3309
        %v3311 = vrcp.pop %v3278
        %v3312 = vmul.f32 1.0, %v3311
        %v3313 = vrcp.pop %v3279
        %v3314 = vmul.f32 1.0, %v3313
        %v3315 = vrcp.pop %v3280
        %v3316 = vmul.f32 1.0, %v3315
        %v3317 = vrcp.pop %v3281
        %v3318 = vmul.f32 1.0, %v3317
        %v3319 = vrcp.pop %v3282
        %v3320 = vmul.f32 1.0, %v3319
        %v3321 = vrcp.pop %v3283
        %v3322 = vmul.f32 1.0, %v3321
        %v3323 = vrcp.pop %v3284
        %v3324 = vmul.f32 1.0, %v3323
        %v3325 = vrcp.pop %v3285
        %v3326 = vmul.f32 1.0, %v3325
        %v3327 = vrcp.pop %v3286
        %v3328 = vmul.f32 1.0, %v3327
        %v3329 = vrcp.pop %v3287
        %v3330 = vmul.f32 1.0, %v3329
        %v3331 = vrcp.pop %v3288
        %v3332 = vmul.f32 1.0, %v3331
        %v3333 = vrcp.pop %v3289
        %v3334 = vmul.f32 1.0, %v3333
        %v3335 = vrcp.pop %v3290
        %v3336 = vmul.f32 1.0, %v3335
        %v3337 = vrcp.pop %v3291
        %v3338 = vmul.f32 1.0, %v3337
        %v3339 = vrcp.pop %v3292
        %v3340 = vmul.f32 1.0, %v3339
        %v3341 = vrcp.pop %v3293
        %v3342 = vmul.f32 1.0, %v3341
        %v3343 = vrcp.pop %v3294
        %v3344 = vmul.f32 1.0, %v3343
        %v3345 = vrcp.pop %v3295
        %v3346 = vmul.f32 1.0, %v3345
        %v3347 = vrcp.pop %v3296
        %v3348 = vmul.f32 1.0, %v3347
        %v3349 = vrcp.pop %v3297
        %v3350 = vmul.f32 1.0, %v3349
        %v3351 = vrcp.pop %v3298
        %v3352 = vmul.f32 1.0, %v3351
        %v3353 = vrcp.pop %v3299
        %v3354 = vmul.f32 1.0, %v3353
        %v3355 = vrcp.pop %v3300
        %v3356 = vmul.f32 1.0, %v3355
        %v3357 = vrcp.pop %v3301
        %v3358 = vmul.f32 1.0, %v3357
        %v3359 = vrcp.pop %v3302
        %v3360 = vmul.f32 1.0, %v3359
        %v3361 = vrcp.pop %v3303
        %v3362 = vmul.f32 1.0, %v3361
        %v3363 = vrcp.pop %v3304
        %v3364 = vmul.f32 1.0, %v3363
        %v3365 = vrcp.pop %v3305
        %v3366 = vmul.f32 1.0, %v3365
        %v3367 = vrcp.pop %v3306
        %v3368 = vmul.f32 1.0, %v3367
        %v3369 = vrcp.pop %v3307
        %v3370 = vmul.f32 1.0, %v3369
        %v3371 = vrcp.pop %v3308
        %v3372 = vmul.f32 1.0, %v3371
        %v3373 = vmul.f32 %v3149, %v3310
        %v3374 = vmul.f32 %v3150, %v3312
        %v3375 = vmul.f32 %v3151, %v3314
        %v3376 = vmul.f32 %v3152, %v3316
        %v3377 = vmul.f32 %v3153, %v3318
        %v3378 = vmul.f32 %v3154, %v3320
        %v3379 = vmul.f32 %v3155, %v3322
        %v3380 = vmul.f32 %v3156, %v3324
        %v3381 = vmul.f32 %v3157, %v3326
        %v3382 = vmul.f32 %v3158, %v3328
        %v3383 = vmul.f32 %v3159, %v3330
        %v3384 = vmul.f32 %v3160, %v3332
        %v3385 = vmul.f32 %v3161, %v3334
        %v3386 = vmul.f32 %v3162, %v3336
        %v3387 = vmul.f32 %v3163, %v3338
        %v3388 = vmul.f32 %v3164, %v3340
        %v3389 = vmul.f32 %v3165, %v3342
        %v3390 = vmul.f32 %v3166, %v3344
        %v3391 = vmul.f32 %v3167, %v3346
        %v3392 = vmul.f32 %v3168, %v3348
        %v3393 = vmul.f32 %v3169, %v3350
        %v3394 = vmul.f32 %v3170, %v3352
        %v3395 = vmul.f32 %v3171, %v3354
        %v3396 = vmul.f32 %v3172, %v3356
        %v3397 = vmul.f32 %v3173, %v3358
        %v3398 = vmul.f32 %v3174, %v3360
        %v3399 = vmul.f32 %v3175, %v3362
        %v3400 = vmul.f32 %v3176, %v3364
        %v3401 = vmul.f32 %v3177, %v3366
        %v3402 = vmul.f32 %v3178, %v3368
        %v3403 = vmul.f32 %v3179, %v3370
        %v3404 = vmul.f32 %v3180, %v3372
        %v3405 = vpack.c.bf16 %v3374, %v3373
        %v3406 = vpack.c.bf16 %v3376, %v3375
        %v3407 = vpack.c.bf16 %v3378, %v3377
        %v3408 = vpack.c.bf16 %v3380, %v3379
        %v3409 = vpack.c.bf16 %v3382, %v3381
        %v3410 = vpack.c.bf16 %v3384, %v3383
        %v3411 = vpack.c.bf16 %v3386, %v3385
        %v3412 = vpack.c.bf16 %v3388, %v3387
        %v3413 = vpack.c.bf16 %v3390, %v3389
        %v3414 = vpack.c.bf16 %v3392, %v3391
        %v3415 = vpack.c.bf16 %v3394, %v3393
        %v3416 = vpack.c.bf16 %v3396, %v3395
        %v3417 = vpack.c.bf16 %v3398, %v3397
        %v3418 = vpack.c.bf16 %v3400, %v3399
        %v3419 = vpack.c.bf16 %v3402, %v3401
        %v3420 = vpack.c.bf16 %v3404, %v3403
        %v3421 = vld [vmem:[%s11] sm:$0xf]
        %v3422 = vld [vmem:[%s11 + $0x4] sm:$0xf]
        %v3423 = vld [vmem:[%s11 + $0x8] sm:$0xf]
        %v3424 = vld [vmem:[%s11 + $0xc] sm:$0xf]
        %v3425 = vld [vmem:[%s11 + $0x10] sm:$0xf]
        %v3426 = vld [vmem:[%s11 + $0x14] sm:$0xf]
        %v3427 = vld [vmem:[%s11 + $0x18] sm:$0xf]
        %v3428 = vld [vmem:[%s11 + $0x1c] sm:$0xf]
        %v3429 = vld [vmem:[%s11 + $0x20] sm:$0xf]
        %v3430 = vld [vmem:[%s11 + $0x24] sm:$0xf]
        %v3431 = vld [vmem:[%s11 + $0x28] sm:$0xf]
        %v3432 = vld [vmem:[%s11 + $0x2c] sm:$0xf]
        %v3433 = vld [vmem:[%s11 + $0x30] sm:$0xf]
        %v3434 = vld [vmem:[%s11 + $0x34] sm:$0xf]
        %v3435 = vld [vmem:[%s11 + $0x38] sm:$0xf]
        %v3436 = vld [vmem:[%s11 + $0x3c] sm:$0xf]
        %v3437 = vld [vmem:[%s11 + $0x40] sm:$0xf]
        %v3438 = vld [vmem:[%s11 + $0x44] sm:$0xf]
        %v3439 = vld [vmem:[%s11 + $0x48] sm:$0xf]
        %v3440 = vld [vmem:[%s11 + $0x4c] sm:$0xf]
        %v3441 = vld [vmem:[%s11 + $0x50] sm:$0xf]
        %v3442 = vld [vmem:[%s11 + $0x54] sm:$0xf]
        %v3443 = vld [vmem:[%s11 + $0x58] sm:$0xf]
        %v3444 = vld [vmem:[%s11 + $0x5c] sm:$0xf]
        %v3445 = vld [vmem:[%s11 + $0x60] sm:$0xf]
        %v3446 = vld [vmem:[%s11 + $0x64] sm:$0xf]
        %v3447 = vld [vmem:[%s11 + $0x68] sm:$0xf]
        %v3448 = vld [vmem:[%s11 + $0x6c] sm:$0xf]
        %v3449 = vld [vmem:[%s11 + $0x70] sm:$0xf]
        %v3450 = vld [vmem:[%s11 + $0x74] sm:$0xf]
        %v3451 = vld [vmem:[%s11 + $0x78] sm:$0xf]
        %v3452 = vld [vmem:[%s11 + $0x7c] sm:$0xf]
        %v3453 = vld [vmem:[%s11 + $0x80] sm:$0xf]
        %v3454 = vld [vmem:[%s11 + $0x84] sm:$0xf]
        %v3455 = vld [vmem:[%s11 + $0x88] sm:$0xf]
        %v3456 = vld [vmem:[%s11 + $0x8c] sm:$0xf]
        %v3457 = vld [vmem:[%s11 + $0x90] sm:$0xf]
        %v3458 = vld [vmem:[%s11 + $0x94] sm:$0xf]
        %v3459 = vld [vmem:[%s11 + $0x98] sm:$0xf]
        %v3460 = vld [vmem:[%s11 + $0x9c] sm:$0xf]
        %v3461 = vld [vmem:[%s11 + $0xa0] sm:$0xf]
        %v3462 = vld [vmem:[%s11 + $0xa4] sm:$0xf]
        %v3463 = vld [vmem:[%s11 + $0xa8] sm:$0xf]
        %v3464 = vld [vmem:[%s11 + $0xac] sm:$0xf]
        %v3465 = vld [vmem:[%s11 + $0xb0] sm:$0xf]
        %v3466 = vld [vmem:[%s11 + $0xb4] sm:$0xf]
        %v3467 = vld [vmem:[%s11 + $0xb8] sm:$0xf]
        %v3468 = vld [vmem:[%s11 + $0xbc] sm:$0xf]
        %v3469 = vld [vmem:[%s11 + $0xc0] sm:$0xf]
        %v3470 = vld [vmem:[%s11 + $0xc4] sm:$0xf]
        %v3471 = vld [vmem:[%s11 + $0xc8] sm:$0xf]
        %v3472 = vld [vmem:[%s11 + $0xcc] sm:$0xf]
        %v3473 = vld [vmem:[%s11 + $0xd0] sm:$0xf]
        %v3474 = vld [vmem:[%s11 + $0xd4] sm:$0xf]
        %v3475 = vld [vmem:[%s11 + $0xd8] sm:$0xf]
        %v3476 = vld [vmem:[%s11 + $0xdc] sm:$0xf]
        %v3477 = vld [vmem:[%s11 + $0xe0] sm:$0xf]
        %v3478 = vld [vmem:[%s11 + $0xe4] sm:$0xf]
        %v3479 = vld [vmem:[%s11 + $0xe8] sm:$0xf]
        %v3480 = vld [vmem:[%s11 + $0xec] sm:$0xf]
        %v3481 = vld [vmem:[%s11 + $0xf0] sm:$0xf]
        %v3482 = vld [vmem:[%s11 + $0xf4] sm:$0xf]
        %v3483 = vld [vmem:[%s11 + $0xf8] sm:$0xf]
        %v3484 = vld [vmem:[%s11 + $0xfc] sm:$0xf]
        %v3485 = vld [vmem:[%s11 + $0x100] sm:$0xf]
        %v3486 = vld [vmem:[%s11 + $0x104] sm:$0xf]
        %v3487 = vld [vmem:[%s11 + $0x108] sm:$0xf]
        %v3488 = vld [vmem:[%s11 + $0x10c] sm:$0xf]
        %v3489 = vld [vmem:[%s11 + $0x110] sm:$0xf]
        %v3490 = vld [vmem:[%s11 + $0x114] sm:$0xf]
        %v3491 = vld [vmem:[%s11 + $0x118] sm:$0xf]
        %v3492 = vld [vmem:[%s11 + $0x11c] sm:$0xf]
        %v3493 = vld [vmem:[%s11 + $0x120] sm:$0xf]
        %v3494 = vld [vmem:[%s11 + $0x124] sm:$0xf]
        %v3495 = vld [vmem:[%s11 + $0x128] sm:$0xf]
        %v3496 = vld [vmem:[%s11 + $0x12c] sm:$0xf]
        %v3497 = vld [vmem:[%s11 + $0x130] sm:$0xf]
        %v3498 = vld [vmem:[%s11 + $0x134] sm:$0xf]
        %v3499 = vld [vmem:[%s11 + $0x138] sm:$0xf]
        %v3500 = vld [vmem:[%s11 + $0x13c] sm:$0xf]
        %v3501 = vld [vmem:[%s11 + $0x140] sm:$0xf]
        %v3502 = vld [vmem:[%s11 + $0x144] sm:$0xf]
        %v3503 = vld [vmem:[%s11 + $0x148] sm:$0xf]
        %v3504 = vld [vmem:[%s11 + $0x14c] sm:$0xf]
        %v3505 = vld [vmem:[%s11 + $0x150] sm:$0xf]
        %v3506 = vld [vmem:[%s11 + $0x154] sm:$0xf]
        %v3507 = vld [vmem:[%s11 + $0x158] sm:$0xf]
        %v3508 = vld [vmem:[%s11 + $0x15c] sm:$0xf]
        %v3509 = vld [vmem:[%s11 + $0x160] sm:$0xf]
        %v3510 = vld [vmem:[%s11 + $0x164] sm:$0xf]
        %v3511 = vld [vmem:[%s11 + $0x168] sm:$0xf]
        %v3512 = vld [vmem:[%s11 + $0x16c] sm:$0xf]
        %v3513 = vld [vmem:[%s11 + $0x170] sm:$0xf]
        %v3514 = vld [vmem:[%s11 + $0x174] sm:$0xf]
        %v3515 = vld [vmem:[%s11 + $0x178] sm:$0xf]
        %v3516 = vld [vmem:[%s11 + $0x17c] sm:$0xf]
        %v3517 = vld [vmem:[%s11 + $0x180] sm:$0xf]
        %v3518 = vld [vmem:[%s11 + $0x184] sm:$0xf]
        %v3519 = vld [vmem:[%s11 + $0x188] sm:$0xf]
        %v3520 = vld [vmem:[%s11 + $0x18c] sm:$0xf]
        %v3521 = vld [vmem:[%s11 + $0x190] sm:$0xf]
        %v3522 = vld [vmem:[%s11 + $0x194] sm:$0xf]
        %v3523 = vld [vmem:[%s11 + $0x198] sm:$0xf]
        %v3524 = vld [vmem:[%s11 + $0x19c] sm:$0xf]
        %v3525 = vld [vmem:[%s11 + $0x1a0] sm:$0xf]
        %v3526 = vld [vmem:[%s11 + $0x1a4] sm:$0xf]
        %v3527 = vld [vmem:[%s11 + $0x1a8] sm:$0xf]
        %v3528 = vld [vmem:[%s11 + $0x1ac] sm:$0xf]
        %v3529 = vld [vmem:[%s11 + $0x1b0] sm:$0xf]
        %v3530 = vld [vmem:[%s11 + $0x1b4] sm:$0xf]
        %v3531 = vld [vmem:[%s11 + $0x1b8] sm:$0xf]
        %v3532 = vld [vmem:[%s11 + $0x1bc] sm:$0xf]
        %v3533 = vld [vmem:[%s11 + $0x1c0] sm:$0xf]
        %v3534 = vld [vmem:[%s11 + $0x1c4] sm:$0xf]
        %v3535 = vld [vmem:[%s11 + $0x1c8] sm:$0xf]
        %v3536 = vld [vmem:[%s11 + $0x1cc] sm:$0xf]
        %v3537 = vld [vmem:[%s11 + $0x1d0] sm:$0xf]
        %v3538 = vld [vmem:[%s11 + $0x1d4] sm:$0xf]
        %v3539 = vld [vmem:[%s11 + $0x1d8] sm:$0xf]
        %v3540 = vld [vmem:[%s11 + $0x1dc] sm:$0xf]
        %v3541 = vld [vmem:[%s11 + $0x1e0] sm:$0xf]
        %v3542 = vld [vmem:[%s11 + $0x1e4] sm:$0xf]
        %v3543 = vld [vmem:[%s11 + $0x1e8] sm:$0xf]
        %v3544 = vld [vmem:[%s11 + $0x1ec] sm:$0xf]
        %v3545 = vld [vmem:[%s11 + $0x1f0] sm:$0xf]
        %v3546 = vld [vmem:[%s11 + $0x1f4] sm:$0xf]
        %v3547 = vld [vmem:[%s11 + $0x1f8] sm:$0xf]
        %v3548 = vld [vmem:[%s11 + $0x1fc] sm:$0xf]
        %v3549 = vld [vmem:[%s11 + $0x200] sm:$0xf]
        %v3550 = vld [vmem:[%s11 + $0x204] sm:$0xf]
        %v3551 = vld [vmem:[%s11 + $0x208] sm:$0xf]
        %v3552 = vld [vmem:[%s11 + $0x20c] sm:$0xf]
        %v3553 = vld [vmem:[%s11 + $0x210] sm:$0xf]
        %v3554 = vld [vmem:[%s11 + $0x214] sm:$0xf]
        %v3555 = vld [vmem:[%s11 + $0x218] sm:$0xf]
        %v3556 = vld [vmem:[%s11 + $0x21c] sm:$0xf]
        %v3557 = vld [vmem:[%s11 + $0x220] sm:$0xf]
        %v3558 = vld [vmem:[%s11 + $0x224] sm:$0xf]
        %v3559 = vld [vmem:[%s11 + $0x228] sm:$0xf]
        %v3560 = vld [vmem:[%s11 + $0x22c] sm:$0xf]
        %v3561 = vld [vmem:[%s11 + $0x230] sm:$0xf]
        %v3562 = vld [vmem:[%s11 + $0x234] sm:$0xf]
        %v3563 = vld [vmem:[%s11 + $0x238] sm:$0xf]
        %v3564 = vld [vmem:[%s11 + $0x23c] sm:$0xf]
        %v3565 = vld [vmem:[%s12] sm:$0x1]
        %v3567 = vshrl.u32 %v3405, 16
        %v3569 = vrot.slane %v3567, 7
        %v3570 = vshll.u32 %v3405, 16
        %v3572 = vor.u32 %v3569, %v3570
        %v3574 = vshrl.u32 %v3406, 16
        %v3576 = vrot.slane %v3574, 7
        %v3577 = vshll.u32 %v3406, 16
        %v3579 = vor.u32 %v3576, %v3577
        %v3581 = vshrl.u32 %v3407, 16
        %v3583 = vrot.slane %v3581, 7
        %v3584 = vshll.u32 %v3407, 16
        %v3586 = vor.u32 %v3583, %v3584
        %v3588 = vshrl.u32 %v3408, 16
        %v3590 = vrot.slane %v3588, 7
        %v3591 = vshll.u32 %v3408, 16
        %v3593 = vor.u32 %v3590, %v3591
        %v3595 = vshrl.u32 %v3409, 16
        %v3597 = vrot.slane %v3595, 7
        %v3598 = vshll.u32 %v3409, 16
        %v3600 = vor.u32 %v3597, %v3598
        %v3602 = vshrl.u32 %v3410, 16
        %v3604 = vrot.slane %v3602, 7
        %v3605 = vshll.u32 %v3410, 16
        %v3607 = vor.u32 %v3604, %v3605
        %v3609 = vshrl.u32 %v3411, 16
        %v3611 = vrot.slane %v3609, 7
        %v3612 = vshll.u32 %v3411, 16
        %v3614 = vor.u32 %v3611, %v3612
        %v3616 = vshrl.u32 %v3412, 16
        %v3618 = vrot.slane %v3616, 7
        %v3619 = vshll.u32 %v3412, 16
        %v3621 = vor.u32 %v3618, %v3619
        %v3623 = vshrl.u32 %v3413, 16
        %v3625 = vrot.slane %v3623, 7
        %v3626 = vshll.u32 %v3413, 16
        %v3628 = vor.u32 %v3625, %v3626
        %v3630 = vshrl.u32 %v3414, 16
        %v3632 = vrot.slane %v3630, 7
        %v3633 = vshll.u32 %v3414, 16
        %v3635 = vor.u32 %v3632, %v3633
        %v3637 = vshrl.u32 %v3415, 16
        %v3639 = vrot.slane %v3637, 7
        %v3640 = vshll.u32 %v3415, 16
        %v3642 = vor.u32 %v3639, %v3640
        %v3644 = vshrl.u32 %v3416, 16
        %v3646 = vrot.slane %v3644, 7
        %v3647 = vshll.u32 %v3416, 16
        %v3649 = vor.u32 %v3646, %v3647
        %v3651 = vshrl.u32 %v3417, 16
        %v3653 = vrot.slane %v3651, 7
        %v3654 = vshll.u32 %v3417, 16
        %v3656 = vor.u32 %v3653, %v3654
        %v3658 = vshrl.u32 %v3418, 16
        %v3660 = vrot.slane %v3658, 7
        %v3661 = vshll.u32 %v3418, 16
        %v3663 = vor.u32 %v3660, %v3661
        %v3665 = vshrl.u32 %v3419, 16
        %v3667 = vrot.slane %v3665, 7
        %v3668 = vshll.u32 %v3419, 16
        %v3670 = vor.u32 %v3667, %v3668
        %v3672 = vshrl.u32 %v3420, 16
        %v3674 = vrot.slane %v3672, 7
        %v3675 = vshll.u32 %v3420, 16
        %v3677 = vor.u32 %v3674, %v3675
        %v3694 = vsel %vm1450, 0, %v3572
        %v3695 = vsel %vm1450, 0, %v3579
        %v3696 = vsel %vm1450, 0, %v3586
        %v3697 = vsel %vm1450, 0, %v3593
        %v3698 = vsel %vm1450, 0, %v3600
        %v3699 = vsel %vm1450, 0, %v3607
        %v3700 = vsel %vm1450, 0, %v3614
        %v3701 = vsel %vm1450, 0, %v3621
        %v3702 = vsel %vm1450, 0, %v3628
        %v3703 = vsel %vm1450, 0, %v3635
        %v3704 = vsel %vm1450, 0, %v3642
        %v3705 = vsel %vm1450, 0, %v3649
        %v3706 = vsel %vm1450, 0, %v3656
        %v3707 = vsel %vm1450, 0, %v3663
        %v3708 = vsel %vm1450, 0, %v3670
        %v3709 = vsel %vm1450, 0, %v3677
        %v3710 = vrot.slane %v3570, 1
        %v3711 = vor.u32 %v3567, %v3710
        %v3712 = vrot.slane %v3577, 1
        %v3713 = vor.u32 %v3574, %v3712
        %v3714 = vrot.slane %v3584, 1
        %v3715 = vor.u32 %v3581, %v3714
        %v3716 = vrot.slane %v3591, 1
        %v3717 = vor.u32 %v3588, %v3716
        %v3718 = vrot.slane %v3598, 1
        %v3719 = vor.u32 %v3595, %v3718
        %v3720 = vrot.slane %v3605, 1
        %v3721 = vor.u32 %v3602, %v3720
        %v3722 = vrot.slane %v3612, 1
        %v3723 = vor.u32 %v3609, %v3722
        %v3724 = vrot.slane %v3619, 1
        %v3725 = vor.u32 %v3616, %v3724
        %v3726 = vrot.slane %v3626, 1
        %v3727 = vor.u32 %v3623, %v3726
        %v3728 = vrot.slane %v3633, 1
        %v3729 = vor.u32 %v3630, %v3728
        %v3730 = vrot.slane %v3640, 1
        %v3731 = vor.u32 %v3637, %v3730
        %v3732 = vrot.slane %v3647, 1
        %v3733 = vor.u32 %v3644, %v3732
        %v3734 = vrot.slane %v3654, 1
        %v3735 = vor.u32 %v3651, %v3734
        %v3736 = vrot.slane %v3661, 1
        %v3737 = vor.u32 %v3658, %v3736
        %v3738 = vrot.slane %v3668, 1
        %v3739 = vor.u32 %v3665, %v3738
        %v3740 = vrot.slane %v3675, 1
        %v3741 = vor.u32 %v3672, %v3740
        %v3758 = vsel %vm1521, %v3711, 0
        %v3759 = vsel %vm1521, %v3713, 0
        %v3760 = vsel %vm1521, %v3715, 0
        %v3761 = vsel %vm1521, %v3717, 0
        %v3762 = vsel %vm1521, %v3719, 0
        %v3763 = vsel %vm1521, %v3721, 0
        %v3764 = vsel %vm1521, %v3723, 0
        %v3765 = vsel %vm1521, %v3725, 0
        %v3766 = vsel %vm1521, %v3727, 0
        %v3767 = vsel %vm1521, %v3729, 0
        %v3768 = vsel %vm1521, %v3731, 0
        %v3769 = vsel %vm1521, %v3733, 0
        %v3770 = vsel %vm1521, %v3735, 0
        %v3771 = vsel %vm1521, %v3737, 0
        %v3772 = vsel %vm1521, %v3739, 0
        %v3773 = vsel %vm1521, %v3741, 0
        %v3775 = vlaneseq
        %v3776 = vshrl.u32 %v3775, 7
        %v3777 = vsub.s32 0, %v3776
        %v3778 = vrot.slane %v3565, %v3777
        %v3924 = vunpack.c.l.b16 %v3421
        %v3925 = vunpack.c.l.b16 %v3422
        %v3926 = vunpack.c.l.b16 %v3423
        %v3927 = vunpack.c.l.b16 %v3424
        %v3928 = vunpack.c.l.b16 %v3425
        %v3929 = vunpack.c.l.b16 %v3426
        %v3930 = vunpack.c.l.b16 %v3427
        %v3931 = vunpack.c.l.b16 %v3428
        %v3932 = vunpack.c.l.b16 %v3429
        %v3933 = vunpack.c.l.b16 %v3430
        %v3934 = vunpack.c.l.b16 %v3431
        %v3935 = vunpack.c.l.b16 %v3432
        %v3936 = vunpack.c.l.b16 %v3433
        %v3937 = vunpack.c.l.b16 %v3434
        %v3938 = vunpack.c.l.b16 %v3435
        %v3939 = vunpack.c.l.b16 %v3436
        %v3940 = vunpack.c.l.b16 %v3437
        %v3941 = vunpack.c.l.b16 %v3438
        %v3942 = vunpack.c.l.b16 %v3439
        %v3943 = vunpack.c.l.b16 %v3440
        %v3944 = vunpack.c.l.b16 %v3441
        %v3945 = vunpack.c.l.b16 %v3442
        %v3946 = vunpack.c.l.b16 %v3443
        %v3947 = vunpack.c.l.b16 %v3444
        %v3948 = vunpack.c.l.b16 %v3445
        %v3949 = vunpack.c.l.b16 %v3446
        %v3950 = vunpack.c.l.b16 %v3447
        %v3951 = vunpack.c.l.b16 %v3448
        %v3952 = vunpack.c.l.b16 %v3449
        %v3953 = vunpack.c.l.b16 %v3450
        %v3954 = vunpack.c.l.b16 %v3451
        %v3955 = vunpack.c.l.b16 %v3452
        %v3956 = vunpack.c.l.b16 %v3453
        %v3957 = vunpack.c.l.b16 %v3454
        %v3958 = vunpack.c.l.b16 %v3455
        %v3959 = vunpack.c.l.b16 %v3456
        %v3960 = vunpack.c.l.b16 %v3457
        %v3961 = vunpack.c.l.b16 %v3458
        %v3962 = vunpack.c.l.b16 %v3459
        %v3963 = vunpack.c.l.b16 %v3460
        %v3964 = vunpack.c.l.b16 %v3461
        %v3965 = vunpack.c.l.b16 %v3462
        %v3966 = vunpack.c.l.b16 %v3463
        %v3967 = vunpack.c.l.b16 %v3464
        %v3968 = vunpack.c.l.b16 %v3465
        %v3969 = vunpack.c.l.b16 %v3466
        %v3970 = vunpack.c.l.b16 %v3467
        %v3971 = vunpack.c.l.b16 %v3468
        %v3972 = vunpack.c.l.b16 %v3469
        %v3973 = vunpack.c.l.b16 %v3470
        %v3974 = vunpack.c.l.b16 %v3471
        %v3975 = vunpack.c.l.b16 %v3472
        %v3976 = vunpack.c.l.b16 %v3473
        %v3977 = vunpack.c.l.b16 %v3474
        %v3978 = vunpack.c.l.b16 %v3475
        %v3979 = vunpack.c.l.b16 %v3476
        %v3980 = vunpack.c.l.b16 %v3477
        %v3981 = vunpack.c.l.b16 %v3478
        %v3982 = vunpack.c.l.b16 %v3479
        %v3983 = vunpack.c.l.b16 %v3480
        %v3984 = vunpack.c.l.b16 %v3481
        %v3985 = vunpack.c.l.b16 %v3482
        %v3986 = vunpack.c.l.b16 %v3483
        %v3987 = vunpack.c.l.b16 %v3484
        %v3988 = vunpack.c.l.b16 %v3485
        %v3989 = vunpack.c.l.b16 %v3486
        %v3990 = vunpack.c.l.b16 %v3487
        %v3991 = vunpack.c.l.b16 %v3488
        %v3992 = vunpack.c.l.b16 %v3489
        %v3993 = vunpack.c.l.b16 %v3490
        %v3994 = vunpack.c.l.b16 %v3491
        %v3995 = vunpack.c.l.b16 %v3492
        %v3996 = vunpack.c.l.b16 %v3493
        %v3997 = vunpack.c.l.b16 %v3494
        %v3998 = vunpack.c.l.b16 %v3495
        %v3999 = vunpack.c.l.b16 %v3496
        %v4000 = vunpack.c.l.b16 %v3497
        %v4001 = vunpack.c.l.b16 %v3498
        %v4002 = vunpack.c.l.b16 %v3499
        %v4003 = vunpack.c.l.b16 %v3500
        %v4004 = vunpack.c.l.b16 %v3501
        %v4005 = vunpack.c.l.b16 %v3502
        %v4006 = vunpack.c.l.b16 %v3503
        %v4007 = vunpack.c.l.b16 %v3504
        %v4008 = vunpack.c.l.b16 %v3505
        %v4009 = vunpack.c.l.b16 %v3506
        %v4010 = vunpack.c.l.b16 %v3507
        %v4011 = vunpack.c.l.b16 %v3508
        %v4012 = vunpack.c.l.b16 %v3509
        %v4013 = vunpack.c.l.b16 %v3510
        %v4014 = vunpack.c.l.b16 %v3511
        %v4015 = vunpack.c.l.b16 %v3512
        %v4016 = vunpack.c.l.b16 %v3513
        %v4017 = vunpack.c.l.b16 %v3514
        %v4018 = vunpack.c.l.b16 %v3515
        %v4019 = vunpack.c.l.b16 %v3516
        %v4020 = vunpack.c.l.b16 %v3517
        %v4021 = vunpack.c.l.b16 %v3518
        %v4022 = vunpack.c.l.b16 %v3519
        %v4023 = vunpack.c.l.b16 %v3520
        %v4024 = vunpack.c.l.b16 %v3521
        %v4025 = vunpack.c.l.b16 %v3522
        %v4026 = vunpack.c.l.b16 %v3523
        %v4027 = vunpack.c.l.b16 %v3524
        %v4028 = vunpack.c.l.b16 %v3525
        %v4029 = vunpack.c.l.b16 %v3526
        %v4030 = vunpack.c.l.b16 %v3527
        %v4031 = vunpack.c.l.b16 %v3528
        %v4032 = vunpack.c.l.b16 %v3529
        %v4033 = vunpack.c.l.b16 %v3530
        %v4034 = vunpack.c.l.b16 %v3531
        %v4035 = vunpack.c.l.b16 %v3532
        %v4036 = vunpack.c.l.b16 %v3533
        %v4037 = vunpack.c.l.b16 %v3534
        %v4038 = vunpack.c.l.b16 %v3535
        %v4039 = vunpack.c.l.b16 %v3536
        %v4040 = vunpack.c.l.b16 %v3537
        %v4041 = vunpack.c.l.b16 %v3538
        %v4042 = vunpack.c.l.b16 %v3539
        %v4043 = vunpack.c.l.b16 %v3540
        %v4044 = vunpack.c.l.b16 %v3541
        %v4045 = vunpack.c.l.b16 %v3542
        %v4046 = vunpack.c.l.b16 %v3543
        %v4047 = vunpack.c.l.b16 %v3544
        %v4048 = vunpack.c.l.b16 %v3545
        %v4049 = vunpack.c.l.b16 %v3546
        %v4050 = vunpack.c.l.b16 %v3547
        %v4051 = vunpack.c.l.b16 %v3548
        %v4052 = vunpack.c.l.b16 %v3549
        %v4053 = vunpack.c.l.b16 %v3550
        %v4054 = vunpack.c.l.b16 %v3551
        %v4055 = vunpack.c.l.b16 %v3552
        %v4056 = vunpack.c.l.b16 %v3553
        %v4057 = vunpack.c.l.b16 %v3554
        %v4058 = vunpack.c.l.b16 %v3555
        %v4059 = vunpack.c.l.b16 %v3556
        %v4060 = vunpack.c.l.b16 %v3557
        %v4061 = vunpack.c.l.b16 %v3558
        %v4062 = vunpack.c.l.b16 %v3559
        %v4063 = vunpack.c.l.b16 %v3560
        %v4064 = vunpack.c.l.b16 %v3561
        %v4065 = vunpack.c.l.b16 %v3562
        %v4066 = vunpack.c.l.b16 %v3563
        %v4067 = vunpack.c.l.b16 %v3564
        %v4068 = vpack.c.b16 %v3925, %v3924
        %v4069 = vpack.c.b16 %v3927, %v3926
        %v4070 = vpack.c.b16 %v3929, %v3928
        %v4071 = vpack.c.b16 %v3931, %v3930
        %v4072 = vpack.c.b16 %v3933, %v3932
        %v4073 = vpack.c.b16 %v3935, %v3934
        %v4074 = vpack.c.b16 %v3937, %v3936
        %v4075 = vpack.c.b16 %v3939, %v3938
        %v4076 = vpack.c.b16 %v3941, %v3940
        %v4077 = vpack.c.b16 %v3943, %v3942
        %v4078 = vpack.c.b16 %v3945, %v3944
        %v4079 = vpack.c.b16 %v3947, %v3946
        %v4080 = vpack.c.b16 %v3949, %v3948
        %v4081 = vpack.c.b16 %v3951, %v3950
        %v4082 = vpack.c.b16 %v3953, %v3952
        %v4083 = vpack.c.b16 %v3955, %v3954
        %v4084 = vpack.c.b16 %v3957, %v3956
        %v4085 = vpack.c.b16 %v3959, %v3958
        %v4086 = vpack.c.b16 %v3961, %v3960
        %v4087 = vpack.c.b16 %v3963, %v3962
        %v4088 = vpack.c.b16 %v3965, %v3964
        %v4089 = vpack.c.b16 %v3967, %v3966
        %v4090 = vpack.c.b16 %v3969, %v3968
        %v4091 = vpack.c.b16 %v3971, %v3970
        %v4092 = vpack.c.b16 %v3973, %v3972
        %v4093 = vpack.c.b16 %v3975, %v3974
        %v4094 = vpack.c.b16 %v3977, %v3976
        %v4095 = vpack.c.b16 %v3979, %v3978
        %v4096 = vpack.c.b16 %v3981, %v3980
        %v4097 = vpack.c.b16 %v3983, %v3982
        %v4098 = vpack.c.b16 %v3985, %v3984
        %v4099 = vpack.c.b16 %v3987, %v3986
        %v4100 = vpack.c.b16 %v3989, %v3988
        %v4101 = vpack.c.b16 %v3991, %v3990
        %v4102 = vpack.c.b16 %v3993, %v3992
        %v4103 = vpack.c.b16 %v3995, %v3994
        %v4104 = vpack.c.b16 %v3997, %v3996
        %v4105 = vpack.c.b16 %v3999, %v3998
        %v4106 = vpack.c.b16 %v4001, %v4000
        %v4107 = vpack.c.b16 %v4003, %v4002
        %v4108 = vpack.c.b16 %v4005, %v4004
        %v4109 = vpack.c.b16 %v4007, %v4006
        %v4110 = vpack.c.b16 %v4009, %v4008
        %v4111 = vpack.c.b16 %v4011, %v4010
        %v4112 = vpack.c.b16 %v4013, %v4012
        %v4113 = vpack.c.b16 %v4015, %v4014
        %v4114 = vpack.c.b16 %v4017, %v4016
        %v4115 = vpack.c.b16 %v4019, %v4018
        %v4116 = vpack.c.b16 %v4021, %v4020
        %v4117 = vpack.c.b16 %v4023, %v4022
        %v4118 = vpack.c.b16 %v4025, %v4024
        %v4119 = vpack.c.b16 %v4027, %v4026
        %v4120 = vpack.c.b16 %v4029, %v4028
        %v4121 = vpack.c.b16 %v4031, %v4030
        %v4122 = vpack.c.b16 %v4033, %v4032
        %v4123 = vpack.c.b16 %v4035, %v4034
        %v4124 = vpack.c.b16 %v4037, %v4036
        %v4125 = vpack.c.b16 %v4039, %v4038
        %v4126 = vpack.c.b16 %v4041, %v4040
        %v4127 = vpack.c.b16 %v4043, %v4042
        %v4128 = vpack.c.b16 %v4045, %v4044
        %v4129 = vpack.c.b16 %v4047, %v4046
        %v4130 = vpack.c.b16 %v4049, %v4048
        %v4131 = vpack.c.b16 %v4051, %v4050
        %v4132 = vpack.c.b16 %v4053, %v4052
        %v4133 = vpack.c.b16 %v4055, %v4054
        %v4134 = vpack.c.b16 %v4057, %v4056
        %v4135 = vpack.c.b16 %v4059, %v4058
        %v4136 = vpack.c.b16 %v4061, %v4060
        %v4137 = vpack.c.b16 %v4063, %v4062
        %v4138 = vpack.c.b16 %v4065, %v4064
        %v4139 = vpack.c.b16 %v4067, %v4066
        %4212 = vmatprep.subr.bf16.mxu0 0
        %4213 = vmatpush1.bf16.msra.mxu0 %v4068
        %4214 = vmatprep.subr.bf16.mxu0 0
        %4215 = vmatpush1.bf16.msra.mxu0 %v4069
        %4216 = vmatprep.subr.bf16.mxu0 0
        %4217 = vmatpush1.bf16.msra.mxu0 %v4070
        %4218 = vmatprep.subr.bf16.mxu0 0
        %4219 = vmatpush1.bf16.msra.mxu0 %v4071
        %4220 = vmatprep.subr.bf16.mxu0 0
        %4221 = vmatpush1.bf16.msra.mxu0 %v4072
        %4222 = vmatprep.subr.bf16.mxu0 0
        %4223 = vmatpush1.bf16.msra.mxu0 %v4073
        %4224 = vmatprep.subr.bf16.mxu0 0
        %4225 = vmatpush1.bf16.msra.mxu0 %v4074
        %4226 = vmatprep.subr.bf16.mxu0 0
        %4227 = vmatpush1.bf16.msra.mxu0 %v4075
        %4228 = vmatprep.subr.bf16.mxu0 0
        %4229 = vmatpush1.bf16.msra.mxu0 %v4076
        %4230 = vmatprep.subr.bf16.mxu0 0
        %4231 = vmatpush1.bf16.msra.mxu0 %v4077
        %4232 = vmatprep.subr.bf16.mxu0 0
        %4233 = vmatpush1.bf16.msra.mxu0 %v4078
        %4234 = vmatprep.subr.bf16.mxu0 0
        %4235 = vmatpush1.bf16.msra.mxu0 %v4079
        %4236 = vmatprep.subr.bf16.mxu0 0
        %4237 = vmatpush1.bf16.msra.mxu0 %v4080
        %4238 = vmatprep.subr.bf16.mxu0 0
        %4239 = vmatpush1.bf16.msra.mxu0 %v4081
        %4240 = vmatprep.subr.bf16.mxu0 0
        %4241 = vmatpush1.bf16.msra.mxu0 %v4082
        %4242 = vmatprep.subr.bf16.mxu0 0
        %4243 = vmatpush1.bf16.msra.mxu0 %v4083
        %4244 = vmatprep.mubr.bf16.mxu0 0
        %4245 = vmatmul.mubr.bf16.gmra.mrb[0].mxu0 %v1451
        %v4246 = vpop.f32.mrb[0].mxu0
        %v4247 = vadd.f32 %v3778, %v4246
        %v4248 = vpop.f32.mrb[0].mxu0
        %v4249 = vpop.f32.mrb[0].mxu0
        %v4250 = vadd.f32 %v3778, %v4249
        %v4251 = vpop.f32.mrb[0].mxu0
        %4252 = vmatprep.mubr.bf16.mxu0 %v3405
        %4253 = vmatmul.mubr.bf16.gmra.mrb[0].mxu0 %v3694
        %v4254 = vpop.f32.mrb[0].mxu0
        %v4255 = vadd.f32 %v3778, %v4254
        %v4256 = vpop.f32.mrb[0].mxu0
        %v4257 = vpop.f32.mrb[0].mxu0
        %v4258 = vadd.f32 %v3778, %v4257
        %v4259 = vpop.f32.mrb[0].mxu0
        %4260 = vmatprep.mubr.bf16.mxu0 %v3406
        %4261 = vmatmul.mubr.bf16.gmra.mrb[0].mxu0 %v3695
        %v4262 = vpop.f32.mrb[0].mxu0
        %v4263 = vadd.f32 %v3778, %v4262
        %v4264 = vpop.f32.mrb[0].mxu0
        %v4265 = vpop.f32.mrb[0].mxu0
        %v4266 = vadd.f32 %v3778, %v4265
        %v4267 = vpop.f32.mrb[0].mxu0
        %4268 = vmatprep.mubr.bf16.mxu0 %v3407
        %4269 = vmatmul.mubr.bf16.gmra.mrb[0].mxu0 %v3696
        %v4270 = vpop.f32.mrb[0].mxu0
        %v4271 = vadd.f32 %v3778, %v4270
        %v4272 = vpop.f32.mrb[0].mxu0
        %v4273 = vpop.f32.mrb[0].mxu0
        %v4274 = vadd.f32 %v3778, %v4273
        %v4275 = vpop.f32.mrb[0].mxu0
        %4276 = vmatprep.mubr.bf16.mxu0 %v3408
        %4277 = vmatmul.mubr.bf16.gmra.mrb[0].mxu0 %v3697
        %v4278 = vpop.f32.mrb[0].mxu0
        %v4279 = vadd.f32 %v3778, %v4278
        %v4280 = vpop.f32.mrb[0].mxu0
        %v4281 = vpop.f32.mrb[0].mxu0
        %v4282 = vadd.f32 %v3778, %v4281
        %v4283 = vpop.f32.mrb[0].mxu0
        %4284 = vmatprep.mubr.bf16.mxu0 %v3409
        %4285 = vmatmul.mubr.bf16.gmra.mrb[0].mxu0 %v3698
        %v4286 = vpop.f32.mrb[0].mxu0
        %v4287 = vadd.f32 %v3778, %v4286
        %v4288 = vpop.f32.mrb[0].mxu0
        %v4289 = vpop.f32.mrb[0].mxu0
        %v4290 = vadd.f32 %v3778, %v4289
        %v4291 = vpop.f32.mrb[0].mxu0
        %4292 = vmatprep.mubr.bf16.mxu0 %v3410
        %4293 = vmatmul.mubr.bf16.gmra.mrb[0].mxu0 %v3699
        %v4294 = vpop.f32.mrb[0].mxu0
        %v4295 = vadd.f32 %v3778, %v4294
        %v4296 = vpop.f32.mrb[0].mxu0
        %v4297 = vpop.f32.mrb[0].mxu0
        %v4298 = vadd.f32 %v3778, %v4297
        %v4299 = vpop.f32.mrb[0].mxu0
        %4300 = vmatprep.mubr.bf16.mxu0 %v3411
        %4301 = vmatmul.mubr.bf16.gmra.mrb[0].mxu0 %v3700
        %v4302 = vpop.f32.mrb[0].mxu0
        %v4303 = vadd.f32 %v3778, %v4302
        %v4304 = vpop.f32.mrb[0].mxu0
        %v4305 = vpop.f32.mrb[0].mxu0
        %v4306 = vadd.f32 %v3778, %v4305
        %v4307 = vpop.f32.mrb[0].mxu0
        %4308 = vmatprep.mubr.bf16.mxu0 %v3412
        %4309 = vmatmul.mubr.bf16.gmra.mrb[0].mxu0 %v3701
        %v4310 = vpop.f32.mrb[0].mxu0
        %v4311 = vadd.f32 %v3778, %v4310
        %v4312 = vpop.f32.mrb[0].mxu0
        %v4313 = vpop.f32.mrb[0].mxu0
        %v4314 = vadd.f32 %v3778, %v4313
        %v4315 = vpop.f32.mrb[0].mxu0
        %4316 = vmatprep.mubr.bf16.mxu0 %v3413
        %4317 = vmatmul.mubr.bf16.gmra.mrb[0].mxu0 %v3702
        %v4318 = vpop.f32.mrb[0].mxu0
        %v4319 = vadd.f32 %v3778, %v4318
        %v4320 = vpop.f32.mrb[0].mxu0
        %v4321 = vpop.f32.mrb[0].mxu0
        %v4322 = vadd.f32 %v3778, %v4321
        %v4323 = vpop.f32.mrb[0].mxu0
        %4324 = vmatprep.mubr.bf16.mxu0 %v3414
        %4325 = vmatmul.mubr.bf16.gmra.mrb[0].mxu0 %v3703
        %v4326 = vpop.f32.mrb[0].mxu0
        %v4327 = vadd.f32 %v3778, %v4326
        %v4328 = vpop.f32.mrb[0].mxu0
        %v4329 = vpop.f32.mrb[0].mxu0
        %v4330 = vadd.f32 %v3778, %v4329
        %v4331 = vpop.f32.mrb[0].mxu0
        %4332 = vmatprep.mubr.bf16.mxu0 %v3415
        %4333 = vmatmul.mubr.bf16.gmra.mrb[0].mxu0 %v3704
        %v4334 = vpop.f32.mrb[0].mxu0
        %v4335 = vadd.f32 %v3778, %v4334
        %v4336 = vpop.f32.mrb[0].mxu0
        %v4337 = vpop.f32.mrb[0].mxu0
        %v4338 = vadd.f32 %v3778, %v4337
        %v4339 = vpop.f32.mrb[0].mxu0
        %4340 = vmatprep.mubr.bf16.mxu0 %v3416
        %4341 = vmatmul.mubr.bf16.gmra.mrb[0].mxu0 %v3705
        %v4342 = vpop.f32.mrb[0].mxu0
        %v4343 = vadd.f32 %v3778, %v4342
        %v4344 = vpop.f32.mrb[0].mxu0
        %v4345 = vpop.f32.mrb[0].mxu0
        %v4346 = vadd.f32 %v3778, %v4345
        %v4347 = vpop.f32.mrb[0].mxu0
        %4348 = vmatprep.mubr.bf16.mxu0 %v3417
        %4349 = vmatmul.mubr.bf16.gmra.mrb[0].mxu0 %v3706
        %v4350 = vpop.f32.mrb[0].mxu0
        %v4351 = vadd.f32 %v3778, %v4350
        %v4352 = vpop.f32.mrb[0].mxu0
        %v4353 = vpop.f32.mrb[0].mxu0
        %v4354 = vadd.f32 %v3778, %v4353
        %v4355 = vpop.f32.mrb[0].mxu0
        %4356 = vmatprep.mubr.bf16.mxu0 %v3418
        %4357 = vmatmul.mubr.bf16.gmra.mrb[0].mxu0 %v3707
        %v4358 = vpop.f32.mrb[0].mxu0
        %v4359 = vadd.f32 %v3778, %v4358
        %v4360 = vpop.f32.mrb[0].mxu0
        %v4361 = vpop.f32.mrb[0].mxu0
        %v4362 = vadd.f32 %v3778, %v4361
        %v4363 = vpop.f32.mrb[0].mxu0
        %4364 = vmatprep.mubr.bf16.mxu0 %v3419
        %4365 = vmatmul.mubr.bf16.gmra.mrb[0].mxu0 %v3708
        %v4366 = vpop.f32.mrb[0].mxu0
        %v4367 = vadd.f32 %v3778, %v4366
        %v4368 = vpop.f32.mrb[0].mxu0
        %v4369 = vpop.f32.mrb[0].mxu0
        %v4370 = vadd.f32 %v3778, %v4369
        %v4371 = vpop.f32.mrb[0].mxu0
        %4372 = vdwg.mxu0
        %4373 = vmatprep.subr.bf16.mxu0 0
        %4374 = vmatpush1.bf16.msra.mxu0 %v4084
        %4375 = vmatprep.subr.bf16.mxu0 0
        %4376 = vmatpush1.bf16.msra.mxu0 %v4085
        %4377 = vmatprep.subr.bf16.mxu0 0
        %4378 = vmatpush1.bf16.msra.mxu0 %v4086
        %4379 = vmatprep.subr.bf16.mxu0 0
        %4380 = vmatpush1.bf16.msra.mxu0 %v4087
        %4381 = vmatprep.subr.bf16.mxu0 0
        %4382 = vmatpush1.bf16.msra.mxu0 %v4088
        %4383 = vmatprep.subr.bf16.mxu0 0
        %4384 = vmatpush1.bf16.msra.mxu0 %v4089
        %4385 = vmatprep.subr.bf16.mxu0 0
        %4386 = vmatpush1.bf16.msra.mxu0 %v4090
        %4387 = vmatprep.subr.bf16.mxu0 0
        %4388 = vmatpush1.bf16.msra.mxu0 %v4091
        %4389 = vmatprep.subr.bf16.mxu0 0
        %4390 = vmatpush1.bf16.msra.mxu0 %v4092
        %4391 = vmatprep.subr.bf16.mxu0 0
        %4392 = vmatpush1.bf16.msra.mxu0 %v4093
        %4393 = vmatprep.subr.bf16.mxu0 0
        %4394 = vmatpush1.bf16.msra.mxu0 %v4094
        %4395 = vmatprep.subr.bf16.mxu0 0
        %4396 = vmatpush1.bf16.msra.mxu0 %v4095
        %4397 = vmatprep.subr.bf16.mxu0 0
        %4398 = vmatpush1.bf16.msra.mxu0 %v4096
        %4399 = vmatprep.subr.bf16.mxu0 0
        %4400 = vmatpush1.bf16.msra.mxu0 %v4097
        %4401 = vmatprep.subr.bf16.mxu0 0
        %4402 = vmatpush1.bf16.msra.mxu0 %v4098
        %4403 = vmatprep.subr.bf16.mxu0 0
        %4404 = vmatpush1.bf16.msra.mxu0 %v4099
        %4405 = vmatprep.mubr.bf16.mxu0 %v3694
        %4406 = vmatmul.mubr.bf16.gmra.mrb[0].mxu0 %v1522
        %v4407 = vpop.f32.mrb[0].mxu0
        %v4408 = vadd.f32 %v4247, %v4407
        %v4409 = vpop.f32.mrb[0].mxu0
        %v4410 = vpop.f32.mrb[0].mxu0
        %v4411 = vadd.f32 %v4250, %v4410
        %v4412 = vpop.f32.mrb[0].mxu0
        %4413 = vmatprep.mubr.bf16.mxu0 %v3695
        %4414 = vmatmul.mubr.bf16.gmra.mrb[0].mxu0 %v3758
        %v4415 = vpop.f32.mrb[0].mxu0
        %v4416 = vadd.f32 %v4255, %v4415
        %v4417 = vpop.f32.mrb[0].mxu0
        %v4418 = vpop.f32.mrb[0].mxu0
        %v4419 = vadd.f32 %v4258, %v4418
        %v4420 = vpop.f32.mrb[0].mxu0
        %4421 = vmatprep.mubr.bf16.mxu0 %v3696
        %4422 = vmatmul.mubr.bf16.gmra.mrb[0].mxu0 %v3759
        %v4423 = vpop.f32.mrb[0].mxu0
        %v4424 = vadd.f32 %v4263, %v4423
        %v4425 = vpop.f32.mrb[0].mxu0
        %v4426 = vpop.f32.mrb[0].mxu0
        %v4427 = vadd.f32 %v4266, %v4426
        %v4428 = vpop.f32.mrb[0].mxu0
        %4429 = vmatprep.mubr.bf16.mxu0 %v3697
        %4430 = vmatmul.mubr.bf16.gmra.mrb[0].mxu0 %v3760
        %v4431 = vpop.f32.mrb[0].mxu0
        %v4432 = vadd.f32 %v4271, %v4431
        %v4433 = vpop.f32.mrb[0].mxu0
        %v4434 = vpop.f32.mrb[0].mxu0
        %v4435 = vadd.f32 %v4274, %v4434
        %v4436 = vpop.f32.mrb[0].mxu0
        %4437 = vmatprep.mubr.bf16.mxu0 %v3698
        %4438 = vmatmul.mubr.bf16.gmra.mrb[0].mxu0 %v3761
        %v4439 = vpop.f32.mrb[0].mxu0
        %v4440 = vadd.f32 %v4279, %v4439
        %v4441 = vpop.f32.mrb[0].mxu0
        %v4442 = vpop.f32.mrb[0].mxu0
        %v4443 = vadd.f32 %v4282, %v4442
        %v4444 = vpop.f32.mrb[0].mxu0
        %4445 = vmatprep.mubr.bf16.mxu0 %v3699
        %4446 = vmatmul.mubr.bf16.gmra.mrb[0].mxu0 %v3762
        %v4447 = vpop.f32.mrb[0].mxu0
        %v4448 = vadd.f32 %v4287, %v4447
        %v4449 = vpop.f32.mrb[0].mxu0
        %v4450 = vpop.f32.mrb[0].mxu0
        %v4451 = vadd.f32 %v4290, %v4450
        %v4452 = vpop.f32.mrb[0].mxu0
        %4453 = vmatprep.mubr.bf16.mxu0 %v3700
        %4454 = vmatmul.mubr.bf16.gmra.mrb[0].mxu0 %v3763
        %v4455 = vpop.f32.mrb[0].mxu0
        %v4456 = vadd.f32 %v4295, %v4455
        %v4457 = vpop.f32.mrb[0].mxu0
        %v4458 = vpop.f32.mrb[0].mxu0
        %v4459 = vadd.f32 %v4298, %v4458
        %v4460 = vpop.f32.mrb[0].mxu0
        %4461 = vmatprep.mubr.bf16.mxu0 %v3701
        %4462 = vmatmul.mubr.bf16.gmra.mrb[0].mxu0 %v3764
        %v4463 = vpop.f32.mrb[0].mxu0
        %v4464 = vadd.f32 %v4303, %v4463
        %v4465 = vpop.f32.mrb[0].mxu0
        %v4466 = vpop.f32.mrb[0].mxu0
        %v4467 = vadd.f32 %v4306, %v4466
        %v4468 = vpop.f32.mrb[0].mxu0
        %4469 = vmatprep.mubr.bf16.mxu0 %v3702
        %4470 = vmatmul.mubr.bf16.gmra.mrb[0].mxu0 %v3765
        %v4471 = vpop.f32.mrb[0].mxu0
        %v4472 = vadd.f32 %v4311, %v4471
        %v4473 = vpop.f32.mrb[0].mxu0
        %v4474 = vpop.f32.mrb[0].mxu0
        %v4475 = vadd.f32 %v4314, %v4474
        %v4476 = vpop.f32.mrb[0].mxu0
        %4477 = vmatprep.mubr.bf16.mxu0 %v3703
        %4478 = vmatmul.mubr.bf16.gmra.mrb[0].mxu0 %v3766
        %v4479 = vpop.f32.mrb[0].mxu0
        %v4480 = vadd.f32 %v4319, %v4479
        %v4481 = vpop.f32.mrb[0].mxu0
        %v4482 = vpop.f32.mrb[0].mxu0
        %v4483 = vadd.f32 %v4322, %v4482
        %v4484 = vpop.f32.mrb[0].mxu0
        %4485 = vmatprep.mubr.bf16.mxu0 %v3704
        %4486 = vmatmul.mubr.bf16.gmra.mrb[0].mxu0 %v3767
        %v4487 = vpop.f32.mrb[0].mxu0
        %v4488 = vadd.f32 %v4327, %v4487
        %v4489 = vpop.f32.mrb[0].mxu0
        %v4490 = vpop.f32.mrb[0].mxu0
        %v4491 = vadd.f32 %v4330, %v4490
        %v4492 = vpop.f32.mrb[0].mxu0
        %4493 = vmatprep.mubr.bf16.mxu0 %v3705
        %4494 = vmatmul.mubr.bf16.gmra.mrb[0].mxu0 %v3768
        %v4495 = vpop.f32.mrb[0].mxu0
        %v4496 = vadd.f32 %v4335, %v4495
        %v4497 = vpop.f32.mrb[0].mxu0
        %v4498 = vpop.f32.mrb[0].mxu0
        %v4499 = vadd.f32 %v4338, %v4498
        %v4500 = vpop.f32.mrb[0].mxu0
        %4501 = vmatprep.mubr.bf16.mxu0 %v3706
        %4502 = vmatmul.mubr.bf16.gmra.mrb[0].mxu0 %v3769
        %v4503 = vpop.f32.mrb[0].mxu0
        %v4504 = vadd.f32 %v4343, %v4503
        %v4505 = vpop.f32.mrb[0].mxu0
        %v4506 = vpop.f32.mrb[0].mxu0
        %v4507 = vadd.f32 %v4346, %v4506
        %v4508 = vpop.f32.mrb[0].mxu0
        %4509 = vmatprep.mubr.bf16.mxu0 %v3707
        %4510 = vmatmul.mubr.bf16.gmra.mrb[0].mxu0 %v3770
        %v4511 = vpop.f32.mrb[0].mxu0
        %v4512 = vadd.f32 %v4351, %v4511
        %v4513 = vpop.f32.mrb[0].mxu0
        %v4514 = vpop.f32.mrb[0].mxu0
        %v4515 = vadd.f32 %v4354, %v4514
        %v4516 = vpop.f32.mrb[0].mxu0
        %4517 = vmatprep.mubr.bf16.mxu0 %v3708
        %4518 = vmatmul.mubr.bf16.gmra.mrb[0].mxu0 %v3771
        %v4519 = vpop.f32.mrb[0].mxu0
        %v4520 = vadd.f32 %v4359, %v4519
        %v4521 = vpop.f32.mrb[0].mxu0
        %v4522 = vpop.f32.mrb[0].mxu0
        %v4523 = vadd.f32 %v4362, %v4522
        %v4524 = vpop.f32.mrb[0].mxu0
        %4525 = vmatprep.mubr.bf16.mxu0 %v3709
        %4526 = vmatmul.mubr.bf16.gmra.mrb[0].mxu0 %v3772
        %v4527 = vpop.f32.mrb[0].mxu0
        %v4528 = vadd.f32 %v4367, %v4527
        %v4529 = vpop.f32.mrb[0].mxu0
        %v4530 = vpop.f32.mrb[0].mxu0
        %v4531 = vadd.f32 %v4370, %v4530
        %v4532 = vpop.f32.mrb[0].mxu0
        %4533 = vdwg.mxu0
        %4534 = vmatprep.subr.bf16.mxu0 0
        %4535 = vmatpush1.bf16.msra.mxu0 %v4100
        %4536 = vmatprep.subr.bf16.mxu0 0
        %4537 = vmatpush1.bf16.msra.mxu0 %v4101
        %4538 = vmatprep.subr.bf16.mxu0 0
        %4539 = vmatpush1.bf16.msra.mxu0 %v4102
        %4540 = vmatprep.subr.bf16.mxu0 0
        %4541 = vmatpush1.bf16.msra.mxu0 %v4103
        %4542 = vmatprep.subr.bf16.mxu0 0
        %4543 = vmatpush1.bf16.msra.mxu0 %v4104
        %4544 = vmatprep.subr.bf16.mxu0 0
        %4545 = vmatpush1.bf16.msra.mxu0 %v4105
        %4546 = vmatprep.subr.bf16.mxu0 0
        %4547 = vmatpush1.bf16.msra.mxu0 %v4106
        %4548 = vmatprep.subr.bf16.mxu0 0
        %4549 = vmatpush1.bf16.msra.mxu0 %v4107
        %4550 = vmatprep.subr.bf16.mxu0 0
        %4551 = vmatpush1.bf16.msra.mxu0 %v4108
        %4552 = vmatprep.subr.bf16.mxu0 0
        %4553 = vmatpush1.bf16.msra.mxu0 %v4109
        %4554 = vmatprep.subr.bf16.mxu0 0
        %4555 = vmatpush1.bf16.msra.mxu0 %v4110
        %4556 = vmatprep.subr.bf16.mxu0 0
        %4557 = vmatpush1.bf16.msra.mxu0 %v4111
        %4558 = vmatprep.subr.bf16.mxu0 0
        %4559 = vmatpush1.bf16.msra.mxu0 %v4112
        %4560 = vmatprep.subr.bf16.mxu0 0
        %4561 = vmatpush1.bf16.msra.mxu0 %v4113
        %4562 = vmatprep.subr.bf16.mxu0 0
        %4563 = vmatpush1.bf16.msra.mxu0 %v4114
        %4564 = vmatprep.subr.bf16.mxu0 0
        %4565 = vmatpush1.bf16.msra.mxu0 %v4115
        %4566 = vmatprep.mubr.bf16.mxu0 %v3758
        %4567 = vmatmul.mubr.bf16.gmra.mrb[0].mxu0 %v3405
        %v4568 = vpop.f32.mrb[0].mxu0
        %v4569 = vadd.f32 %v4408, %v4568
        %v4570 = vpop.f32.mrb[0].mxu0
        %v4571 = vpop.f32.mrb[0].mxu0
        %v4572 = vadd.f32 %v4411, %v4571
        %v4573 = vpop.f32.mrb[0].mxu0
        %4574 = vmatprep.mubr.bf16.mxu0 %v3759
        %4575 = vmatmul.mubr.bf16.gmra.mrb[0].mxu0 %v3406
        %v4576 = vpop.f32.mrb[0].mxu0
        %v4577 = vadd.f32 %v4416, %v4576
        %v4578 = vpop.f32.mrb[0].mxu0
        %v4579 = vpop.f32.mrb[0].mxu0
        %v4580 = vadd.f32 %v4419, %v4579
        %v4581 = vpop.f32.mrb[0].mxu0
        %4582 = vmatprep.mubr.bf16.mxu0 %v3760
        %4583 = vmatmul.mubr.bf16.gmra.mrb[0].mxu0 %v3407
        %v4584 = vpop.f32.mrb[0].mxu0
        %v4585 = vadd.f32 %v4424, %v4584
        %v4586 = vpop.f32.mrb[0].mxu0
        %v4587 = vpop.f32.mrb[0].mxu0
        %v4588 = vadd.f32 %v4427, %v4587
        %v4589 = vpop.f32.mrb[0].mxu0
        %4590 = vmatprep.mubr.bf16.mxu0 %v3761
        %4591 = vmatmul.mubr.bf16.gmra.mrb[0].mxu0 %v3408
        %v4592 = vpop.f32.mrb[0].mxu0
        %v4593 = vadd.f32 %v4432, %v4592
        %v4594 = vpop.f32.mrb[0].mxu0
        %v4595 = vpop.f32.mrb[0].mxu0
        %v4596 = vadd.f32 %v4435, %v4595
        %v4597 = vpop.f32.mrb[0].mxu0
        %4598 = vmatprep.mubr.bf16.mxu0 %v3762
        %4599 = vmatmul.mubr.bf16.gmra.mrb[0].mxu0 %v3409
        %v4600 = vpop.f32.mrb[0].mxu0
        %v4601 = vadd.f32 %v4440, %v4600
        %v4602 = vpop.f32.mrb[0].mxu0
        %v4603 = vpop.f32.mrb[0].mxu0
        %v4604 = vadd.f32 %v4443, %v4603
        %v4605 = vpop.f32.mrb[0].mxu0
        %4606 = vmatprep.mubr.bf16.mxu0 %v3763
        %4607 = vmatmul.mubr.bf16.gmra.mrb[0].mxu0 %v3410
        %v4608 = vpop.f32.mrb[0].mxu0
        %v4609 = vadd.f32 %v4448, %v4608
        %v4610 = vpop.f32.mrb[0].mxu0
        %v4611 = vpop.f32.mrb[0].mxu0
        %v4612 = vadd.f32 %v4451, %v4611
        %v4613 = vpop.f32.mrb[0].mxu0
        %4614 = vmatprep.mubr.bf16.mxu0 %v3764
        %4615 = vmatmul.mubr.bf16.gmra.mrb[0].mxu0 %v3411
        %v4616 = vpop.f32.mrb[0].mxu0
        %v4617 = vadd.f32 %v4456, %v4616
        %v4618 = vpop.f32.mrb[0].mxu0
        %v4619 = vpop.f32.mrb[0].mxu0
        %v4620 = vadd.f32 %v4459, %v4619
        %v4621 = vpop.f32.mrb[0].mxu0
        %4622 = vmatprep.mubr.bf16.mxu0 %v3765
        %4623 = vmatmul.mubr.bf16.gmra.mrb[0].mxu0 %v3412
        %v4624 = vpop.f32.mrb[0].mxu0
        %v4625 = vadd.f32 %v4464, %v4624
        %v4626 = vpop.f32.mrb[0].mxu0
        %v4627 = vpop.f32.mrb[0].mxu0
        %v4628 = vadd.f32 %v4467, %v4627
        %v4629 = vpop.f32.mrb[0].mxu0
        %4630 = vmatprep.mubr.bf16.mxu0 %v3766
        %4631 = vmatmul.mubr.bf16.gmra.mrb[0].mxu0 %v3413
        %v4632 = vpop.f32.mrb[0].mxu0
        %v4633 = vadd.f32 %v4472, %v4632
        %v4634 = vpop.f32.mrb[0].mxu0
        %v4635 = vpop.f32.mrb[0].mxu0
        %v4636 = vadd.f32 %v4475, %v4635
        %v4637 = vpop.f32.mrb[0].mxu0
        %4638 = vmatprep.mubr.bf16.mxu0 %v3767
        %4639 = vmatmul.mubr.bf16.gmra.mrb[0].mxu0 %v3414
        %v4640 = vpop.f32.mrb[0].mxu0
        %v4641 = vadd.f32 %v4480, %v4640
        %v4642 = vpop.f32.mrb[0].mxu0
        %v4643 = vpop.f32.mrb[0].mxu0
        %v4644 = vadd.f32 %v4483, %v4643
        %v4645 = vpop.f32.mrb[0].mxu0
        %4646 = vmatprep.mubr.bf16.mxu0 %v3768
        %4647 = vmatmul.mubr.bf16.gmra.mrb[0].mxu0 %v3415
        %v4648 = vpop.f32.mrb[0].mxu0
        %v4649 = vadd.f32 %v4488, %v4648
        %v4650 = vpop.f32.mrb[0].mxu0
        %v4651 = vpop.f32.mrb[0].mxu0
        %v4652 = vadd.f32 %v4491, %v4651
        %v4653 = vpop.f32.mrb[0].mxu0
        %4654 = vmatprep.mubr.bf16.mxu0 %v3769
        %4655 = vmatmul.mubr.bf16.gmra.mrb[0].mxu0 %v3416
        %v4656 = vpop.f32.mrb[0].mxu0
        %v4657 = vadd.f32 %v4496, %v4656
        %v4658 = vpop.f32.mrb[0].mxu0
        %v4659 = vpop.f32.mrb[0].mxu0
        %v4660 = vadd.f32 %v4499, %v4659
        %v4661 = vpop.f32.mrb[0].mxu0
        %4662 = vmatprep.mubr.bf16.mxu0 %v3770
        %4663 = vmatmul.mubr.bf16.gmra.mrb[0].mxu0 %v3417
        %v4664 = vpop.f32.mrb[0].mxu0
        %v4665 = vadd.f32 %v4504, %v4664
        %v4666 = vpop.f32.mrb[0].mxu0
        %v4667 = vpop.f32.mrb[0].mxu0
        %v4668 = vadd.f32 %v4507, %v4667
        %v4669 = vpop.f32.mrb[0].mxu0
        %4670 = vmatprep.mubr.bf16.mxu0 %v3771
        %4671 = vmatmul.mubr.bf16.gmra.mrb[0].mxu0 %v3418
        %v4672 = vpop.f32.mrb[0].mxu0
        %v4673 = vadd.f32 %v4512, %v4672
        %v4674 = vpop.f32.mrb[0].mxu0
        %v4675 = vpop.f32.mrb[0].mxu0
        %v4676 = vadd.f32 %v4515, %v4675
        %v4677 = vpop.f32.mrb[0].mxu0
        %4678 = vmatprep.mubr.bf16.mxu0 %v3772
        %4679 = vmatmul.mubr.bf16.gmra.mrb[0].mxu0 %v3419
        %v4680 = vpop.f32.mrb[0].mxu0
        %v4681 = vadd.f32 %v4520, %v4680
        %v4682 = vpop.f32.mrb[0].mxu0
        %v4683 = vpop.f32.mrb[0].mxu0
        %v4684 = vadd.f32 %v4523, %v4683
        %v4685 = vpop.f32.mrb[0].mxu0
        %4686 = vmatprep.mubr.bf16.mxu0 %v3773
        %4687 = vmatmul.mubr.bf16.gmra.mrb[0].mxu0 %v3420
        %v4688 = vpop.f32.mrb[0].mxu0
        %v4689 = vadd.f32 %v4528, %v4688
        %v4690 = vpop.f32.mrb[0].mxu0
        %v4691 = vpop.f32.mrb[0].mxu0
        %v4692 = vadd.f32 %v4531, %v4691
        %v4693 = vpop.f32.mrb[0].mxu0
        %4694 = vdwg.mxu0
        %4695 = vmatprep.subr.bf16.mxu0 0
        %4696 = vmatpush1.bf16.msra.mxu0 %v4116
        %4697 = vmatprep.subr.bf16.mxu0 0
        %4698 = vmatpush1.bf16.msra.mxu0 %v4117
        %4699 = vmatprep.subr.bf16.mxu0 0
        %4700 = vmatpush1.bf16.msra.mxu0 %v4118
        %4701 = vmatprep.subr.bf16.mxu0 0
        %4702 = vmatpush1.bf16.msra.mxu0 %v4119
        %4703 = vmatprep.subr.bf16.mxu0 0
        %4704 = vmatpush1.bf16.msra.mxu0 %v4120
        %4705 = vmatprep.subr.bf16.mxu0 0
        %4706 = vmatpush1.bf16.msra.mxu0 %v4121
        %4707 = vmatprep.subr.bf16.mxu0 0
        %4708 = vmatpush1.bf16.msra.mxu0 %v4122
        %4709 = vmatprep.subr.bf16.mxu0 0
        %4710 = vmatpush1.bf16.msra.mxu0 %v4123
        %4711 = vmatprep.subr.bf16.mxu0 0
        %4712 = vmatpush1.bf16.msra.mxu0 %v4124
        %4713 = vmatprep.subr.bf16.mxu0 0
        %4714 = vmatpush1.bf16.msra.mxu0 %v4125
        %4715 = vmatprep.subr.bf16.mxu0 0
        %4716 = vmatpush1.bf16.msra.mxu0 %v4126
        %4717 = vmatprep.subr.bf16.mxu0 0
        %4718 = vmatpush1.bf16.msra.mxu0 %v4127
        %4719 = vmatprep.subr.bf16.mxu0 0
        %4720 = vmatpush1.bf16.msra.mxu0 %v4128
        %4721 = vmatprep.subr.bf16.mxu0 0
        %4722 = vmatpush1.bf16.msra.mxu0 %v4129
        %4723 = vmatprep.subr.bf16.mxu0 0
        %4724 = vmatpush1.bf16.msra.mxu0 %v4130
        %4725 = vmatprep.subr.bf16.mxu0 0
        %4726 = vmatpush1.bf16.msra.mxu0 %v4131
        %4727 = vmatprep.mubr.bf16.mxu0 %v3406
        %4728 = vmatmul.mubr.bf16.gmra.mrb[0].mxu0 %v3695
        %v4729 = vpop.f32.mrb[0].mxu0
        %v4730 = vadd.f32 %v4569, %v4729
        %v4731 = vpop.f32.mrb[0].mxu0
        %v4732 = vpop.f32.mrb[0].mxu0
        %v4733 = vadd.f32 %v4572, %v4732
        %v4734 = vpop.f32.mrb[0].mxu0
        %4735 = vmatprep.mubr.bf16.mxu0 %v3407
        %4736 = vmatmul.mubr.bf16.gmra.mrb[0].mxu0 %v3696
        %v4737 = vpop.f32.mrb[0].mxu0
        %v4738 = vadd.f32 %v4577, %v4737
        %v4739 = vpop.f32.mrb[0].mxu0
        %v4740 = vpop.f32.mrb[0].mxu0
        %v4741 = vadd.f32 %v4580, %v4740
        %v4742 = vpop.f32.mrb[0].mxu0
        %4743 = vmatprep.mubr.bf16.mxu0 %v3408
        %4744 = vmatmul.mubr.bf16.gmra.mrb[0].mxu0 %v3697
        %v4745 = vpop.f32.mrb[0].mxu0
        %v4746 = vadd.f32 %v4585, %v4745
        %v4747 = vpop.f32.mrb[0].mxu0
        %v4748 = vpop.f32.mrb[0].mxu0
        %v4749 = vadd.f32 %v4588, %v4748
        %v4750 = vpop.f32.mrb[0].mxu0
        %4751 = vmatprep.mubr.bf16.mxu0 %v3409
        %4752 = vmatmul.mubr.bf16.gmra.mrb[0].mxu0 %v3698
        %v4753 = vpop.f32.mrb[0].mxu0
        %v4754 = vadd.f32 %v4593, %v4753
        %v4755 = vpop.f32.mrb[0].mxu0
        %v4756 = vpop.f32.mrb[0].mxu0
        %v4757 = vadd.f32 %v4596, %v4756
        %v4758 = vpop.f32.mrb[0].mxu0
        %4759 = vmatprep.mubr.bf16.mxu0 %v3410
        %4760 = vmatmul.mubr.bf16.gmra.mrb[0].mxu0 %v3699
        %v4761 = vpop.f32.mrb[0].mxu0
        %v4762 = vadd.f32 %v4601, %v4761
        %v4763 = vpop.f32.mrb[0].mxu0
        %v4764 = vpop.f32.mrb[0].mxu0
        %v4765 = vadd.f32 %v4604, %v4764
        %v4766 = vpop.f32.mrb[0].mxu0
        %4767 = vmatprep.mubr.bf16.mxu0 %v3411
        %4768 = vmatmul.mubr.bf16.gmra.mrb[0].mxu0 %v3700
        %v4769 = vpop.f32.mrb[0].mxu0
        %v4770 = vadd.f32 %v4609, %v4769
        %v4771 = vpop.f32.mrb[0].mxu0
        %v4772 = vpop.f32.mrb[0].mxu0
        %v4773 = vadd.f32 %v4612, %v4772
        %v4774 = vpop.f32.mrb[0].mxu0
        %4775 = vmatprep.mubr.bf16.mxu0 %v3412
        %4776 = vmatmul.mubr.bf16.gmra.mrb[0].mxu0 %v3701
        %v4777 = vpop.f32.mrb[0].mxu0
        %v4778 = vadd.f32 %v4617, %v4777
        %v4779 = vpop.f32.mrb[0].mxu0
        %v4780 = vpop.f32.mrb[0].mxu0
        %v4781 = vadd.f32 %v4620, %v4780
        %v4782 = vpop.f32.mrb[0].mxu0
        %4783 = vmatprep.mubr.bf16.mxu0 %v3413
        %4784 = vmatmul.mubr.bf16.gmra.mrb[0].mxu0 %v3702
        %v4785 = vpop.f32.mrb[0].mxu0
        %v4786 = vadd.f32 %v4625, %v4785
        %v4787 = vpop.f32.mrb[0].mxu0
        %v4788 = vpop.f32.mrb[0].mxu0
        %v4789 = vadd.f32 %v4628, %v4788
        %v4790 = vpop.f32.mrb[0].mxu0
        %4791 = vmatprep.mubr.bf16.mxu0 %v3414
        %4792 = vmatmul.mubr.bf16.gmra.mrb[0].mxu0 %v3703
        %v4793 = vpop.f32.mrb[0].mxu0
        %v4794 = vadd.f32 %v4633, %v4793
        %v4795 = vpop.f32.mrb[0].mxu0
        %v4796 = vpop.f32.mrb[0].mxu0
        %v4797 = vadd.f32 %v4636, %v4796
        %v4798 = vpop.f32.mrb[0].mxu0
        %4799 = vmatprep.mubr.bf16.mxu0 %v3415
        %4800 = vmatmul.mubr.bf16.gmra.mrb[0].mxu0 %v3704
        %v4801 = vpop.f32.mrb[0].mxu0
        %v4802 = vadd.f32 %v4641, %v4801
        %v4803 = vpop.f32.mrb[0].mxu0
        %v4804 = vpop.f32.mrb[0].mxu0
        %v4805 = vadd.f32 %v4644, %v4804
        %v4806 = vpop.f32.mrb[0].mxu0
        %4807 = vmatprep.mubr.bf16.mxu0 %v3416
        %4808 = vmatmul.mubr.bf16.gmra.mrb[0].mxu0 %v3705
        %v4809 = vpop.f32.mrb[0].mxu0
        %v4810 = vadd.f32 %v4649, %v4809
        %v4811 = vpop.f32.mrb[0].mxu0
        %v4812 = vpop.f32.mrb[0].mxu0
        %v4813 = vadd.f32 %v4652, %v4812
        %v4814 = vpop.f32.mrb[0].mxu0
        %4815 = vmatprep.mubr.bf16.mxu0 %v3417
        %4816 = vmatmul.mubr.bf16.gmra.mrb[0].mxu0 %v3706
        %v4817 = vpop.f32.mrb[0].mxu0
        %v4818 = vadd.f32 %v4657, %v4817
        %v4819 = vpop.f32.mrb[0].mxu0
        %v4820 = vpop.f32.mrb[0].mxu0
        %v4821 = vadd.f32 %v4660, %v4820
        %v4822 = vpop.f32.mrb[0].mxu0
        %4823 = vmatprep.mubr.bf16.mxu0 %v3418
        %4824 = vmatmul.mubr.bf16.gmra.mrb[0].mxu0 %v3707
        %v4825 = vpop.f32.mrb[0].mxu0
        %v4826 = vadd.f32 %v4665, %v4825
        %v4827 = vpop.f32.mrb[0].mxu0
        %v4828 = vpop.f32.mrb[0].mxu0
        %v4829 = vadd.f32 %v4668, %v4828
        %v4830 = vpop.f32.mrb[0].mxu0
        %4831 = vmatprep.mubr.bf16.mxu0 %v3419
        %4832 = vmatmul.mubr.bf16.gmra.mrb[0].mxu0 %v3708
        %v4833 = vpop.f32.mrb[0].mxu0
        %v4834 = vadd.f32 %v4673, %v4833
        %v4835 = vpop.f32.mrb[0].mxu0
        %v4836 = vpop.f32.mrb[0].mxu0
        %v4837 = vadd.f32 %v4676, %v4836
        %v4838 = vpop.f32.mrb[0].mxu0
        %4839 = vmatprep.mubr.bf16.mxu0 %v3420
        %4840 = vmatmul.mubr.bf16.gmra.mrb[0].mxu0 %v3709
        %v4841 = vpop.f32.mrb[0].mxu0
        %v4842 = vadd.f32 %v4681, %v4841
        %v4843 = vpop.f32.mrb[0].mxu0
        %v4844 = vpop.f32.mrb[0].mxu0
        %v4845 = vadd.f32 %v4684, %v4844
        %v4846 = vpop.f32.mrb[0].mxu0
        %4847 = vmatprep.mubr.bf16.mxu0 0
        %4848 = vmatmul.mubr.bf16.gmra.mrb[0].mxu0 %v1451
        %v4849 = vpop.f32.mrb[0].mxu0
        %v4850 = vadd.f32 %v4689, %v4849
        %v4851 = vpop.f32.mrb[0].mxu0
        %v4852 = vpop.f32.mrb[0].mxu0
        %v4853 = vadd.f32 %v4692, %v4852
        %v4854 = vpop.f32.mrb[0].mxu0
        %4855 = vdwg.mxu0
        %4856 = vmatprep.subr.bf16.mxu0 0
        %4857 = vmatpush1.bf16.msra.mxu0 %v4132
        %4858 = vmatprep.subr.bf16.mxu0 0
        %4859 = vmatpush1.bf16.msra.mxu0 %v4133
        %4860 = vmatprep.subr.bf16.mxu0 0
        %4861 = vmatpush1.bf16.msra.mxu0 %v4134
        %4862 = vmatprep.subr.bf16.mxu0 0
        %4863 = vmatpush1.bf16.msra.mxu0 %v4135
        %4864 = vmatprep.subr.bf16.mxu0 0
        %4865 = vmatpush1.bf16.msra.mxu0 %v4136
        %4866 = vmatprep.subr.bf16.mxu0 0
        %4867 = vmatpush1.bf16.msra.mxu0 %v4137
        %4868 = vmatprep.subr.bf16.mxu0 0
        %4869 = vmatpush1.bf16.msra.mxu0 %v4138
        %4870 = vmatprep.subr.bf16.mxu0 0
        %4871 = vmatpush1.bf16.msra.mxu0 %v4139
        %4872 = vmatprep.subr.bf16.mxu0 0
        %4873 = vmatpush1.bf16.msra.mxu0 0
        %4874 = vmatprep.subr.bf16.mxu0 0
        %4875 = vmatpush1.bf16.msra.mxu0 0
        %4876 = vmatprep.subr.bf16.mxu0 0
        %4877 = vmatpush1.bf16.msra.mxu0 0
        %4878 = vmatprep.subr.bf16.mxu0 0
        %4879 = vmatpush1.bf16.msra.mxu0 0
        %4880 = vmatprep.subr.bf16.mxu0 0
        %4881 = vmatpush1.bf16.msra.mxu0 0
        %4882 = vmatprep.subr.bf16.mxu0 0
        %4883 = vmatpush1.bf16.msra.mxu0 0
        %4884 = vmatprep.subr.bf16.mxu0 0
        %4885 = vmatpush1.bf16.msra.mxu0 0
        %4886 = vmatprep.subr.bf16.mxu0 0
        %4887 = vmatpush1.bf16.msra.mxu0 0
        %4888 = vmatprep.mubr.bf16.mxu0 0
        %4889 = vmatmul.mubr.bf16.gmra.mrb[0].mxu0 %v3759
        %v4890 = vpop.f32.mrb[0].mxu0
        %v4891 = vadd.f32 %v4730, %v4890
        %v4892 = vpop.f32.mrb[0].mxu0
        %v4893 = vpop.f32.mrb[0].mxu0
        %v4894 = vadd.f32 %v4733, %v4893
        %v4895 = vpop.f32.mrb[0].mxu0
        %4896 = vmatprep.mubr.bf16.mxu0 0
        %4897 = vmatmul.mubr.bf16.gmra.mrb[0].mxu0 %v3760
        %v4898 = vpop.f32.mrb[0].mxu0
        %v4899 = vadd.f32 %v4738, %v4898
        %v4900 = vpop.f32.mrb[0].mxu0
        %v4901 = vpop.f32.mrb[0].mxu0
        %v4902 = vadd.f32 %v4741, %v4901
        %v4903 = vpop.f32.mrb[0].mxu0
        %4904 = vmatprep.mubr.bf16.mxu0 0
        %4905 = vmatmul.mubr.bf16.gmra.mrb[0].mxu0 %v3761
        %v4906 = vpop.f32.mrb[0].mxu0
        %v4907 = vadd.f32 %v4746, %v4906
        %v4908 = vpop.f32.mrb[0].mxu0
        %v4909 = vpop.f32.mrb[0].mxu0
        %v4910 = vadd.f32 %v4749, %v4909
        %v4911 = vpop.f32.mrb[0].mxu0
        %4912 = vmatprep.mubr.bf16.mxu0 0
        %4913 = vmatmul.mubr.bf16.gmra.mrb[0].mxu0 %v3762
        %v4914 = vpop.f32.mrb[0].mxu0
        %v4915 = vadd.f32 %v4754, %v4914
        %v4916 = vpop.f32.mrb[0].mxu0
        %v4917 = vpop.f32.mrb[0].mxu0
        %v4918 = vadd.f32 %v4757, %v4917
        %v4919 = vpop.f32.mrb[0].mxu0
        %4920 = vmatprep.mubr.bf16.mxu0 0
        %4921 = vmatmul.mubr.bf16.gmra.mrb[0].mxu0 %v3763
        %v4922 = vpop.f32.mrb[0].mxu0
        %v4923 = vadd.f32 %v4762, %v4922
        %v4924 = vpop.f32.mrb[0].mxu0
        %v4925 = vpop.f32.mrb[0].mxu0
        %v4926 = vadd.f32 %v4765, %v4925
        %v4927 = vpop.f32.mrb[0].mxu0
        %4928 = vmatprep.mubr.bf16.mxu0 0
        %4929 = vmatmul.mubr.bf16.gmra.mrb[0].mxu0 %v3764
        %v4930 = vpop.f32.mrb[0].mxu0
        %v4931 = vadd.f32 %v4770, %v4930
        %v4932 = vpop.f32.mrb[0].mxu0
        %v4933 = vpop.f32.mrb[0].mxu0
        %v4934 = vadd.f32 %v4773, %v4933
        %v4935 = vpop.f32.mrb[0].mxu0
        %4936 = vmatprep.mubr.bf16.mxu0 0
        %4937 = vmatmul.mubr.bf16.gmra.mrb[0].mxu0 %v3765
        %v4938 = vpop.f32.mrb[0].mxu0
        %v4939 = vadd.f32 %v4778, %v4938
        %v4940 = vpop.f32.mrb[0].mxu0
        %v4941 = vpop.f32.mrb[0].mxu0
        %v4942 = vadd.f32 %v4781, %v4941
        %v4943 = vpop.f32.mrb[0].mxu0
        %4944 = vmatprep.mubr.bf16.mxu0 0
        %4945 = vmatmul.mubr.bf16.gmra.mrb[0].mxu0 %v3766
        %v4946 = vpop.f32.mrb[0].mxu0
        %v4947 = vadd.f32 %v4786, %v4946
        %v4948 = vpop.f32.mrb[0].mxu0
        %v4949 = vpop.f32.mrb[0].mxu0
        %v4950 = vadd.f32 %v4789, %v4949
        %v4951 = vpop.f32.mrb[0].mxu0
        %4952 = vmatprep.mubr.bf16.mxu0 0
        %4953 = vmatmul.mubr.bf16.gmra.mrb[0].mxu0 %v3767
        %v4954 = vpop.f32.mrb[0].mxu0
        %v4955 = vadd.f32 %v4794, %v4954
        %v4956 = vpop.f32.mrb[0].mxu0
        %v4957 = vpop.f32.mrb[0].mxu0
        %v4958 = vadd.f32 %v4797, %v4957
        %v4959 = vpop.f32.mrb[0].mxu0
        %4960 = vmatprep.mubr.bf16.mxu0 0
        %4961 = vmatmul.mubr.bf16.gmra.mrb[0].mxu0 %v3768
        %v4962 = vpop.f32.mrb[0].mxu0
        %v4963 = vadd.f32 %v4802, %v4962
        %v4964 = vpop.f32.mrb[0].mxu0
        %v4965 = vpop.f32.mrb[0].mxu0
        %v4966 = vadd.f32 %v4805, %v4965
        %v4967 = vpop.f32.mrb[0].mxu0
        %4968 = vmatprep.mubr.bf16.mxu0 0
        %4969 = vmatmul.mubr.bf16.gmra.mrb[0].mxu0 %v3769
        %v4970 = vpop.f32.mrb[0].mxu0
        %v4971 = vadd.f32 %v4810, %v4970
        %v4972 = vpop.f32.mrb[0].mxu0
        %v4973 = vpop.f32.mrb[0].mxu0
        %v4974 = vadd.f32 %v4813, %v4973
        %v4975 = vpop.f32.mrb[0].mxu0
        %4976 = vmatprep.mubr.bf16.mxu0 0
        %4977 = vmatmul.mubr.bf16.gmra.mrb[0].mxu0 %v3770
        %v4978 = vpop.f32.mrb[0].mxu0
        %v4979 = vadd.f32 %v4818, %v4978
        %v4980 = vpop.f32.mrb[0].mxu0
        %v4981 = vpop.f32.mrb[0].mxu0
        %v4982 = vadd.f32 %v4821, %v4981
        %v4983 = vpop.f32.mrb[0].mxu0
        %4984 = vmatprep.mubr.bf16.mxu0 0
        %4985 = vmatmul.mubr.bf16.gmra.mrb[0].mxu0 %v3771
        %v4986 = vpop.f32.mrb[0].mxu0
        %v4987 = vadd.f32 %v4826, %v4986
        %v4988 = vpop.f32.mrb[0].mxu0
        %v4989 = vpop.f32.mrb[0].mxu0
        %v4990 = vadd.f32 %v4829, %v4989
        %v4991 = vpop.f32.mrb[0].mxu0
        %4992 = vmatprep.mubr.bf16.mxu0 0
        %4993 = vmatmul.mubr.bf16.gmra.mrb[0].mxu0 %v3772
        %v4994 = vpop.f32.mrb[0].mxu0
        %v4995 = vadd.f32 %v4834, %v4994
        %v4996 = vpop.f32.mrb[0].mxu0
        %v4997 = vpop.f32.mrb[0].mxu0
        %v4998 = vadd.f32 %v4837, %v4997
        %v4999 = vpop.f32.mrb[0].mxu0
        %5000 = vmatprep.mubr.bf16.mxu0 0
        %5001 = vmatmul.mubr.bf16.gmra.mrb[0].mxu0 %v3773
        %v5002 = vpop.f32.mrb[0].mxu0
        %v5003 = vadd.f32 %v4842, %v5002
        %v5004 = vpop.f32.mrb[0].mxu0
        %v5005 = vpop.f32.mrb[0].mxu0
        %v5006 = vadd.f32 %v4845, %v5005
        %v5007 = vpop.f32.mrb[0].mxu0
        %5008 = vmatprep.mubr.bf16.mxu0 0
        %5009 = vmatmul.mubr.bf16.gmra.mrb[0].mxu0 %v1522
        %v5010 = vpop.f32.mrb[0].mxu0
        %v5011 = vadd.f32 %v4850, %v5010
        %v5012 = vpop.f32.mrb[0].mxu0
        %v5013 = vpop.f32.mrb[0].mxu0
        %v5014 = vadd.f32 %v4853, %v5013
        %v5015 = vpop.f32.mrb[0].mxu0
        %5016 = vdwg.mxu0
        %v5017 = vpack.c.bf16 %v495, %v494
        %v5018 = vpack.c.bf16 %v497, %v496
        %v5019 = vpack.c.bf16 %v499, %v498
        %v5020 = vpack.c.bf16 %v501, %v500
        %v5021 = vpack.c.bf16 %v503, %v502
        %v5022 = vpack.c.bf16 %v505, %v504
        %v5023 = vpack.c.bf16 %v507, %v506
        %v5024 = vpack.c.bf16 %v509, %v508
        %v5025 = vpack.c.bf16 %v511, %v510
        %v5026 = vpack.c.bf16 %v513, %v512
        %v5027 = vpack.c.bf16 %v515, %v514
        %v5028 = vpack.c.bf16 %v517, %v516
        %v5029 = vpack.c.bf16 %v519, %v518
        %v5030 = vpack.c.bf16 %v521, %v520
        %v5031 = vpack.c.bf16 %v523, %v522
        %v5032 = vpack.c.bf16 %v525, %v524
        %v5033 = vld [vmem:[%s13] sm:$0xf]
        %v5034 = vld [vmem:[%s13 + $0x4] sm:$0xf]
        %v5035 = vld [vmem:[%s13 + $0x8] sm:$0xf]
        %v5036 = vld [vmem:[%s13 + $0xc] sm:$0xf]
        %v5037 = vld [vmem:[%s13 + $0x10] sm:$0xf]
        %v5038 = vld [vmem:[%s13 + $0x14] sm:$0xf]
        %v5039 = vld [vmem:[%s13 + $0x18] sm:$0xf]
        %v5040 = vld [vmem:[%s13 + $0x1c] sm:$0xf]
        %v5041 = vld [vmem:[%s13 + $0x20] sm:$0xf]
        %v5042 = vld [vmem:[%s13 + $0x24] sm:$0xf]
        %v5043 = vld [vmem:[%s13 + $0x28] sm:$0xf]
        %v5044 = vld [vmem:[%s13 + $0x2c] sm:$0xf]
        %v5045 = vld [vmem:[%s13 + $0x30] sm:$0xf]
        %v5046 = vld [vmem:[%s13 + $0x34] sm:$0xf]
        %v5047 = vld [vmem:[%s13 + $0x38] sm:$0xf]
        %v5048 = vld [vmem:[%s13 + $0x3c] sm:$0xf]
        %v5049 = vld [vmem:[%s14] sm:$0x1]
        %v5051 = vlaneseq
        %v5052 = vshrl.u32 %v5051, 7
        %v5053 = vsub.s32 0, %v5052
        %v5054 = vrot.slane %v5049, %v5053
        %v5072 = vunpack.c.l.b16 %v5033
        %v5073 = vunpack.c.l.b16 %v5034
        %v5074 = vunpack.c.l.b16 %v5035
        %v5075 = vunpack.c.l.b16 %v5036
        %v5076 = vunpack.c.l.b16 %v5037
        %v5077 = vunpack.c.l.b16 %v5038
        %v5078 = vunpack.c.l.b16 %v5039
        %v5079 = vunpack.c.l.b16 %v5040
        %v5080 = vunpack.c.l.b16 %v5041
        %v5081 = vunpack.c.l.b16 %v5042
        %v5082 = vunpack.c.l.b16 %v5043
        %v5083 = vunpack.c.l.b16 %v5044
        %v5084 = vunpack.c.l.b16 %v5045
        %v5085 = vunpack.c.l.b16 %v5046
        %v5086 = vunpack.c.l.b16 %v5047
        %v5087 = vunpack.c.l.b16 %v5048
        %v5088 = vpack.c.b16 %v5073, %v5072
        %v5089 = vpack.c.b16 %v5075, %v5074
        %v5090 = vpack.c.b16 %v5077, %v5076
        %v5091 = vpack.c.b16 %v5079, %v5078
        %v5092 = vpack.c.b16 %v5081, %v5080
        %v5093 = vpack.c.b16 %v5083, %v5082
        %v5094 = vpack.c.b16 %v5085, %v5084
        %v5095 = vpack.c.b16 %v5087, %v5086
        %5104 = vmatprep.subr.bf16.mxu0 0
        %5105 = vmatpush1.bf16.msra.mxu0 %v5088
        %5106 = vmatprep.subr.bf16.mxu0 0
        %5107 = vmatpush1.bf16.msra.mxu0 %v5089
        %5108 = vmatprep.subr.bf16.mxu0 0
        %5109 = vmatpush1.bf16.msra.mxu0 %v5090
        %5110 = vmatprep.subr.bf16.mxu0 0
        %5111 = vmatpush1.bf16.msra.mxu0 %v5091
        %5112 = vmatprep.subr.bf16.mxu0 0
        %5113 = vmatpush1.bf16.msra.mxu0 %v5092
        %5114 = vmatprep.subr.bf16.mxu0 0
        %5115 = vmatpush1.bf16.msra.mxu0 %v5093
        %5116 = vmatprep.subr.bf16.mxu0 0
        %5117 = vmatpush1.bf16.msra.mxu0 %v5094
        %5118 = vmatprep.subr.bf16.mxu0 0
        %5119 = vmatpush1.bf16.msra.mxu0 %v5095
        %5120 = vmatprep.subr.bf16.mxu0 0
        %5121 = vmatpush1.bf16.msra.mxu0 0
        %5122 = vmatprep.subr.bf16.mxu0 0
        %5123 = vmatpush1.bf16.msra.mxu0 0
        %5124 = vmatprep.subr.bf16.mxu0 0
        %5125 = vmatpush1.bf16.msra.mxu0 0
        %5126 = vmatprep.subr.bf16.mxu0 0
        %5127 = vmatpush1.bf16.msra.mxu0 0
        %5128 = vmatprep.subr.bf16.mxu0 0
        %5129 = vmatpush1.bf16.msra.mxu0 0
        %5130 = vmatprep.subr.bf16.mxu0 0
        %5131 = vmatpush1.bf16.msra.mxu0 0
        %5132 = vmatprep.subr.bf16.mxu0 0
        %5133 = vmatpush1.bf16.msra.mxu0 0
        %5134 = vmatprep.subr.bf16.mxu0 0
        %5135 = vmatpush1.bf16.msra.mxu0 0
        %5136 = vmatprep.mubr.bf16.mxu0 0
        %5137 = vmatmul.mubr.bf16.gmra.mrb[0].mxu0 %v5017
        %v5138 = vpop.f32.mrb[0].mxu0
        %v5139 = vadd.f32 %v5054, %v5138
        %v5140 = vpop.f32.mrb[0].mxu0
        %v5141 = vpop.f32.mrb[0].mxu0
        %v5142 = vadd.f32 %v5054, %v5141
        %v5143 = vpop.f32.mrb[0].mxu0
        %5144 = vmatprep.mubr.bf16.mxu0 0
        %5145 = vmatmul.mubr.bf16.gmra.mrb[0].mxu0 %v5018
        %v5146 = vpop.f32.mrb[0].mxu0
        %v5147 = vadd.f32 %v5054, %v5146
        %v5148 = vpop.f32.mrb[0].mxu0
        %v5149 = vpop.f32.mrb[0].mxu0
        %v5150 = vadd.f32 %v5054, %v5149
        %v5151 = vpop.f32.mrb[0].mxu0
        %5152 = vmatprep.mubr.bf16.mxu0 0
        %5153 = vmatmul.mubr.bf16.gmra.mrb[0].mxu0 %v5019
        %v5154 = vpop.f32.mrb[0].mxu0
        %v5155 = vadd.f32 %v5054, %v5154
        %v5156 = vpop.f32.mrb[0].mxu0
        %v5157 = vpop.f32.mrb[0].mxu0
        %v5158 = vadd.f32 %v5054, %v5157
        %v5159 = vpop.f32.mrb[0].mxu0
        %5160 = vmatprep.mubr.bf16.mxu0 0
        %5161 = vmatmul.mubr.bf16.gmra.mrb[0].mxu0 %v5020
        %v5162 = vpop.f32.mrb[0].mxu0
        %v5163 = vadd.f32 %v5054, %v5162
        %v5164 = vpop.f32.mrb[0].mxu0
        %v5165 = vpop.f32.mrb[0].mxu0
        %v5166 = vadd.f32 %v5054, %v5165
        %v5167 = vpop.f32.mrb[0].mxu0
        %5168 = vmatprep.mubr.bf16.mxu0 0
        %5169 = vmatmul.mubr.bf16.gmra.mrb[0].mxu0 %v5021
        %v5170 = vpop.f32.mrb[0].mxu0
        %v5171 = vadd.f32 %v5054, %v5170
        %v5172 = vpop.f32.mrb[0].mxu0
        %v5173 = vpop.f32.mrb[0].mxu0
        %v5174 = vadd.f32 %v5054, %v5173
        %v5175 = vpop.f32.mrb[0].mxu0
        %5176 = vmatprep.mubr.bf16.mxu0 0
        %5177 = vmatmul.mubr.bf16.gmra.mrb[0].mxu0 %v5022
        %v5178 = vpop.f32.mrb[0].mxu0
        %v5179 = vadd.f32 %v5054, %v5178
        %v5180 = vpop.f32.mrb[0].mxu0
        %v5181 = vpop.f32.mrb[0].mxu0
        %v5182 = vadd.f32 %v5054, %v5181
        %v5183 = vpop.f32.mrb[0].mxu0
        %5184 = vmatprep.mubr.bf16.mxu0 0
        %5185 = vmatmul.mubr.bf16.gmra.mrb[0].mxu0 %v5023
        %v5186 = vpop.f32.mrb[0].mxu0
        %v5187 = vadd.f32 %v5054, %v5186
        %v5188 = vpop.f32.mrb[0].mxu0
        %v5189 = vpop.f32.mrb[0].mxu0
        %v5190 = vadd.f32 %v5054, %v5189
        %v5191 = vpop.f32.mrb[0].mxu0
        %5192 = vmatprep.mubr.bf16.mxu0 0
        %5193 = vmatmul.mubr.bf16.gmra.mrb[0].mxu0 %v5024
        %v5194 = vpop.f32.mrb[0].mxu0
        %v5195 = vadd.f32 %v5054, %v5194
        %v5196 = vpop.f32.mrb[0].mxu0
        %v5197 = vpop.f32.mrb[0].mxu0
        %v5198 = vadd.f32 %v5054, %v5197
        %v5199 = vpop.f32.mrb[0].mxu0
        %5200 = vmatprep.mubr.bf16.mxu0 0
        %5201 = vmatmul.mubr.bf16.gmra.mrb[0].mxu0 %v5025
        %v5202 = vpop.f32.mrb[0].mxu0
        %v5203 = vadd.f32 %v5054, %v5202
        %v5204 = vpop.f32.mrb[0].mxu0
        %v5205 = vpop.f32.mrb[0].mxu0
        %v5206 = vadd.f32 %v5054, %v5205
        %v5207 = vpop.f32.mrb[0].mxu0
        %5208 = vmatprep.mubr.bf16.mxu0 0
        %5209 = vmatmul.mubr.bf16.gmra.mrb[0].mxu0 %v5026
        %v5210 = vpop.f32.mrb[0].mxu0
        %v5211 = vadd.f32 %v5054, %v5210
        %v5212 = vpop.f32.mrb[0].mxu0
        %v5213 = vpop.f32.mrb[0].mxu0
        %v5214 = vadd.f32 %v5054, %v5213
        %v5215 = vpop.f32.mrb[0].mxu0
        %5216 = vmatprep.mubr.bf16.mxu0 0
        %5217 = vmatmul.mubr.bf16.gmra.mrb[0].mxu0 %v5027
        %v5218 = vpop.f32.mrb[0].mxu0
        %v5219 = vadd.f32 %v5054, %v5218
        %v5220 = vpop.f32.mrb[0].mxu0
        %v5221 = vpop.f32.mrb[0].mxu0
        %v5222 = vadd.f32 %v5054, %v5221
        %v5223 = vpop.f32.mrb[0].mxu0
        %5224 = vmatprep.mubr.bf16.mxu0 0
        %5225 = vmatmul.mubr.bf16.gmra.mrb[0].mxu0 %v5028
        %v5226 = vpop.f32.mrb[0].mxu0
        %v5227 = vadd.f32 %v5054, %v5226
        %v5228 = vpop.f32.mrb[0].mxu0
        %v5229 = vpop.f32.mrb[0].mxu0
        %v5230 = vadd.f32 %v5054, %v5229
        %v5231 = vpop.f32.mrb[0].mxu0
        %5232 = vmatprep.mubr.bf16.mxu0 0
        %5233 = vmatmul.mubr.bf16.gmra.mrb[0].mxu0 %v5029
        %v5234 = vpop.f32.mrb[0].mxu0
        %v5235 = vadd.f32 %v5054, %v5234
        %v5236 = vpop.f32.mrb[0].mxu0
        %v5237 = vpop.f32.mrb[0].mxu0
        %v5238 = vadd.f32 %v5054, %v5237
        %v5239 = vpop.f32.mrb[0].mxu0
        %5240 = vmatprep.mubr.bf16.mxu0 0
        %5241 = vmatmul.mubr.bf16.gmra.mrb[0].mxu0 %v5030
        %v5242 = vpop.f32.mrb[0].mxu0
        %v5243 = vadd.f32 %v5054, %v5242
        %v5244 = vpop.f32.mrb[0].mxu0
        %v5245 = vpop.f32.mrb[0].mxu0
        %v5246 = vadd.f32 %v5054, %v5245
        %v5247 = vpop.f32.mrb[0].mxu0
        %5248 = vmatprep.mubr.bf16.mxu0 0
        %5249 = vmatmul.mubr.bf16.gmra.mrb[0].mxu0 %v5031
        %v5250 = vpop.f32.mrb[0].mxu0
        %v5251 = vadd.f32 %v5054, %v5250
        %v5252 = vpop.f32.mrb[0].mxu0
        %v5253 = vpop.f32.mrb[0].mxu0
        %v5254 = vadd.f32 %v5054, %v5253
        %v5255 = vpop.f32.mrb[0].mxu0
        %5256 = vmatprep.mubr.bf16.mxu0 0
        %5257 = vmatmul.mubr.bf16.gmra.mrb[0].mxu0 %v5032
        %v5258 = vpop.f32.mrb[0].mxu0
        %v5259 = vadd.f32 %v5054, %v5258
        %v5260 = vpop.f32.mrb[0].mxu0
        %v5261 = vpop.f32.mrb[0].mxu0
        %v5262 = vadd.f32 %v5054, %v5261
        %v5263 = vpop.f32.mrb[0].mxu0
        %5264 = vdwg.mxu0
        %v5265 = vadd.f32 %v4891, %v5139
        %v5266 = vadd.f32 %v4894, %v5142
        %v5267 = vadd.f32 %v4899, %v5147
        %v5268 = vadd.f32 %v4902, %v5150
        %v5269 = vadd.f32 %v4907, %v5155
        %v5270 = vadd.f32 %v4910, %v5158
        %v5271 = vadd.f32 %v4915, %v5163
        %v5272 = vadd.f32 %v4918, %v5166
        %v5273 = vadd.f32 %v4923, %v5171
        %v5274 = vadd.f32 %v4926, %v5174
        %v5275 = vadd.f32 %v4931, %v5179
        %v5276 = vadd.f32 %v4934, %v5182
        %v5277 = vadd.f32 %v4939, %v5187
        %v5278 = vadd.f32 %v4942, %v5190
        %v5279 = vadd.f32 %v4947, %v5195
        %v5280 = vadd.f32 %v4950, %v5198
        %v5281 = vadd.f32 %v4955, %v5203
        %v5282 = vadd.f32 %v4958, %v5206
        %v5283 = vadd.f32 %v4963, %v5211
        %v5284 = vadd.f32 %v4966, %v5214
        %v5285 = vadd.f32 %v4971, %v5219
        %v5286 = vadd.f32 %v4974, %v5222
        %v5287 = vadd.f32 %v4979, %v5227
        %v5288 = vadd.f32 %v4982, %v5230
        %v5289 = vadd.f32 %v4987, %v5235
        %v5290 = vadd.f32 %v4990, %v5238
        %v5291 = vadd.f32 %v4995, %v5243
        %v5292 = vadd.f32 %v4998, %v5246
        %v5293 = vadd.f32 %v5003, %v5251
        %v5294 = vadd.f32 %v5006, %v5254
        %v5295 = vadd.f32 %v5011, %v5259
        %v5296 = vadd.f32 %v5014, %v5262
        %5297 = vst [vmem:[%s487] sm:$0xff] %v5265
        %5298 = vst [vmem:[%s487 + $0x8] sm:$0xff] %v5266
        %5299 = vst [vmem:[%s487 + $0x10] sm:$0xff] %v5267
        %5300 = vst [vmem:[%s487 + $0x18] sm:$0xff] %v5268
        %5301 = vst [vmem:[%s487 + $0x20] sm:$0xff] %v5269
        %5302 = vst [vmem:[%s487 + $0x28] sm:$0xff] %v5270
        %5303 = vst [vmem:[%s487 + $0x30] sm:$0xff] %v5271
        %5304 = vst [vmem:[%s487 + $0x38] sm:$0xff] %v5272
        %5305 = vst [vmem:[%s487 + $0x40] sm:$0xff] %v5273
        %5306 = vst [vmem:[%s487 + $0x48] sm:$0xff] %v5274
        %5307 = vst [vmem:[%s487 + $0x50] sm:$0xff] %v5275
        %5308 = vst [vmem:[%s487 + $0x58] sm:$0xff] %v5276
        %5309 = vst [vmem:[%s487 + $0x60] sm:$0xff] %v5277
        %5310 = vst [vmem:[%s487 + $0x68] sm:$0xff] %v5278
        %5311 = vst [vmem:[%s487 + $0x70] sm:$0xff] %v5279
        %5312 = vst [vmem:[%s487 + $0x78] sm:$0xff] %v5280
        %5313 = vst [vmem:[%s487 + $0x80] sm:$0xff] %v5281
        %5314 = vst [vmem:[%s487 + $0x88] sm:$0xff] %v5282
        %5315 = vst [vmem:[%s487 + $0x90] sm:$0xff] %v5283
        %5316 = vst [vmem:[%s487 + $0x98] sm:$0xff] %v5284
        %5317 = vst [vmem:[%s487 + $0xa0] sm:$0xff] %v5285
        %5318 = vst [vmem:[%s487 + $0xa8] sm:$0xff] %v5286
        %5319 = vst [vmem:[%s487 + $0xb0] sm:$0xff] %v5287
        %5320 = vst [vmem:[%s487 + $0xb8] sm:$0xff] %v5288
        %5321 = vst [vmem:[%s487 + $0xc0] sm:$0xff] %v5289
        %5322 = vst [vmem:[%s487 + $0xc8] sm:$0xff] %v5290
        %5323 = vst [vmem:[%s487 + $0xd0] sm:$0xff] %v5291
        %5324 = vst [vmem:[%s487 + $0xd8] sm:$0xff] %v5292
        %5325 = vst [vmem:[%s487 + $0xe0] sm:$0xff] %v5293
        %5326 = vst [vmem:[%s487 + $0xe8] sm:$0xff] %v5294
        %5327 = vst [vmem:[%s487 + $0xf0] sm:$0xff] %v5295
        %5328 = vst [vmem:[%s487 + $0xf8] sm:$0xff] %v5296
        %s5329 = sand.u32 %s357, 1
        %s5330 = scalar_lea.sflag [#allocation3], %s5329
        %s5331 = sand.u32 %s357, 1
        %s5332 = smul.addr %s5331, 256
        %s5333 = scalar_lea.vmem [#allocation2], %s5332
        // Predicated region
        $region81: #{resblock_forward.1} parent=79 // pred_check
          %p5334 = pneg %p367
        $region82: #{resblock_forward.1} parent=79 // pred_check_branch
          %5336 = sbr.rel (%p5334) target = $region84
        $region83: #{resblock_forward.1} parent=79 // pred_region
          %s5338 = ssub.s32 4096, 4096
          %5339 = vsyncadd %s5330, %s5338
          %s5340 = smul.addr %s29, 32
          %s5341 = smul.addr %s5340, 128
          %s5342 = scalar_lea.hbm %s15, %s5341
          %s5343 = sshll.u32 %s5333, 4
          %s5344 = int_to_ptr.vmem [resolvable:$true] %s5343
          %5349 = dma.vmem_to_hbm [thread:$0]  %s5344, 4096, %s5342, %s5330, 128, 128, 8
        $region84: #{resblock_forward.1} parent=79 // pred_fallthru
          _
      $region80: #{resblock_forward.1} parent=5 // pred_fallthru
        _
      %p5350 = scmp.le.s32.totalorder 2, %s24
      // Predicated region
      $region85: #{resblock_forward.1} parent=5 // pred_check
        %p5351 = pneg %p5350
      $region86: #{resblock_forward.1} parent=5 // pred_check_branch
        %5353 = sbr.rel (%p5351) target = $region88
      $region87: #{resblock_forward.1} parent=5 // pred_region
        %s5354 = ssub.s32 %s24, 2
        // Predicated region
        $region89: #{resblock_forward.1} parent=87 // pred_check
          %p5355 = pneg %p373
        $region90: #{resblock_forward.1} parent=87 // pred_check_branch
          %5357 = sbr.rel (%p5355) target = $region92
        $region91: #{resblock_forward.1} parent=87 // pred_region
          %s5358 = sand.u32 %s358, 1
          %s5359 = scalar_lea.sflag [#allocation3], %s5358
          %s5360 = sand.u32 %s358, 1
          %s5361 = smul.addr %s5360, 256
          %s5362 = scalar_lea.vmem [#allocation2], %s5361
          %5363 = dma.done %s5359, 4096
        $region92: #{resblock_forward.1} parent=87 // pred_fallthru
          _
      $region88: #{resblock_forward.1} parent=5 // pred_fallthru
        _
    $region6: #{resblock_forward.1} parent=1 // loop_footer
      %s28 = sadd.s32 1, %s24
    $region7: #{resblock_forward.1} parent=1 // loop_footer_branch
      %23 = sbr.rel target = $region3
    $region8: #{resblock_forward.1} parent=1 // loop_exit
      _
    %5364 = vsyncpa [#allocation3], 1
    %s5365 = scalar_lea.sflag [#allocation3], 1
    %5366 = vsyncpa %s5365, 1

</llo_original>
